<compile_context>
chip_gen: v7x
topology: tpu7x:2x2x1
jax: 0.10.0
libtpu: 0.0.40
codegen_flags: <defaults>
</compile_context>

<pallas_src>
import functools

import jax
import jax.numpy as jnp
from jax.experimental import pallas as pl
from jax.experimental.pallas import tpu as pltpu

NEG_SLOPE = 0.01                 # F.leaky_relu default
SQRT_HALF = 0.7071067811865476   # torch.sqrt(torch.tensor([0.5]))
BN_EPS = 1e-5                    # nn.BatchNorm1d default
LANE = 128                       # TPU lane width


def _leaky_relu(v):
    return jnp.where(v > 0, v, NEG_SLOPE * v)


# ---------------------------------------------------------------------------
# Fused kernel: whole FeatureTransformer forward for one row tile
# ---------------------------------------------------------------------------
def fused_ft_kernel(x_ref, wa_ref, wb_ref, ba_ref, bb_ref, sa_ref, sb_ref,
                    sha_ref, shb_ref, bns_ref, bnsh_ref, o_ref, *, n_stages):
    """Stage 0: x = bn(leaky_relu(glu_0(x)))        (dropout = identity)
       Stage i: x = (x + glu_i(x)) * sqrt(0.5), i = 1..n_stages-1
       glu_i:   y = leaky_relu(x @ W_i + b_i); y = y*s_i + sh_i (GBN eval);
                out = y_value * sigmoid(y_gate)   (halves pre-split)."""
    x = x_ref[...].astype(jnp.float32)

    def glu(v, i):
        ya = jnp.dot(v, wa_ref[i], preferred_element_type=jnp.float32) + ba_ref[i]
        yb = jnp.dot(v, wb_ref[i], preferred_element_type=jnp.float32) + bb_ref[i]
        ya = _leaky_relu(ya) * sa_ref[i] + sha_ref[i]
        yb = _leaky_relu(yb) * sb_ref[i] + shb_ref[i]
        return ya * jax.nn.sigmoid(yb)

    # first shared GLU, then the FeatureTransformer-level leaky_relu + BN
    g = glu(x, 0)
    x = _leaky_relu(g) * bns_ref[...] + bnsh_ref[...]

    # residual GLU stages (remaining shared + independent)
    for i in range(1, n_stages):
        x = (x + glu(x, i)) * SQRT_HALF

    o_ref[...] = x.astype(o_ref.dtype)


# ---------------------------------------------------------------------------
# Parameter packing: split gate halves, pad features to 128, stack stages
# ---------------------------------------------------------------------------
def _round_up(n, m):
    return ((n + m - 1) // m) * m


def _pad2d(a, rows, cols):
    return jnp.pad(a, ((0, rows - a.shape[0]), (0, cols - a.shape[1])))


def pack_ft_params(glu_params, bn_s, bn_sh, dpad=LANE):
    """glu_params: list of (W [d_in, 2*od], b, scale, shift each [1, 2*od])."""
    od = bn_s.shape[-1]
    wa, wb, ba, bb, sa, sb, sha, shb = ([] for _ in range(8))
    for (w, b, s, sh) in glu_params:
        wa.append(_pad2d(w[:, :od], dpad, dpad))     # value half
        wb.append(_pad2d(w[:, od:], dpad, dpad))     # gate half
        for lst, v in ((ba, b[:, :od]), (bb, b[:, od:]),
                       (sa, s[:, :od]), (sb, s[:, od:]),
                       (sha, sh[:, :od]), (shb, sh[:, od:])):
            lst.append(_pad2d(v, 1, dpad))
    stack = lambda lst: jnp.stack(lst, axis=0)
    return (stack(wa), stack(wb), stack(ba), stack(bb), stack(sa), stack(sb),
            stack(sha), stack(shb), _pad2d(bn_s, 1, dpad), _pad2d(bn_sh, 1, dpad))


# ---------------------------------------------------------------------------
# Forward wrapper (single pallas_call)
# ---------------------------------------------------------------------------
def feature_transformer_forward(x, packed, out_dim, *, tb=None):
    B, d_in = x.shape
    (wa, wb, ba, bb, sa, sb, sha, shb, bns, bnsh) = packed
    n_stages = wa.shape[0]
    dpad = wa.shape[-1]
    assert d_in <= dpad and out_dim <= dpad

    if tb is None:
        # Fill the MXU M-dim; >=2 parallel grid steps whenever B >= 256 (v7x).
        tb = min(128, _round_up(B, 8))
    b_pad = tb * pl.cdiv(B, tb)

    x_p = jnp.pad(x, ((0, b_pad - B), (0, dpad - d_in)))

    def full(a):
        return pl.BlockSpec(a.shape, lambda i, nd=a.ndim: (0,) * nd)

    row = pl.BlockSpec((tb, dpad), lambda i: (i, 0))

    out = pl.pallas_call(
        functools.partial(fused_ft_kernel, n_stages=n_stages),
        grid=(b_pad // tb,),
        in_specs=[row, full(wa), full(wb), full(ba), full(bb), full(sa),
                  full(sb), full(sha), full(shb), full(bns), full(bnsh)],
        out_specs=row,
        out_shape=jax.ShapeDtypeStruct((b_pad, dpad), x.dtype),
        compiler_params=pltpu.CompilerParams(
            dimension_semantics=("parallel",)),
    )(x_p, wa, wb, ba, bb, sa, sb, sha, shb, bns, bnsh)
    return out[:B, :out_dim]


# ---------------------------------------------------------------------------
# Deterministic parameter construction (eval-mode GBN folded to affine)
# ---------------------------------------------------------------------------
def _fold_bn(gamma, beta, mean, var):
    scale = gamma / jnp.sqrt(var + BN_EPS)
    shift = beta - mean * scale
    return scale, shift


def make_glu_params(key, d_in, d_out):
    k_w, k_b, k_g, k_be, k_m, k_v = jax.random.split(key, 6)
    two = 2 * d_out
    w = jax.random.normal(k_w, (d_in, two), jnp.float32) * (1.0 / jnp.sqrt(d_in))
    b = jax.random.normal(k_b, (1, two), jnp.float32) * 0.05
    gamma = 1.0 + 0.1 * jax.random.normal(k_g, (1, two), jnp.float32)
    beta = 0.05 * jax.random.normal(k_be, (1, two), jnp.float32)
    mean = 0.05 * jax.random.normal(k_m, (1, two), jnp.float32)
    var = jax.random.uniform(k_v, (1, two), jnp.float32, 0.5, 1.5)
    scale, shift = _fold_bn(gamma, beta, mean, var)
    return (w, b, scale, shift)


def make_bn_params(key, d):
    k_g, k_be, k_m, k_v = jax.random.split(key, 4)
    gamma = 1.0 + 0.1 * jax.random.normal(k_g, (1, d), jnp.float32)
    beta = 0.05 * jax.random.normal(k_be, (1, d), jnp.float32)
    mean = 0.05 * jax.random.normal(k_m, (1, d), jnp.float32)
    var = jax.random.uniform(k_v, (1, d), jnp.float32, 0.5, 1.5)
    return _fold_bn(gamma, beta, mean, var)


# ---------------------------------------------------------------------------
# Pure-JAX reference (unpadded) for a correctness check
# ---------------------------------------------------------------------------
def reference_forward(x, glu_params, bn_s, bn_sh, out_dim):
    def glu(v, p):
        w, b, s, sh = p
        y = jnp.dot(v, w, precision=jax.lax.Precision.HIGHEST) + b
        y = _leaky_relu(y)
        y = y * s + sh
        return y[:, :out_dim] * jax.nn.sigmoid(y[:, out_dim:])

    g = glu(x, glu_params[0])
    x = _leaky_relu(g) * bn_s + bn_sh
    for p in glu_params[1:]:
        x = (x + glu(x, p)) * SQRT_HALF
    return x


if __name__ == "__main__":
    B, INP_DIM, OUT_DIM = 256, 16, 32
    N_SHARED, N_IND = 2, 2

    root = jax.random.PRNGKey(0)
    kx, kbn, *kglu = jax.random.split(root, 2 + N_SHARED + N_IND)

    x = jax.random.normal(kx, (B, INP_DIM), jnp.float32)

    glu_params = [make_glu_params(kglu[0], INP_DIM, OUT_DIM)]
    for i in range(1, N_SHARED):
        glu_params.append(make_glu_params(kglu[i], OUT_DIM, OUT_DIM))
    for i in range(N_IND):
        glu_params.append(make_glu_params(kglu[N_SHARED + i], OUT_DIM, OUT_DIM))
    bn_s, bn_sh = make_bn_params(kbn, OUT_DIM)

    packed = pack_ft_params(glu_params, bn_s, bn_sh)

    out = feature_transformer_forward(x, packed, OUT_DIM)
    out = jax.block_until_ready(out)
    assert out.shape == (B, OUT_DIM) and out.dtype == jnp.float32

    ref = reference_forward(x, glu_params, bn_s, bn_sh, OUT_DIM)
    err = float(jnp.max(jnp.abs(out - ref)))
    assert err < 5e-3, f"mismatch vs reference: max abs err = {err}"
    print("KERNEL_OK")
</pallas_src>

<mosaic_0001>
module attributes {stable_mosaic.version = 11 : i64} {
  func.func @fused_ft_kernel(%arg0: i32, %arg1: memref<128x128xf32, #tpu.memory_space<vmem>>, %arg2: memref<4x128x128xf32, #tpu.memory_space<vmem>>, %arg3: memref<4x128x128xf32, #tpu.memory_space<vmem>>, %arg4: memref<4x1x128xf32, #tpu.memory_space<vmem>>, %arg5: memref<4x1x128xf32, #tpu.memory_space<vmem>>, %arg6: memref<4x1x128xf32, #tpu.memory_space<vmem>>, %arg7: memref<4x1x128xf32, #tpu.memory_space<vmem>>, %arg8: memref<4x1x128xf32, #tpu.memory_space<vmem>>, %arg9: memref<4x1x128xf32, #tpu.memory_space<vmem>>, %arg10: memref<1x128xf32, #tpu.memory_space<vmem>>, %arg11: memref<1x128xf32, #tpu.memory_space<vmem>>, %arg12: memref<128x128xf32, #tpu.memory_space<vmem>>) attributes {dimension_semantics = [#tpu.dimension_semantics<parallel>], iteration_bounds = array<i64: 2>, scalar_prefetch = 0 : i64, scratch_operands = 0 : i64, tpu.core_type = #tpu.core_type<tc>, window_params = [{transform_indices = @transform_0, window_bounds = array<i64: 128, 128>}, {pipeline_mode = #tpu.pipeline_mode<synchronous>, transform_indices = @transform_1, window_bounds = array<i64: 4, 128, 128>}, {pipeline_mode = #tpu.pipeline_mode<synchronous>, transform_indices = @transform_2, window_bounds = array<i64: 4, 128, 128>}, {pipeline_mode = #tpu.pipeline_mode<synchronous>, transform_indices = @transform_3, window_bounds = array<i64: 4, 1, 128>}, {pipeline_mode = #tpu.pipeline_mode<synchronous>, transform_indices = @transform_4, window_bounds = array<i64: 4, 1, 128>}, {pipeline_mode = #tpu.pipeline_mode<synchronous>, transform_indices = @transform_5, window_bounds = array<i64: 4, 1, 128>}, {pipeline_mode = #tpu.pipeline_mode<synchronous>, transform_indices = @transform_6, window_bounds = array<i64: 4, 1, 128>}, {pipeline_mode = #tpu.pipeline_mode<synchronous>, transform_indices = @transform_7, window_bounds = array<i64: 4, 1, 128>}, {pipeline_mode = #tpu.pipeline_mode<synchronous>, transform_indices = @transform_8, window_bounds = array<i64: 4, 1, 128>}, {pipeline_mode = #tpu.pipeline_mode<synchronous>, transform_indices = @transform_9, window_bounds = array<i64: 1, 128>}, {pipeline_mode = #tpu.pipeline_mode<synchronous>, transform_indices = @transform_10, window_bounds = array<i64: 1, 128>}, {transform_indices = @transform_11, window_bounds = array<i64: 128, 128>}]} {
    %c0 = arith.constant 0 : index
    %c0_0 = arith.constant 0 : index
    %0 = vector.load %arg1[%c0, %c0_0] : memref<128x128xf32, #tpu.memory_space<vmem>>, vector<128x128xf32>
    %c0_1 = arith.constant 0 : index
    %c0_2 = arith.constant 0 : index
    %c0_3 = arith.constant 0 : index
    %1 = vector.load %arg2[%c0_1, %c0_2, %c0_3] : memref<4x128x128xf32, #tpu.memory_space<vmem>>, vector<1x128x128xf32>
    %2 = vector.shape_cast %1 : vector<1x128x128xf32> to vector<128x128xf32>
    %cst = arith.constant dense<0.000000e+00> : vector<128x128xf32>
    %3 = tpu.matmul %0, %2, %cst {dimension_numbers = #tpu.dot_dimension_numbers<[1], [0], [0], [1], [0, 0, 1, 1], [], []>} : vector<128x128xf32>, vector<128x128xf32>, vector<128x128xf32> -> vector<128x128xf32>
    %c0_4 = arith.constant 0 : index
    %c0_5 = arith.constant 0 : index
    %c0_6 = arith.constant 0 : index
    %4 = vector.load %arg4[%c0_4, %c0_5, %c0_6] : memref<4x1x128xf32, #tpu.memory_space<vmem>>, vector<1x1x128xf32>
    %5 = vector.shape_cast %4 : vector<1x1x128xf32> to vector<1x128xf32>
    %6 = vector.broadcast %5 : vector<1x128xf32> to vector<128x128xf32>
    %7 = arith.addf %3, %6 : vector<128x128xf32>
    %c0_7 = arith.constant 0 : index
    %c0_8 = arith.constant 0 : index
    %c0_9 = arith.constant 0 : index
    %8 = vector.load %arg3[%c0_7, %c0_8, %c0_9] : memref<4x128x128xf32, #tpu.memory_space<vmem>>, vector<1x128x128xf32>
    %9 = vector.shape_cast %8 : vector<1x128x128xf32> to vector<128x128xf32>
    %cst_10 = arith.constant dense<0.000000e+00> : vector<128x128xf32>
    %10 = tpu.matmul %0, %9, %cst_10 {dimension_numbers = #tpu.dot_dimension_numbers<[1], [0], [0], [1], [0, 0, 1, 1], [], []>} : vector<128x128xf32>, vector<128x128xf32>, vector<128x128xf32> -> vector<128x128xf32>
    %c0_11 = arith.constant 0 : index
    %c0_12 = arith.constant 0 : index
    %c0_13 = arith.constant 0 : index
    %11 = vector.load %arg5[%c0_11, %c0_12, %c0_13] : memref<4x1x128xf32, #tpu.memory_space<vmem>>, vector<1x1x128xf32>
    %12 = vector.shape_cast %11 : vector<1x1x128xf32> to vector<1x128xf32>
    %13 = vector.broadcast %12 : vector<1x128xf32> to vector<128x128xf32>
    %14 = arith.addf %10, %13 : vector<128x128xf32>
    %cst_14 = arith.constant 0.000000e+00 : f32
    %15 = vector.broadcast %cst_14 : f32 to vector<128x128xf32>
    %16 = arith.cmpf ogt, %7, %15 : vector<128x128xf32>
    %cst_15 = arith.constant 0.00999999977 : f32
    %17 = vector.broadcast %cst_15 : f32 to vector<128x128xf32>
    %18 = arith.mulf %17, %7 : vector<128x128xf32>
    %19 = arith.select %16, %7, %18 : vector<128x128xi1>, vector<128x128xf32>
    %c0_16 = arith.constant 0 : index
    %c0_17 = arith.constant 0 : index
    %c0_18 = arith.constant 0 : index
    %20 = vector.load %arg6[%c0_16, %c0_17, %c0_18] : memref<4x1x128xf32, #tpu.memory_space<vmem>>, vector<1x1x128xf32>
    %21 = vector.shape_cast %20 : vector<1x1x128xf32> to vector<1x128xf32>
    %22 = vector.broadcast %21 : vector<1x128xf32> to vector<128x128xf32>
    %23 = arith.mulf %19, %22 : vector<128x128xf32>
    %c0_19 = arith.constant 0 : index
    %c0_20 = arith.constant 0 : index
    %c0_21 = arith.constant 0 : index
    %24 = vector.load %arg8[%c0_19, %c0_20, %c0_21] : memref<4x1x128xf32, #tpu.memory_space<vmem>>, vector<1x1x128xf32>
    %25 = vector.shape_cast %24 : vector<1x1x128xf32> to vector<1x128xf32>
    %26 = vector.broadcast %25 : vector<1x128xf32> to vector<128x128xf32>
    %27 = arith.addf %23, %26 : vector<128x128xf32>
    %cst_22 = arith.constant 0.000000e+00 : f32
    %28 = vector.broadcast %cst_22 : f32 to vector<128x128xf32>
    %29 = arith.cmpf ogt, %14, %28 : vector<128x128xf32>
    %cst_23 = arith.constant 0.00999999977 : f32
    %30 = vector.broadcast %cst_23 : f32 to vector<128x128xf32>
    %31 = arith.mulf %30, %14 : vector<128x128xf32>
    %32 = arith.select %29, %14, %31 : vector<128x128xi1>, vector<128x128xf32>
    %c0_24 = arith.constant 0 : index
    %c0_25 = arith.constant 0 : index
    %c0_26 = arith.constant 0 : index
    %33 = vector.load %arg7[%c0_24, %c0_25, %c0_26] : memref<4x1x128xf32, #tpu.memory_space<vmem>>, vector<1x1x128xf32>
    %34 = vector.shape_cast %33 : vector<1x1x128xf32> to vector<1x128xf32>
    %35 = vector.broadcast %34 : vector<1x128xf32> to vector<128x128xf32>
    %36 = arith.mulf %32, %35 : vector<128x128xf32>
    %c0_27 = arith.constant 0 : index
    %c0_28 = arith.constant 0 : index
    %c0_29 = arith.constant 0 : index
    %37 = vector.load %arg9[%c0_27, %c0_28, %c0_29] : memref<4x1x128xf32, #tpu.memory_space<vmem>>, vector<1x1x128xf32>
    %38 = vector.shape_cast %37 : vector<1x1x128xf32> to vector<1x128xf32>
    %39 = vector.broadcast %38 : vector<1x128xf32> to vector<128x128xf32>
    %40 = arith.addf %36, %39 : vector<128x128xf32>
    %41 = arith.negf %40 : vector<128x128xf32>
    %42 = math.exp %41 : vector<128x128xf32>
    %cst_30 = arith.constant 1.000000e+00 : f32
    %43 = vector.broadcast %cst_30 : f32 to vector<128x128xf32>
    %44 = arith.addf %43, %42 : vector<128x128xf32>
    %45 = arith.divf %43, %44 : vector<128x128xf32>
    %46 = arith.mulf %27, %45 : vector<128x128xf32>
    %cst_31 = arith.constant 0.000000e+00 : f32
    %47 = vector.broadcast %cst_31 : f32 to vector<128x128xf32>
    %48 = arith.cmpf ogt, %46, %47 : vector<128x128xf32>
    %cst_32 = arith.constant 0.00999999977 : f32
    %49 = vector.broadcast %cst_32 : f32 to vector<128x128xf32>
    %50 = arith.mulf %49, %46 : vector<128x128xf32>
    %51 = arith.select %48, %46, %50 : vector<128x128xi1>, vector<128x128xf32>
    %c0_33 = arith.constant 0 : index
    %c0_34 = arith.constant 0 : index
    %52 = vector.load %arg10[%c0_33, %c0_34] : memref<1x128xf32, #tpu.memory_space<vmem>>, vector<1x128xf32>
    %53 = vector.broadcast %52 : vector<1x128xf32> to vector<128x128xf32>
    %54 = arith.mulf %51, %53 : vector<128x128xf32>
    %c0_35 = arith.constant 0 : index
    %c0_36 = arith.constant 0 : index
    %55 = vector.load %arg11[%c0_35, %c0_36] : memref<1x128xf32, #tpu.memory_space<vmem>>, vector<1x128xf32>
    %56 = vector.broadcast %55 : vector<1x128xf32> to vector<128x128xf32>
    %57 = arith.addf %54, %56 : vector<128x128xf32>
    %c1 = arith.constant 1 : index
    %c0_37 = arith.constant 0 : index
    %c0_38 = arith.constant 0 : index
    %58 = vector.load %arg2[%c1, %c0_37, %c0_38] : memref<4x128x128xf32, #tpu.memory_space<vmem>>, vector<1x128x128xf32>
    %59 = vector.shape_cast %58 : vector<1x128x128xf32> to vector<128x128xf32>
    %cst_39 = arith.constant dense<0.000000e+00> : vector<128x128xf32>
    %60 = tpu.matmul %57, %59, %cst_39 {dimension_numbers = #tpu.dot_dimension_numbers<[1], [0], [0], [1], [0, 0, 1, 1], [], []>} : vector<128x128xf32>, vector<128x128xf32>, vector<128x128xf32> -> vector<128x128xf32>
    %c1_40 = arith.constant 1 : index
    %c0_41 = arith.constant 0 : index
    %c0_42 = arith.constant 0 : index
    %61 = vector.load %arg4[%c1_40, %c0_41, %c0_42] : memref<4x1x128xf32, #tpu.memory_space<vmem>>, vector<1x1x128xf32>
    %62 = vector.shape_cast %61 : vector<1x1x128xf32> to vector<1x128xf32>
    %63 = vector.broadcast %62 : vector<1x128xf32> to vector<128x128xf32>
    %64 = arith.addf %60, %63 : vector<128x128xf32>
    %c1_43 = arith.constant 1 : index
    %c0_44 = arith.constant 0 : index
    %c0_45 = arith.constant 0 : index
    %65 = vector.load %arg3[%c1_43, %c0_44, %c0_45] : memref<4x128x128xf32, #tpu.memory_space<vmem>>, vector<1x128x128xf32>
    %66 = vector.shape_cast %65 : vector<1x128x128xf32> to vector<128x128xf32>
    %cst_46 = arith.constant dense<0.000000e+00> : vector<128x128xf32>
    %67 = tpu.matmul %57, %66, %cst_46 {dimension_numbers = #tpu.dot_dimension_numbers<[1], [0], [0], [1], [0, 0, 1, 1], [], []>} : vector<128x128xf32>, vector<128x128xf32>, vector<128x128xf32> -> vector<128x128xf32>
    %c1_47 = arith.constant 1 : index
    %c0_48 = arith.constant 0 : index
    %c0_49 = arith.constant 0 : index
    %68 = vector.load %arg5[%c1_47, %c0_48, %c0_49] : memref<4x1x128xf32, #tpu.memory_space<vmem>>, vector<1x1x128xf32>
    %69 = vector.shape_cast %68 : vector<1x1x128xf32> to vector<1x128xf32>
    %70 = vector.broadcast %69 : vector<1x128xf32> to vector<128x128xf32>
    %71 = arith.addf %67, %70 : vector<128x128xf32>
    %cst_50 = arith.constant 0.000000e+00 : f32
    %72 = vector.broadcast %cst_50 : f32 to vector<128x128xf32>
    %73 = arith.cmpf ogt, %64, %72 : vector<128x128xf32>
    %cst_51 = arith.constant 0.00999999977 : f32
    %74 = vector.broadcast %cst_51 : f32 to vector<128x128xf32>
    %75 = arith.mulf %74, %64 : vector<128x128xf32>
    %76 = arith.select %73, %64, %75 : vector<128x128xi1>, vector<128x128xf32>
    %c1_52 = arith.constant 1 : index
    %c0_53 = arith.constant 0 : index
    %c0_54 = arith.constant 0 : index
    %77 = vector.load %arg6[%c1_52, %c0_53, %c0_54] : memref<4x1x128xf32, #tpu.memory_space<vmem>>, vector<1x1x128xf32>
    %78 = vector.shape_cast %77 : vector<1x1x128xf32> to vector<1x128xf32>
    %79 = vector.broadcast %78 : vector<1x128xf32> to vector<128x128xf32>
    %80 = arith.mulf %76, %79 : vector<128x128xf32>
    %c1_55 = arith.constant 1 : index
    %c0_56 = arith.constant 0 : index
    %c0_57 = arith.constant 0 : index
    %81 = vector.load %arg8[%c1_55, %c0_56, %c0_57] : memref<4x1x128xf32, #tpu.memory_space<vmem>>, vector<1x1x128xf32>
    %82 = vector.shape_cast %81 : vector<1x1x128xf32> to vector<1x128xf32>
    %83 = vector.broadcast %82 : vector<1x128xf32> to vector<128x128xf32>
    %84 = arith.addf %80, %83 : vector<128x128xf32>
    %cst_58 = arith.constant 0.000000e+00 : f32
    %85 = vector.broadcast %cst_58 : f32 to vector<128x128xf32>
    %86 = arith.cmpf ogt, %71, %85 : vector<128x128xf32>
    %cst_59 = arith.constant 0.00999999977 : f32
    %87 = vector.broadcast %cst_59 : f32 to vector<128x128xf32>
    %88 = arith.mulf %87, %71 : vector<128x128xf32>
    %89 = arith.select %86, %71, %88 : vector<128x128xi1>, vector<128x128xf32>
    %c1_60 = arith.constant 1 : index
    %c0_61 = arith.constant 0 : index
    %c0_62 = arith.constant 0 : index
    %90 = vector.load %arg7[%c1_60, %c0_61, %c0_62] : memref<4x1x128xf32, #tpu.memory_space<vmem>>, vector<1x1x128xf32>
    %91 = vector.shape_cast %90 : vector<1x1x128xf32> to vector<1x128xf32>
    %92 = vector.broadcast %91 : vector<1x128xf32> to vector<128x128xf32>
    %93 = arith.mulf %89, %92 : vector<128x128xf32>
    %c1_63 = arith.constant 1 : index
    %c0_64 = arith.constant 0 : index
    %c0_65 = arith.constant 0 : index
    %94 = vector.load %arg9[%c1_63, %c0_64, %c0_65] : memref<4x1x128xf32, #tpu.memory_space<vmem>>, vector<1x1x128xf32>
    %95 = vector.shape_cast %94 : vector<1x1x128xf32> to vector<1x128xf32>
    %96 = vector.broadcast %95 : vector<1x128xf32> to vector<128x128xf32>
    %97 = arith.addf %93, %96 : vector<128x128xf32>
    %98 = arith.negf %97 : vector<128x128xf32>
    %99 = math.exp %98 : vector<128x128xf32>
    %cst_66 = arith.constant 1.000000e+00 : f32
    %100 = vector.broadcast %cst_66 : f32 to vector<128x128xf32>
    %101 = arith.addf %100, %99 : vector<128x128xf32>
    %102 = arith.divf %100, %101 : vector<128x128xf32>
    %103 = arith.mulf %84, %102 : vector<128x128xf32>
    %104 = arith.addf %57, %103 : vector<128x128xf32>
    %cst_67 = arith.constant 0.707106769 : f32
    %105 = vector.broadcast %cst_67 : f32 to vector<128x128xf32>
    %106 = arith.mulf %104, %105 : vector<128x128xf32>
    %c2 = arith.constant 2 : index
    %c0_68 = arith.constant 0 : index
    %c0_69 = arith.constant 0 : index
    %107 = vector.load %arg2[%c2, %c0_68, %c0_69] : memref<4x128x128xf32, #tpu.memory_space<vmem>>, vector<1x128x128xf32>
    %108 = vector.shape_cast %107 : vector<1x128x128xf32> to vector<128x128xf32>
    %cst_70 = arith.constant dense<0.000000e+00> : vector<128x128xf32>
    %109 = tpu.matmul %106, %108, %cst_70 {dimension_numbers = #tpu.dot_dimension_numbers<[1], [0], [0], [1], [0, 0, 1, 1], [], []>} : vector<128x128xf32>, vector<128x128xf32>, vector<128x128xf32> -> vector<128x128xf32>
    %c2_71 = arith.constant 2 : index
    %c0_72 = arith.constant 0 : index
    %c0_73 = arith.constant 0 : index
    %110 = vector.load %arg4[%c2_71, %c0_72, %c0_73] : memref<4x1x128xf32, #tpu.memory_space<vmem>>, vector<1x1x128xf32>
    %111 = vector.shape_cast %110 : vector<1x1x128xf32> to vector<1x128xf32>
    %112 = vector.broadcast %111 : vector<1x128xf32> to vector<128x128xf32>
    %113 = arith.addf %109, %112 : vector<128x128xf32>
    %c2_74 = arith.constant 2 : index
    %c0_75 = arith.constant 0 : index
    %c0_76 = arith.constant 0 : index
    %114 = vector.load %arg3[%c2_74, %c0_75, %c0_76] : memref<4x128x128xf32, #tpu.memory_space<vmem>>, vector<1x128x128xf32>
    %115 = vector.shape_cast %114 : vector<1x128x128xf32> to vector<128x128xf32>
    %cst_77 = arith.constant dense<0.000000e+00> : vector<128x128xf32>
    %116 = tpu.matmul %106, %115, %cst_77 {dimension_numbers = #tpu.dot_dimension_numbers<[1], [0], [0], [1], [0, 0, 1, 1], [], []>} : vector<128x128xf32>, vector<128x128xf32>, vector<128x128xf32> -> vector<128x128xf32>
    %c2_78 = arith.constant 2 : index
    %c0_79 = arith.constant 0 : index
    %c0_80 = arith.constant 0 : index
    %117 = vector.load %arg5[%c2_78, %c0_79, %c0_80] : memref<4x1x128xf32, #tpu.memory_space<vmem>>, vector<1x1x128xf32>
    %118 = vector.shape_cast %117 : vector<1x1x128xf32> to vector<1x128xf32>
    %119 = vector.broadcast %118 : vector<1x128xf32> to vector<128x128xf32>
    %120 = arith.addf %116, %119 : vector<128x128xf32>
    %cst_81 = arith.constant 0.000000e+00 : f32
    %121 = vector.broadcast %cst_81 : f32 to vector<128x128xf32>
    %122 = arith.cmpf ogt, %113, %121 : vector<128x128xf32>
    %cst_82 = arith.constant 0.00999999977 : f32
    %123 = vector.broadcast %cst_82 : f32 to vector<128x128xf32>
    %124 = arith.mulf %123, %113 : vector<128x128xf32>
    %125 = arith.select %122, %113, %124 : vector<128x128xi1>, vector<128x128xf32>
    %c2_83 = arith.constant 2 : index
    %c0_84 = arith.constant 0 : index
    %c0_85 = arith.constant 0 : index
    %126 = vector.load %arg6[%c2_83, %c0_84, %c0_85] : memref<4x1x128xf32, #tpu.memory_space<vmem>>, vector<1x1x128xf32>
    %127 = vector.shape_cast %126 : vector<1x1x128xf32> to vector<1x128xf32>
    %128 = vector.broadcast %127 : vector<1x128xf32> to vector<128x128xf32>
    %129 = arith.mulf %125, %128 : vector<128x128xf32>
    %c2_86 = arith.constant 2 : index
    %c0_87 = arith.constant 0 : index
    %c0_88 = arith.constant 0 : index
    %130 = vector.load %arg8[%c2_86, %c0_87, %c0_88] : memref<4x1x128xf32, #tpu.memory_space<vmem>>, vector<1x1x128xf32>
    %131 = vector.shape_cast %130 : vector<1x1x128xf32> to vector<1x128xf32>
    %132 = vector.broadcast %131 : vector<1x128xf32> to vector<128x128xf32>
    %133 = arith.addf %129, %132 : vector<128x128xf32>
    %cst_89 = arith.constant 0.000000e+00 : f32
    %134 = vector.broadcast %cst_89 : f32 to vector<128x128xf32>
    %135 = arith.cmpf ogt, %120, %134 : vector<128x128xf32>
    %cst_90 = arith.constant 0.00999999977 : f32
    %136 = vector.broadcast %cst_90 : f32 to vector<128x128xf32>
    %137 = arith.mulf %136, %120 : vector<128x128xf32>
    %138 = arith.select %135, %120, %137 : vector<128x128xi1>, vector<128x128xf32>
    %c2_91 = arith.constant 2 : index
    %c0_92 = arith.constant 0 : index
    %c0_93 = arith.constant 0 : index
    %139 = vector.load %arg7[%c2_91, %c0_92, %c0_93] : memref<4x1x128xf32, #tpu.memory_space<vmem>>, vector<1x1x128xf32>
    %140 = vector.shape_cast %139 : vector<1x1x128xf32> to vector<1x128xf32>
    %141 = vector.broadcast %140 : vector<1x128xf32> to vector<128x128xf32>
    %142 = arith.mulf %138, %141 : vector<128x128xf32>
    %c2_94 = arith.constant 2 : index
    %c0_95 = arith.constant 0 : index
    %c0_96 = arith.constant 0 : index
    %143 = vector.load %arg9[%c2_94, %c0_95, %c0_96] : memref<4x1x128xf32, #tpu.memory_space<vmem>>, vector<1x1x128xf32>
    %144 = vector.shape_cast %143 : vector<1x1x128xf32> to vector<1x128xf32>
    %145 = vector.broadcast %144 : vector<1x128xf32> to vector<128x128xf32>
    %146 = arith.addf %142, %145 : vector<128x128xf32>
    %147 = arith.negf %146 : vector<128x128xf32>
    %148 = math.exp %147 : vector<128x128xf32>
    %cst_97 = arith.constant 1.000000e+00 : f32
    %149 = vector.broadcast %cst_97 : f32 to vector<128x128xf32>
    %150 = arith.addf %149, %148 : vector<128x128xf32>
    %151 = arith.divf %149, %150 : vector<128x128xf32>
    %152 = arith.mulf %133, %151 : vector<128x128xf32>
    %153 = arith.addf %106, %152 : vector<128x128xf32>
    %cst_98 = arith.constant 0.707106769 : f32
    %154 = vector.broadcast %cst_98 : f32 to vector<128x128xf32>
    %155 = arith.mulf %153, %154 : vector<128x128xf32>
    %c3 = arith.constant 3 : index
    %c0_99 = arith.constant 0 : index
    %c0_100 = arith.constant 0 : index
    %156 = vector.load %arg2[%c3, %c0_99, %c0_100] : memref<4x128x128xf32, #tpu.memory_space<vmem>>, vector<1x128x128xf32>
    %157 = vector.shape_cast %156 : vector<1x128x128xf32> to vector<128x128xf32>
    %cst_101 = arith.constant dense<0.000000e+00> : vector<128x128xf32>
    %158 = tpu.matmul %155, %157, %cst_101 {dimension_numbers = #tpu.dot_dimension_numbers<[1], [0], [0], [1], [0, 0, 1, 1], [], []>} : vector<128x128xf32>, vector<128x128xf32>, vector<128x128xf32> -> vector<128x128xf32>
    %c3_102 = arith.constant 3 : index
    %c0_103 = arith.constant 0 : index
    %c0_104 = arith.constant 0 : index
    %159 = vector.load %arg4[%c3_102, %c0_103, %c0_104] : memref<4x1x128xf32, #tpu.memory_space<vmem>>, vector<1x1x128xf32>
    %160 = vector.shape_cast %159 : vector<1x1x128xf32> to vector<1x128xf32>
    %161 = vector.broadcast %160 : vector<1x128xf32> to vector<128x128xf32>
    %162 = arith.addf %158, %161 : vector<128x128xf32>
    %c3_105 = arith.constant 3 : index
    %c0_106 = arith.constant 0 : index
    %c0_107 = arith.constant 0 : index
    %163 = vector.load %arg3[%c3_105, %c0_106, %c0_107] : memref<4x128x128xf32, #tpu.memory_space<vmem>>, vector<1x128x128xf32>
    %164 = vector.shape_cast %163 : vector<1x128x128xf32> to vector<128x128xf32>
    %cst_108 = arith.constant dense<0.000000e+00> : vector<128x128xf32>
    %165 = tpu.matmul %155, %164, %cst_108 {dimension_numbers = #tpu.dot_dimension_numbers<[1], [0], [0], [1], [0, 0, 1, 1], [], []>} : vector<128x128xf32>, vector<128x128xf32>, vector<128x128xf32> -> vector<128x128xf32>
    %c3_109 = arith.constant 3 : index
    %c0_110 = arith.constant 0 : index
    %c0_111 = arith.constant 0 : index
    %166 = vector.load %arg5[%c3_109, %c0_110, %c0_111] : memref<4x1x128xf32, #tpu.memory_space<vmem>>, vector<1x1x128xf32>
    %167 = vector.shape_cast %166 : vector<1x1x128xf32> to vector<1x128xf32>
    %168 = vector.broadcast %167 : vector<1x128xf32> to vector<128x128xf32>
    %169 = arith.addf %165, %168 : vector<128x128xf32>
    %cst_112 = arith.constant 0.000000e+00 : f32
    %170 = vector.broadcast %cst_112 : f32 to vector<128x128xf32>
    %171 = arith.cmpf ogt, %162, %170 : vector<128x128xf32>
    %cst_113 = arith.constant 0.00999999977 : f32
    %172 = vector.broadcast %cst_113 : f32 to vector<128x128xf32>
    %173 = arith.mulf %172, %162 : vector<128x128xf32>
    %174 = arith.select %171, %162, %173 : vector<128x128xi1>, vector<128x128xf32>
    %c3_114 = arith.constant 3 : index
    %c0_115 = arith.constant 0 : index
    %c0_116 = arith.constant 0 : index
    %175 = vector.load %arg6[%c3_114, %c0_115, %c0_116] : memref<4x1x128xf32, #tpu.memory_space<vmem>>, vector<1x1x128xf32>
    %176 = vector.shape_cast %175 : vector<1x1x128xf32> to vector<1x128xf32>
    %177 = vector.broadcast %176 : vector<1x128xf32> to vector<128x128xf32>
    %178 = arith.mulf %174, %177 : vector<128x128xf32>
    %c3_117 = arith.constant 3 : index
    %c0_118 = arith.constant 0 : index
    %c0_119 = arith.constant 0 : index
    %179 = vector.load %arg8[%c3_117, %c0_118, %c0_119] : memref<4x1x128xf32, #tpu.memory_space<vmem>>, vector<1x1x128xf32>
    %180 = vector.shape_cast %179 : vector<1x1x128xf32> to vector<1x128xf32>
    %181 = vector.broadcast %180 : vector<1x128xf32> to vector<128x128xf32>
    %182 = arith.addf %178, %181 : vector<128x128xf32>
    %cst_120 = arith.constant 0.000000e+00 : f32
    %183 = vector.broadcast %cst_120 : f32 to vector<128x128xf32>
    %184 = arith.cmpf ogt, %169, %183 : vector<128x128xf32>
    %cst_121 = arith.constant 0.00999999977 : f32
    %185 = vector.broadcast %cst_121 : f32 to vector<128x128xf32>
    %186 = arith.mulf %185, %169 : vector<128x128xf32>
    %187 = arith.select %184, %169, %186 : vector<128x128xi1>, vector<128x128xf32>
    %c3_122 = arith.constant 3 : index
    %c0_123 = arith.constant 0 : index
    %c0_124 = arith.constant 0 : index
    %188 = vector.load %arg7[%c3_122, %c0_123, %c0_124] : memref<4x1x128xf32, #tpu.memory_space<vmem>>, vector<1x1x128xf32>
    %189 = vector.shape_cast %188 : vector<1x1x128xf32> to vector<1x128xf32>
    %190 = vector.broadcast %189 : vector<1x128xf32> to vector<128x128xf32>
    %191 = arith.mulf %187, %190 : vector<128x128xf32>
    %c3_125 = arith.constant 3 : index
    %c0_126 = arith.constant 0 : index
    %c0_127 = arith.constant 0 : index
    %192 = vector.load %arg9[%c3_125, %c0_126, %c0_127] : memref<4x1x128xf32, #tpu.memory_space<vmem>>, vector<1x1x128xf32>
    %193 = vector.shape_cast %192 : vector<1x1x128xf32> to vector<1x128xf32>
    %194 = vector.broadcast %193 : vector<1x128xf32> to vector<128x128xf32>
    %195 = arith.addf %191, %194 : vector<128x128xf32>
    %196 = arith.negf %195 : vector<128x128xf32>
    %197 = math.exp %196 : vector<128x128xf32>
    %cst_128 = arith.constant 1.000000e+00 : f32
    %198 = vector.broadcast %cst_128 : f32 to vector<128x128xf32>
    %199 = arith.addf %198, %197 : vector<128x128xf32>
    %200 = arith.divf %198, %199 : vector<128x128xf32>
    %201 = arith.mulf %182, %200 : vector<128x128xf32>
    %202 = arith.addf %155, %201 : vector<128x128xf32>
    %cst_129 = arith.constant 0.707106769 : f32
    %203 = vector.broadcast %cst_129 : f32 to vector<128x128xf32>
    %204 = arith.mulf %202, %203 : vector<128x128xf32>
    %c0_130 = arith.constant 0 : index
    %c0_131 = arith.constant 0 : index
    %205 = vector.load %arg12[%c0_130, %c0_131] : memref<128x128xf32, #tpu.memory_space<vmem>>, vector<128x128xf32>
    tpu.vector_store %arg12[%c0_130, %c0_131], %204 {strides = array<i32>} : memref<128x128xf32, #tpu.memory_space<vmem>>, vector<128x128xf32>,
    return
  }
  func.func @transform_0(%arg0: i32) -> (i32, i32) {
    %c0_i32 = arith.constant 0 : i32
    %c0_i32_0 = arith.constant 0 : i32
    return %arg0, %c0_i32 : i32, i32
  }
  func.func @transform_1(%arg0: i32) -> (i32, i32, i32) {
    %c0_i32 = arith.constant 0 : i32
    %c0_i32_0 = arith.constant 0 : i32
    %c0_i32_1 = arith.constant 0 : i32
    %c0_i32_2 = arith.constant 0 : i32
    return %c0_i32, %c0_i32_0, %c0_i32_1 : i32, i32, i32
  }
  func.func @transform_2(%arg0: i32) -> (i32, i32, i32) {
    %c0_i32 = arith.constant 0 : i32
    %c0_i32_0 = arith.constant 0 : i32
    %c0_i32_1 = arith.constant 0 : i32
    %c0_i32_2 = arith.constant 0 : i32
    return %c0_i32, %c0_i32_0, %c0_i32_1 : i32, i32, i32
  }
  func.func @transform_3(%arg0: i32) -> (i32, i32, i32) {
    %c0_i32 = arith.constant 0 : i32
    %c0_i32_0 = arith.constant 0 : i32
    %c0_i32_1 = arith.constant 0 : i32
    %c0_i32_2 = arith.constant 0 : i32
    return %c0_i32, %c0_i32_0, %c0_i32_1 : i32, i32, i32
  }
  func.func @transform_4(%arg0: i32) -> (i32, i32, i32) {
    %c0_i32 = arith.constant 0 : i32
    %c0_i32_0 = arith.constant 0 : i32
    %c0_i32_1 = arith.constant 0 : i32
    %c0_i32_2 = arith.constant 0 : i32
    return %c0_i32, %c0_i32_0, %c0_i32_1 : i32, i32, i32
  }
  func.func @transform_5(%arg0: i32) -> (i32, i32, i32) {
    %c0_i32 = arith.constant 0 : i32
    %c0_i32_0 = arith.constant 0 : i32
    %c0_i32_1 = arith.constant 0 : i32
    %c0_i32_2 = arith.constant 0 : i32
    return %c0_i32, %c0_i32_0, %c0_i32_1 : i32, i32, i32
  }
  func.func @transform_6(%arg0: i32) -> (i32, i32, i32) {
    %c0_i32 = arith.constant 0 : i32
    %c0_i32_0 = arith.constant 0 : i32
    %c0_i32_1 = arith.constant 0 : i32
    %c0_i32_2 = arith.constant 0 : i32
    return %c0_i32, %c0_i32_0, %c0_i32_1 : i32, i32, i32
  }
  func.func @transform_7(%arg0: i32) -> (i32, i32, i32) {
    %c0_i32 = arith.constant 0 : i32
    %c0_i32_0 = arith.constant 0 : i32
    %c0_i32_1 = arith.constant 0 : i32
    %c0_i32_2 = arith.constant 0 : i32
    return %c0_i32, %c0_i32_0, %c0_i32_1 : i32, i32, i32
  }
  func.func @transform_8(%arg0: i32) -> (i32, i32, i32) {
    %c0_i32 = arith.constant 0 : i32
    %c0_i32_0 = arith.constant 0 : i32
    %c0_i32_1 = arith.constant 0 : i32
    %c0_i32_2 = arith.constant 0 : i32
    return %c0_i32, %c0_i32_0, %c0_i32_1 : i32, i32, i32
  }
  func.func @transform_9(%arg0: i32) -> (i32, i32) {
    %c0_i32 = arith.constant 0 : i32
    %c0_i32_0 = arith.constant 0 : i32
    %c0_i32_1 = arith.constant 0 : i32
    return %c0_i32, %c0_i32_0 : i32, i32
  }
  func.func @transform_10(%arg0: i32) -> (i32, i32) {
    %c0_i32 = arith.constant 0 : i32
    %c0_i32_0 = arith.constant 0 : i32
    %c0_i32_1 = arith.constant 0 : i32
    return %c0_i32, %c0_i32_0 : i32, i32
  }
  func.func @transform_11(%arg0: i32) -> (i32, i32) {
    %c0_i32 = arith.constant 0 : i32
    %c0_i32_0 = arith.constant 0 : i32
    return %arg0, %c0_i32 : i32, i32
  }
}

</mosaic_0001>

<llo_original>
// kernel: tpu_custom_call.1
$region0: #{tpu_custom_call.1}
  #allocation0 [shape = 'u32[]', space=smem, size = 0x4, offset = 0x4, fixed_abs, tag = 'smem constant byte address 0x4 - core index']
  #allocation1 [shape = 'u32[144,128]{1,0:T(1,128)}', space=vmem, size = 0x12000, scoped, tag = 'internal scratch']
  %s0 = inlined_call_operand.hbm [shape: f32[256,128], index: 0, kind: input, shape index: {}]
  %s1 = inlined_call_operand.hbm [shape: f32[4,128,128], index: 1, kind: input, shape index: {}]
  %s2 = inlined_call_operand.hbm [shape: f32[4,128,128], index: 2, kind: input, shape index: {}]
  %s3 = inlined_call_operand.vmem [shape: f32[4,1,128], index: 3, kind: input, shape index: {}]
  %s4 = inlined_call_operand.vmem [shape: f32[4,1,128], index: 4, kind: input, shape index: {}]
  %s5 = inlined_call_operand.vmem [shape: f32[4,1,128], index: 5, kind: input, shape index: {}]
  %s6 = inlined_call_operand.vmem [shape: f32[4,1,128], index: 6, kind: input, shape index: {}]
  %s7 = inlined_call_operand.vmem [shape: f32[4,1,128], index: 7, kind: input, shape index: {}]
  %s8 = inlined_call_operand.vmem [shape: f32[4,1,128], index: 8, kind: input, shape index: {}]
  %s9 = inlined_call_operand.vmem [shape: f32[1,128], index: 9, kind: input, shape index: {}]
  %s10 = inlined_call_operand.vmem [shape: f32[1,128], index: 10, kind: input, shape index: {}]
  %s11 = inlined_call_operand.hbm [shape: f32[256,128], index: 11, kind: output, shape index: {}]
  %s12 = sld [smem:[#allocation0]]
  $region89: #{tpu_custom_call.1} parent=0
    _
  %s14 = ssub.s32 1, %s12
  %s15 = scalar_select 0, %s14, %s12
  $region1: #{tpu_custom_call.1} parent=0
    #allocation2 [shape = 'u8[131072]{0}', space=vmem, size = 0x20000, scoped, tag = 'input window, operand 0']
    #allocation3 [shape = 's32[2]{0}', space=sflag, size = 0x8, scoped, tag = 'scoped memory for tpu_custom_call.1']
    #allocation4 [shape = 's32[2]{0}', space=sflag, size = 0x8, scoped, tag = 'scoped memory for tpu_custom_call.1']
    #allocation5 [shape = 'u8[262144]{0}', space=vmem, size = 0x40000, scoped, tag = 'input window, operand 1, single buffered']
    #allocation6 [shape = 's32[1]{0}', space=sflag, size = 0x4, scoped, tag = 'scoped memory for tpu_custom_call.1']
    #allocation7 [shape = 'u8[262144]{0}', space=vmem, size = 0x40000, scoped, tag = 'input window, operand 2, single buffered']
    #allocation8 [shape = 'u8[131072]{0}', space=vmem, size = 0x20000, scoped, tag = 'output window, operand 0']
    %16 = vsyncpa [#allocation3], 0
    %s17 = scalar_lea.sflag [#allocation3], 1
    %18 = vsyncpa %s17, 0
    %19 = vsyncpa [#allocation6], 0
    %20 = vsyncpa [#allocation4], 0
    %s21 = scalar_lea.sflag [#allocation4], 1
    %22 = vsyncpa %s21, 0
    loop: start=0, step=1, limit=4
    $region2: #{tpu_custom_call.1} parent=1 // loop_pre_header
      _
    $region3: #{tpu_custom_call.1} parent=1 // loop_header
      %s24 = sphi 0, %s28
      %p25 = scmp.ge.s32.totalorder %s24, 4
      %s34 = sphi 0, %s36
      %s37 = sphi 0, %s34
      %s38 = sphi 0, %s37
      %s54 = sphi 0, %s38
      %s58 = sphi 0, %s58
      %s60 = sphi 0, %s58
      %s61 = sphi 0, %s60
      %s75 = sphi 0, %s61
      %s79 = sphi 0, %s79
      %s81 = sphi 0, %s79
      %s82 = sphi 0, %s81
      %s96 = sphi 0, %s82
      %s100 = sphi 0, %s100
      %s102 = sphi 0, %s100
      %s103 = sphi 0, %s102
      %s117 = sphi 0, %s103
      %s121 = sphi 0, %s121
      %s123 = sphi 0, %s121
      %s124 = sphi 0, %s123
      %s138 = sphi 0, %s124
      %s142 = sphi 0, %s142
      %s144 = sphi 0, %s142
      %s145 = sphi 0, %s144
      %s159 = sphi 0, %s145
      %s163 = sphi 0, %s163
      %s165 = sphi 0, %s163
      %s166 = sphi 0, %s165
      %s180 = sphi 0, %s166
      %s184 = sphi 0, %s184
      %s186 = sphi 0, %s184
      %s187 = sphi 0, %s186
      %s201 = sphi 0, %s187
      %s205 = sphi 0, %s205
      %s207 = sphi 0, %s205
      %s208 = sphi 0, %s207
      %s222 = sphi 0, %s208
      %s226 = sphi 0, %s226
      %s228 = sphi 0, %s226
      %s229 = sphi 0, %s228
      %s243 = sphi 0, %s229
      %s247 = sphi 0, %s247
      %s249 = sphi 0, %s247
      %s250 = sphi 0, %s249
      %s264 = sphi 0, %s250
      %s270 = sphi 0, %s272
      %s273 = sphi 0, %s270
      %s274 = sphi 0, %s273
      %s290 = sphi 0, %s274
    $region4: #{tpu_custom_call.1} parent=1 // loop_header_branch
      %27 = sbr.rel (%p25) target = $region8
    $region5: #{tpu_custom_call.1} parent=1 // loop_body
      %s29 = ssub.s32 %s24, 1
      %s30 = ssub.s32 %s24, 2
      %s31 = sadd.s32 %s24, 1
      %s32 = ssub.s32 %s24, %s31
      %p33 = scmp.eq.s32.totalorder %s32, 0
      %s35 = sadd.s32 %s34, 1
      %s36 = scalar_select %p33, %s34, %s35
      %p39 = pneg %p33
      %p40 = scmp.eq.s32.totalorder %s24, 1
      %p41 = por %p39, %p40
      %p42 = scmp.ne.s32.totalorder %s34, %s37
      %p43 = scmp.eq.s32.totalorder %s24, 0
      %p44 = por %p42, %p43
      %p45 = scmp.ne.s32.totalorder %s34, %s37
      %p46 = scmp.eq.s32.totalorder %s29, 1
      %p47 = por %p45, %p46
      %p48 = scmp.ne.s32.totalorder %s37, %s38
      %p49 = scmp.eq.s32.totalorder %s29, 0
      %p50 = por %p48, %p49
      %p51 = scmp.ne.s32.totalorder %s37, %s38
      %p52 = scmp.eq.s32.totalorder %s30, 1
      %p53 = por %p51, %p52
      %p55 = scmp.ne.s32.totalorder %s38, %s54
      %p56 = scmp.eq.s32.totalorder %s30, 0
      %p57 = por %p55, %p56
      %s59 = sadd.s32 %s58, 1
      %p62 = scmp.eq.s32.totalorder %s24, 1
      %p63 = scmp.ne.s32.totalorder %s58, %s60
      %p64 = scmp.eq.s32.totalorder %s24, 0
      %p65 = por %p63, %p64
      %p66 = scmp.ne.s32.totalorder %s58, %s60
      %p67 = scmp.eq.s32.totalorder %s29, 1
      %p68 = por %p66, %p67
      %p69 = scmp.ne.s32.totalorder %s60, %s61
      %p70 = scmp.eq.s32.totalorder %s29, 0
      %p71 = por %p69, %p70
      %p72 = scmp.ne.s32.totalorder %s60, %s61
      %p73 = scmp.eq.s32.totalorder %s30, 1
      %p74 = por %p72, %p73
      %p76 = scmp.ne.s32.totalorder %s61, %s75
      %p77 = scmp.eq.s32.totalorder %s30, 0
      %p78 = por %p76, %p77
      %s80 = sadd.s32 %s79, 1
      %p83 = scmp.eq.s32.totalorder %s24, 1
      %p84 = scmp.ne.s32.totalorder %s79, %s81
      %p85 = scmp.eq.s32.totalorder %s24, 0
      %p86 = por %p84, %p85
      %p87 = scmp.ne.s32.totalorder %s79, %s81
      %p88 = scmp.eq.s32.totalorder %s29, 1
      %p89 = por %p87, %p88
      %p90 = scmp.ne.s32.totalorder %s81, %s82
      %p91 = scmp.eq.s32.totalorder %s29, 0
      %p92 = por %p90, %p91
      %p93 = scmp.ne.s32.totalorder %s81, %s82
      %p94 = scmp.eq.s32.totalorder %s30, 1
      %p95 = por %p93, %p94
      %p97 = scmp.ne.s32.totalorder %s82, %s96
      %p98 = scmp.eq.s32.totalorder %s30, 0
      %p99 = por %p97, %p98
      %s101 = sadd.s32 %s100, 1
      %p104 = scmp.eq.s32.totalorder %s24, 1
      %p105 = scmp.ne.s32.totalorder %s100, %s102
      %p106 = scmp.eq.s32.totalorder %s24, 0
      %p107 = por %p105, %p106
      %p108 = scmp.ne.s32.totalorder %s100, %s102
      %p109 = scmp.eq.s32.totalorder %s29, 1
      %p110 = por %p108, %p109
      %p111 = scmp.ne.s32.totalorder %s102, %s103
      %p112 = scmp.eq.s32.totalorder %s29, 0
      %p113 = por %p111, %p112
      %p114 = scmp.ne.s32.totalorder %s102, %s103
      %p115 = scmp.eq.s32.totalorder %s30, 1
      %p116 = por %p114, %p115
      %p118 = scmp.ne.s32.totalorder %s103, %s117
      %p119 = scmp.eq.s32.totalorder %s30, 0
      %p120 = por %p118, %p119
      %s122 = sadd.s32 %s121, 1
      %p125 = scmp.eq.s32.totalorder %s24, 1
      %p126 = scmp.ne.s32.totalorder %s121, %s123
      %p127 = scmp.eq.s32.totalorder %s24, 0
      %p128 = por %p126, %p127
      %p129 = scmp.ne.s32.totalorder %s121, %s123
      %p130 = scmp.eq.s32.totalorder %s29, 1
      %p131 = por %p129, %p130
      %p132 = scmp.ne.s32.totalorder %s123, %s124
      %p133 = scmp.eq.s32.totalorder %s29, 0
      %p134 = por %p132, %p133
      %p135 = scmp.ne.s32.totalorder %s123, %s124
      %p136 = scmp.eq.s32.totalorder %s30, 1
      %p137 = por %p135, %p136
      %p139 = scmp.ne.s32.totalorder %s124, %s138
      %p140 = scmp.eq.s32.totalorder %s30, 0
      %p141 = por %p139, %p140
      %s143 = sadd.s32 %s142, 1
      %p146 = scmp.eq.s32.totalorder %s24, 1
      %p147 = scmp.ne.s32.totalorder %s142, %s144
      %p148 = scmp.eq.s32.totalorder %s24, 0
      %p149 = por %p147, %p148
      %p150 = scmp.ne.s32.totalorder %s142, %s144
      %p151 = scmp.eq.s32.totalorder %s29, 1
      %p152 = por %p150, %p151
      %p153 = scmp.ne.s32.totalorder %s144, %s145
      %p154 = scmp.eq.s32.totalorder %s29, 0
      %p155 = por %p153, %p154
      %p156 = scmp.ne.s32.totalorder %s144, %s145
      %p157 = scmp.eq.s32.totalorder %s30, 1
      %p158 = por %p156, %p157
      %p160 = scmp.ne.s32.totalorder %s145, %s159
      %p161 = scmp.eq.s32.totalorder %s30, 0
      %p162 = por %p160, %p161
      %s164 = sadd.s32 %s163, 1
      %p167 = scmp.eq.s32.totalorder %s24, 1
      %p168 = scmp.ne.s32.totalorder %s163, %s165
      %p169 = scmp.eq.s32.totalorder %s24, 0
      %p170 = por %p168, %p169
      %p171 = scmp.ne.s32.totalorder %s163, %s165
      %p172 = scmp.eq.s32.totalorder %s29, 1
      %p173 = por %p171, %p172
      %p174 = scmp.ne.s32.totalorder %s165, %s166
      %p175 = scmp.eq.s32.totalorder %s29, 0
      %p176 = por %p174, %p175
      %p177 = scmp.ne.s32.totalorder %s165, %s166
      %p178 = scmp.eq.s32.totalorder %s30, 1
      %p179 = por %p177, %p178
      %p181 = scmp.ne.s32.totalorder %s166, %s180
      %p182 = scmp.eq.s32.totalorder %s30, 0
      %p183 = por %p181, %p182
      %s185 = sadd.s32 %s184, 1
      %p188 = scmp.eq.s32.totalorder %s24, 1
      %p189 = scmp.ne.s32.totalorder %s184, %s186
      %p190 = scmp.eq.s32.totalorder %s24, 0
      %p191 = por %p189, %p190
      %p192 = scmp.ne.s32.totalorder %s184, %s186
      %p193 = scmp.eq.s32.totalorder %s29, 1
      %p194 = por %p192, %p193
      %p195 = scmp.ne.s32.totalorder %s186, %s187
      %p196 = scmp.eq.s32.totalorder %s29, 0
      %p197 = por %p195, %p196
      %p198 = scmp.ne.s32.totalorder %s186, %s187
      %p199 = scmp.eq.s32.totalorder %s30, 1
      %p200 = por %p198, %p199
      %p202 = scmp.ne.s32.totalorder %s187, %s201
      %p203 = scmp.eq.s32.totalorder %s30, 0
      %p204 = por %p202, %p203
      %s206 = sadd.s32 %s205, 1
      %p209 = scmp.eq.s32.totalorder %s24, 1
      %p210 = scmp.ne.s32.totalorder %s205, %s207
      %p211 = scmp.eq.s32.totalorder %s24, 0
      %p212 = por %p210, %p211
      %p213 = scmp.ne.s32.totalorder %s205, %s207
      %p214 = scmp.eq.s32.totalorder %s29, 1
      %p215 = por %p213, %p214
      %p216 = scmp.ne.s32.totalorder %s207, %s208
      %p217 = scmp.eq.s32.totalorder %s29, 0
      %p218 = por %p216, %p217
      %p219 = scmp.ne.s32.totalorder %s207, %s208
      %p220 = scmp.eq.s32.totalorder %s30, 1
      %p221 = por %p219, %p220
      %p223 = scmp.ne.s32.totalorder %s208, %s222
      %p224 = scmp.eq.s32.totalorder %s30, 0
      %p225 = por %p223, %p224
      %s227 = sadd.s32 %s226, 1
      %p230 = scmp.eq.s32.totalorder %s24, 1
      %p231 = scmp.ne.s32.totalorder %s226, %s228
      %p232 = scmp.eq.s32.totalorder %s24, 0
      %p233 = por %p231, %p232
      %p234 = scmp.ne.s32.totalorder %s226, %s228
      %p235 = scmp.eq.s32.totalorder %s29, 1
      %p236 = por %p234, %p235
      %p237 = scmp.ne.s32.totalorder %s228, %s229
      %p238 = scmp.eq.s32.totalorder %s29, 0
      %p239 = por %p237, %p238
      %p240 = scmp.ne.s32.totalorder %s228, %s229
      %p241 = scmp.eq.s32.totalorder %s30, 1
      %p242 = por %p240, %p241
      %p244 = scmp.ne.s32.totalorder %s229, %s243
      %p245 = scmp.eq.s32.totalorder %s30, 0
      %p246 = por %p244, %p245
      %s248 = sadd.s32 %s247, 1
      %p251 = scmp.eq.s32.totalorder %s24, 1
      %p252 = scmp.ne.s32.totalorder %s247, %s249
      %p253 = scmp.eq.s32.totalorder %s24, 0
      %p254 = por %p252, %p253
      %p255 = scmp.ne.s32.totalorder %s247, %s249
      %p256 = scmp.eq.s32.totalorder %s29, 1
      %p257 = por %p255, %p256
      %p258 = scmp.ne.s32.totalorder %s249, %s250
      %p259 = scmp.eq.s32.totalorder %s29, 0
      %p260 = por %p258, %p259
      %p261 = scmp.ne.s32.totalorder %s249, %s250
      %p262 = scmp.eq.s32.totalorder %s30, 1
      %p263 = por %p261, %p262
      %p265 = scmp.ne.s32.totalorder %s250, %s264
      %p266 = scmp.eq.s32.totalorder %s30, 0
      %p267 = por %p265, %p266
      %s268 = ssub.s32 %s24, %s31
      %p269 = scmp.eq.s32.totalorder %s268, 0
      %s271 = sadd.s32 %s270, 1
      %s272 = scalar_select %p269, %s270, %s271
      %p275 = pneg %p269
      %p276 = scmp.eq.s32.totalorder %s24, 1
      %p277 = por %p275, %p276
      %p278 = scmp.ne.s32.totalorder %s270, %s273
      %p279 = scmp.eq.s32.totalorder %s24, 0
      %p280 = por %p278, %p279
      %p281 = scmp.ne.s32.totalorder %s270, %s273
      %p282 = scmp.eq.s32.totalorder %s29, 1
      %p283 = por %p281, %p282
      %p284 = scmp.ne.s32.totalorder %s273, %s274
      %p285 = scmp.eq.s32.totalorder %s29, 0
      %p286 = por %p284, %p285
      %p287 = scmp.ne.s32.totalorder %s273, %s274
      %p288 = scmp.eq.s32.totalorder %s30, 1
      %p289 = por %p287, %p288
      %p291 = scmp.ne.s32.totalorder %s274, %s290
      %p292 = scmp.eq.s32.totalorder %s30, 0
      %p293 = por %p291, %p292
      %p294 = scmp.le.s32.totalorder 1, %s24
      %p295 = scmp.lt.s32.totalorder %s24, 3
      %p296 = pnand %p294, %p295
      %p297 = pneg %p296
      // Predicated region
      $region9: #{tpu_custom_call.1} parent=5 // pred_check
        _
      $region10: #{tpu_custom_call.1} parent=5 // pred_check_branch
        %299 = sbr.rel (%p296) target = $region12
      $region11: #{tpu_custom_call.1} parent=5 // pred_region
        %s300 = ssub.s32 %s24, 1
        // Predicated region
        $region13: #{tpu_custom_call.1} parent=11 // pred_check
          %p301 = pneg %p71
        $region14: #{tpu_custom_call.1} parent=11 // pred_check_branch
          %303 = sbr.rel (%p301) target = $region16
        $region15: #{tpu_custom_call.1} parent=11 // pred_region
          %s305 = ssub.s32 8192, 8192
          %306 = vsyncadd [#allocation6], %s305
          %s307 = sshll.u32 [#allocation5], 4
          %s308 = int_to_ptr.vmem [resolvable:$true] %s307
          %313 = dma.hbm_to_vmem [thread:$0]  %s1, 8192, %s308, [#allocation6], 128, 128, 8
        $region16: #{tpu_custom_call.1} parent=11 // pred_fallthru
          _
        // Predicated region
        $region17: #{tpu_custom_call.1} parent=11 // pred_check
          %p314 = pneg %p92
        $region18: #{tpu_custom_call.1} parent=11 // pred_check_branch
          %316 = sbr.rel (%p314) target = $region20
        $region19: #{tpu_custom_call.1} parent=11 // pred_region
          %s318 = ssub.s32 8192, 8192
          %319 = vsyncadd [#allocation6], %s318
          %s320 = sshll.u32 [#allocation7], 4
          %s321 = int_to_ptr.vmem [resolvable:$true] %s320
          %326 = dma.hbm_to_vmem [thread:$0]  %s2, 8192, %s321, [#allocation6], 128, 128, 8
        $region20: #{tpu_custom_call.1} parent=11 // pred_fallthru
          _
        // Predicated region
        $region21: #{tpu_custom_call.1} parent=11 // pred_check
          %p327 = pneg %p113
        $region22: #{tpu_custom_call.1} parent=11 // pred_check_branch
          %329 = sbr.rel (%p327) target = $region24
        $region23: #{tpu_custom_call.1} parent=11 // pred_region
          _
        $region24: #{tpu_custom_call.1} parent=11 // pred_fallthru
          _
        // Predicated region
        $region25: #{tpu_custom_call.1} parent=11 // pred_check
          %p330 = pneg %p134
        $region26: #{tpu_custom_call.1} parent=11 // pred_check_branch
          %332 = sbr.rel (%p330) target = $region28
        $region27: #{tpu_custom_call.1} parent=11 // pred_region
          _
        $region28: #{tpu_custom_call.1} parent=11 // pred_fallthru
          _
        // Predicated region
        $region29: #{tpu_custom_call.1} parent=11 // pred_check
          %p333 = pneg %p155
        $region30: #{tpu_custom_call.1} parent=11 // pred_check_branch
          %335 = sbr.rel (%p333) target = $region32
        $region31: #{tpu_custom_call.1} parent=11 // pred_region
          _
        $region32: #{tpu_custom_call.1} parent=11 // pred_fallthru
          _
        // Predicated region
        $region33: #{tpu_custom_call.1} parent=11 // pred_check
          %p336 = pneg %p176
        $region34: #{tpu_custom_call.1} parent=11 // pred_check_branch
          %338 = sbr.rel (%p336) target = $region36
        $region35: #{tpu_custom_call.1} parent=11 // pred_region
          _
        $region36: #{tpu_custom_call.1} parent=11 // pred_fallthru
          _
        // Predicated region
        $region37: #{tpu_custom_call.1} parent=11 // pred_check
          %p339 = pneg %p197
        $region38: #{tpu_custom_call.1} parent=11 // pred_check_branch
          %341 = sbr.rel (%p339) target = $region40
        $region39: #{tpu_custom_call.1} parent=11 // pred_region
          _
        $region40: #{tpu_custom_call.1} parent=11 // pred_fallthru
          _
        // Predicated region
        $region41: #{tpu_custom_call.1} parent=11 // pred_check
          %p342 = pneg %p218
        $region42: #{tpu_custom_call.1} parent=11 // pred_check_branch
          %344 = sbr.rel (%p342) target = $region44
        $region43: #{tpu_custom_call.1} parent=11 // pred_region
          _
        $region44: #{tpu_custom_call.1} parent=11 // pred_fallthru
          _
        // Predicated region
        $region45: #{tpu_custom_call.1} parent=11 // pred_check
          %p345 = pneg %p239
        $region46: #{tpu_custom_call.1} parent=11 // pred_check_branch
          %347 = sbr.rel (%p345) target = $region48
        $region47: #{tpu_custom_call.1} parent=11 // pred_region
          _
        $region48: #{tpu_custom_call.1} parent=11 // pred_fallthru
          _
        // Predicated region
        $region49: #{tpu_custom_call.1} parent=11 // pred_check
          %p348 = pneg %p260
        $region50: #{tpu_custom_call.1} parent=11 // pred_check_branch
          %350 = sbr.rel (%p348) target = $region52
        $region51: #{tpu_custom_call.1} parent=11 // pred_region
          _
        $region52: #{tpu_custom_call.1} parent=11 // pred_fallthru
          _
      $region12: #{tpu_custom_call.1} parent=5 // pred_fallthru
        _
      %p351 = scmp.lt.s32.totalorder %s24, 2
      // Predicated region
      $region53: #{tpu_custom_call.1} parent=5 // pred_check
        %p352 = pneg %p351
      $region54: #{tpu_custom_call.1} parent=5 // pred_check_branch
        %354 = sbr.rel (%p352) target = $region56
      $region55: #{tpu_custom_call.1} parent=5 // pred_region
        // Predicated region
        $region57: #{tpu_custom_call.1} parent=55 // pred_check
          %p355 = pneg %p44
        $region58: #{tpu_custom_call.1} parent=55 // pred_check_branch
          %357 = sbr.rel (%p355) target = $region60
        $region59: #{tpu_custom_call.1} parent=55 // pred_region
          %s358 = sand.u32 %s34, 1
          %s359 = scalar_lea.sflag [#allocation3], %s358
          %s360 = sand.u32 %s34, 1
          %s361 = smul.addr %s360, 128
          %s362 = scalar_lea.vmem [#allocation2], %s361
          %s363 = smul.u32 16, %s24
          %s365 = ssub.s32 2048, 2048
          %366 = vsyncadd %s359, %s365
          %s367 = smul.addr %s363, 128
          %s368 = scalar_lea.hbm %s0, %s367
          %s369 = sshll.u32 %s362, 4
          %s370 = int_to_ptr.vmem [resolvable:$true] %s369
          %375 = dma.hbm_to_vmem [thread:$0]  %s368, 2048, %s370, %s359, 128, 128, 8
        $region60: #{tpu_custom_call.1} parent=55 // pred_fallthru
          _
      $region56: #{tpu_custom_call.1} parent=5 // pred_fallthru
        _
      %p376 = scmp.le.s32.totalorder 1, %s24
      %p377 = scmp.lt.s32.totalorder %s24, 3
      %p378 = pnand %p376, %p377
      %p379 = pneg %p378
      // Predicated region
      $region61: #{tpu_custom_call.1} parent=5 // pred_check
        _
      $region62: #{tpu_custom_call.1} parent=5 // pred_check_branch
        %381 = sbr.rel (%p378) target = $region64
      $region63: #{tpu_custom_call.1} parent=5 // pred_region
        %s382 = ssub.s32 %s24, 1
        %s383 = sand.u32 %s37, 1
        %s384 = scalar_lea.sflag [#allocation3], %s383
        %s385 = sand.u32 %s37, 1
        %s386 = smul.addr %s385, 128
        %s387 = scalar_lea.vmem [#allocation2], %s386
        // Predicated region
        $region65: #{tpu_custom_call.1} parent=63 // pred_check
          %p388 = pneg %p50
        $region66: #{tpu_custom_call.1} parent=63 // pred_check_branch
          %390 = sbr.rel (%p388) target = $region68
        $region67: #{tpu_custom_call.1} parent=63 // pred_region
          %391 = dma.done %s384, 2048
        $region68: #{tpu_custom_call.1} parent=63 // pred_fallthru
          _
        // Predicated region
        $region69: #{tpu_custom_call.1} parent=63 // pred_check
          %p392 = pneg %p71
        $region70: #{tpu_custom_call.1} parent=63 // pred_check_branch
          %394 = sbr.rel (%p392) target = $region72
        $region71: #{tpu_custom_call.1} parent=63 // pred_region
          %395 = dma.done [#allocation6], 8192
        $region72: #{tpu_custom_call.1} parent=63 // pred_fallthru
          _
        // Predicated region
        $region73: #{tpu_custom_call.1} parent=63 // pred_check
          %p396 = pneg %p92
        $region74: #{tpu_custom_call.1} parent=63 // pred_check_branch
          %398 = sbr.rel (%p396) target = $region76
        $region75: #{tpu_custom_call.1} parent=63 // pred_region
          %399 = dma.done [#allocation6], 8192
        $region76: #{tpu_custom_call.1} parent=63 // pred_fallthru
          _
        %s400 = sand.u32 %s37, 1
        %s401 = scalar_lea.sflag [#allocation3], %s400
        %s402 = sand.u32 %s37, 1
        %s403 = smul.addr %s402, 128
        %s404 = scalar_lea.vmem [#allocation2], %s403
        %p405 = pneg %p50
        %p406 = pneg %p47
        %p407 = pneg %p71
        %p408 = pneg %p68
        %p409 = pneg %p92
        %p410 = pneg %p89
        %p411 = pneg %p113
        %p412 = pneg %p110
        %p413 = pneg %p134
        %p414 = pneg %p131
        %p415 = pneg %p155
        %p416 = pneg %p152
        %p417 = pneg %p176
        %p418 = pneg %p173
        %p419 = pneg %p197
        %p420 = pneg %p194
        %p421 = pneg %p218
        %p422 = pneg %p215
        %p423 = pneg %p239
        %p424 = pneg %p236
        %p425 = pneg %p260
        %p426 = pneg %p257
        %p427 = pneg %p286
        %p428 = pneg %p283
        %s429 = sand.u32 %s273, 1
        %s430 = scalar_lea.sflag [#allocation4], %s429
        %s431 = sand.u32 %s273, 1
        %s432 = smul.addr %s431, 128
        %s433 = scalar_lea.vmem [#allocation8], %s432
        %s434 = smul.u32 16, %s29
        %s435 = smul.u32 16, %s29
        %v436 = vld [vmem:[%s387] sm:$0xff]
        %v437 = vld [vmem:[%s387 + $0x8] sm:$0xff]
        %v438 = vld [vmem:[%s387 + $0x10] sm:$0xff]
        %v439 = vld [vmem:[%s387 + $0x18] sm:$0xff]
        %v440 = vld [vmem:[%s387 + $0x20] sm:$0xff]
        %v441 = vld [vmem:[%s387 + $0x28] sm:$0xff]
        %v442 = vld [vmem:[%s387 + $0x30] sm:$0xff]
        %v443 = vld [vmem:[%s387 + $0x38] sm:$0xff]
        %v444 = vld [vmem:[%s387 + $0x40] sm:$0xff]
        %v445 = vld [vmem:[%s387 + $0x48] sm:$0xff]
        %v446 = vld [vmem:[%s387 + $0x50] sm:$0xff]
        %v447 = vld [vmem:[%s387 + $0x58] sm:$0xff]
        %v448 = vld [vmem:[%s387 + $0x60] sm:$0xff]
        %v449 = vld [vmem:[%s387 + $0x68] sm:$0xff]
        %v450 = vld [vmem:[%s387 + $0x70] sm:$0xff]
        %v451 = vld [vmem:[%s387 + $0x78] sm:$0xff]
        %v452 = vld [vmem:[#allocation5] sm:$0xff]
        %v453 = vld [vmem:[#allocation5 + $0x8] sm:$0xff]
        %v454 = vld [vmem:[#allocation5 + $0x10] sm:$0xff]
        %v455 = vld [vmem:[#allocation5 + $0x18] sm:$0xff]
        %v456 = vld [vmem:[#allocation5 + $0x20] sm:$0xff]
        %v457 = vld [vmem:[#allocation5 + $0x28] sm:$0xff]
        %v458 = vld [vmem:[#allocation5 + $0x30] sm:$0xff]
        %v459 = vld [vmem:[#allocation5 + $0x38] sm:$0xff]
        %v460 = vld [vmem:[#allocation5 + $0x40] sm:$0xff]
        %v461 = vld [vmem:[#allocation5 + $0x48] sm:$0xff]
        %v462 = vld [vmem:[#allocation5 + $0x50] sm:$0xff]
        %v463 = vld [vmem:[#allocation5 + $0x58] sm:$0xff]
        %v464 = vld [vmem:[#allocation5 + $0x60] sm:$0xff]
        %v465 = vld [vmem:[#allocation5 + $0x68] sm:$0xff]
        %v466 = vld [vmem:[#allocation5 + $0x70] sm:$0xff]
        %v467 = vld [vmem:[#allocation5 + $0x78] sm:$0xff]
        %v468 = vld [vmem:[%s3] sm:$0x1]
        %v470 = vlaneseq
        %v471 = vshrl.u32 %v470, 7
        %v472 = vsub.s32 0, %v471
        %v473 = vrot.slane %v468, %v472
        %475 = vmatprep.subr.mxu0 0.0
        %476 = vmatpush1.msra.mxu0 %v452
        %477 = vmatprep.subr.mxu0 0.0
        %478 = vmatpush1.msra.mxu0 %v453
        %479 = vmatprep.subr.mxu0 0.0
        %480 = vmatpush1.msra.mxu0 %v454
        %481 = vmatprep.subr.mxu0 0.0
        %482 = vmatpush1.msra.mxu0 %v455
        %483 = vmatprep.subr.mxu0 0.0
        %484 = vmatpush1.msra.mxu0 %v456
        %485 = vmatprep.subr.mxu0 0.0
        %486 = vmatpush1.msra.mxu0 %v457
        %487 = vmatprep.subr.mxu0 0.0
        %488 = vmatpush1.msra.mxu0 %v458
        %489 = vmatprep.subr.mxu0 0.0
        %490 = vmatpush1.msra.mxu0 %v459
        %491 = vmatprep.subr.mxu0 0.0
        %492 = vmatpush1.msra.mxu0 %v460
        %493 = vmatprep.subr.mxu0 0.0
        %494 = vmatpush1.msra.mxu0 %v461
        %495 = vmatprep.subr.mxu0 0.0
        %496 = vmatpush1.msra.mxu0 %v462
        %497 = vmatprep.subr.mxu0 0.0
        %498 = vmatpush1.msra.mxu0 %v463
        %499 = vmatprep.subr.mxu0 0.0
        %500 = vmatpush1.msra.mxu0 %v464
        %501 = vmatprep.subr.mxu0 0.0
        %502 = vmatpush1.msra.mxu0 %v465
        %503 = vmatprep.subr.mxu0 0.0
        %504 = vmatpush1.msra.mxu0 %v466
        %505 = vmatprep.subr.mxu0 0.0
        %506 = vmatpush1.msra.mxu0 %v467
        %507 = vmatprep.subr.mxu0 0.0
        %508 = vmatpush1.msra.mxu0 0.0
        %509 = vmatprep.subr.mxu0 0.0
        %510 = vmatpush1.msra.mxu0 0.0
        %511 = vmatprep.subr.mxu0 0.0
        %512 = vmatpush1.msra.mxu0 0.0
        %513 = vmatprep.subr.mxu0 0.0
        %514 = vmatpush1.msra.mxu0 0.0
        %515 = vmatprep.subr.mxu0 0.0
        %516 = vmatpush1.msra.mxu0 0.0
        %517 = vmatprep.subr.mxu0 0.0
        %518 = vmatpush1.msra.mxu0 0.0
        %519 = vmatprep.subr.mxu0 0.0
        %520 = vmatpush1.msra.mxu0 0.0
        %521 = vmatprep.subr.mxu0 0.0
        %522 = vmatpush1.msra.mxu0 0.0
        %523 = vmatprep.subr.mxu0 0.0
        %524 = vmatpush1.msra.mxu0 0.0
        %525 = vmatprep.subr.mxu0 0.0
        %526 = vmatpush1.msra.mxu0 0.0
        %527 = vmatprep.subr.mxu0 0.0
        %528 = vmatpush1.msra.mxu0 0.0
        %529 = vmatprep.subr.mxu0 0.0
        %530 = vmatpush1.msra.mxu0 0.0
        %531 = vmatprep.subr.mxu0 0.0
        %532 = vmatpush1.msra.mxu0 0.0
        %533 = vmatprep.subr.mxu0 0.0
        %534 = vmatpush1.msra.mxu0 0.0
        %535 = vmatprep.subr.mxu0 0.0
        %536 = vmatpush1.msra.mxu0 0.0
        %537 = vmatprep.subr.mxu0 0.0
        %538 = vmatpush1.msra.mxu0 0.0
        %539 = vmatprep.mubr.f32.mxu0 0.0
        %540 = vmatmul.mubr.f32.gmra.mrb[0].mxu0 %v436
        %v541 = vpop.f32.mrb[0].mxu0
        %v542 = vadd.f32 %v473, %v541
        %v543 = vpop.f32.mrb[0].mxu0
        %544 = vmatprep.mubr.f32.mxu0 0.0
        %545 = vmatmul.mubr.f32.gmra.mrb[0].mxu0 %v437
        %v546 = vpop.f32.mrb[0].mxu0
        %v547 = vadd.f32 %v473, %v546
        %v548 = vpop.f32.mrb[0].mxu0
        %549 = vmatprep.mubr.f32.mxu0 0.0
        %550 = vmatmul.mubr.f32.gmra.mrb[0].mxu0 %v438
        %v551 = vpop.f32.mrb[0].mxu0
        %v552 = vadd.f32 %v473, %v551
        %v553 = vpop.f32.mrb[0].mxu0
        %554 = vmatprep.mubr.f32.mxu0 0.0
        %555 = vmatmul.mubr.f32.gmra.mrb[0].mxu0 %v439
        %v556 = vpop.f32.mrb[0].mxu0
        %v557 = vadd.f32 %v473, %v556
        %v558 = vpop.f32.mrb[0].mxu0
        %559 = vmatprep.mubr.f32.mxu0 0.0
        %560 = vmatmul.mubr.f32.gmra.mrb[0].mxu0 %v440
        %v561 = vpop.f32.mrb[0].mxu0
        %v562 = vadd.f32 %v473, %v561
        %v563 = vpop.f32.mrb[0].mxu0
        %564 = vmatprep.mubr.f32.mxu0 0.0
        %565 = vmatmul.mubr.f32.gmra.mrb[0].mxu0 %v441
        %v566 = vpop.f32.mrb[0].mxu0
        %v567 = vadd.f32 %v473, %v566
        %v568 = vpop.f32.mrb[0].mxu0
        %569 = vmatprep.mubr.f32.mxu0 0.0
        %570 = vmatmul.mubr.f32.gmra.mrb[0].mxu0 %v442
        %v571 = vpop.f32.mrb[0].mxu0
        %v572 = vadd.f32 %v473, %v571
        %v573 = vpop.f32.mrb[0].mxu0
        %574 = vmatprep.mubr.f32.mxu0 0.0
        %575 = vmatmul.mubr.f32.gmra.mrb[0].mxu0 %v443
        %v576 = vpop.f32.mrb[0].mxu0
        %v577 = vadd.f32 %v473, %v576
        %v578 = vpop.f32.mrb[0].mxu0
        %579 = vmatprep.mubr.f32.mxu0 0.0
        %580 = vmatmul.mubr.f32.gmra.mrb[0].mxu0 %v444
        %v581 = vpop.f32.mrb[0].mxu0
        %v582 = vadd.f32 %v473, %v581
        %v583 = vpop.f32.mrb[0].mxu0
        %584 = vmatprep.mubr.f32.mxu0 0.0
        %585 = vmatmul.mubr.f32.gmra.mrb[0].mxu0 %v445
        %v586 = vpop.f32.mrb[0].mxu0
        %v587 = vadd.f32 %v473, %v586
        %v588 = vpop.f32.mrb[0].mxu0
        %589 = vmatprep.mubr.f32.mxu0 0.0
        %590 = vmatmul.mubr.f32.gmra.mrb[0].mxu0 %v446
        %v591 = vpop.f32.mrb[0].mxu0
        %v592 = vadd.f32 %v473, %v591
        %v593 = vpop.f32.mrb[0].mxu0
        %594 = vmatprep.mubr.f32.mxu0 0.0
        %595 = vmatmul.mubr.f32.gmra.mrb[0].mxu0 %v447
        %v596 = vpop.f32.mrb[0].mxu0
        %v597 = vadd.f32 %v473, %v596
        %v598 = vpop.f32.mrb[0].mxu0
        %599 = vmatprep.mubr.f32.mxu0 0.0
        %600 = vmatmul.mubr.f32.gmra.mrb[0].mxu0 %v448
        %v601 = vpop.f32.mrb[0].mxu0
        %v602 = vadd.f32 %v473, %v601
        %v603 = vpop.f32.mrb[0].mxu0
        %604 = vmatprep.mubr.f32.mxu0 0.0
        %605 = vmatmul.mubr.f32.gmra.mrb[0].mxu0 %v449
        %v606 = vpop.f32.mrb[0].mxu0
        %v607 = vadd.f32 %v473, %v606
        %v608 = vpop.f32.mrb[0].mxu0
        %609 = vmatprep.mubr.f32.mxu0 0.0
        %610 = vmatmul.mubr.f32.gmra.mrb[0].mxu0 %v450
        %v611 = vpop.f32.mrb[0].mxu0
        %v612 = vadd.f32 %v473, %v611
        %v613 = vpop.f32.mrb[0].mxu0
        %614 = vmatprep.mubr.f32.mxu0 0.0
        %615 = vmatmul.mubr.f32.gmra.mrb[0].mxu0 %v451
        %v616 = vpop.f32.mrb[0].mxu0
        %v617 = vadd.f32 %v473, %v616
        %v618 = vpop.f32.mrb[0].mxu0
        %619 = vdwg.mxu0
        %v620 = vld [vmem:[#allocation7] sm:$0xff]
        %v621 = vld [vmem:[#allocation7 + $0x8] sm:$0xff]
        %v622 = vld [vmem:[#allocation7 + $0x10] sm:$0xff]
        %v623 = vld [vmem:[#allocation7 + $0x18] sm:$0xff]
        %v624 = vld [vmem:[#allocation7 + $0x20] sm:$0xff]
        %v625 = vld [vmem:[#allocation7 + $0x28] sm:$0xff]
        %v626 = vld [vmem:[#allocation7 + $0x30] sm:$0xff]
        %v627 = vld [vmem:[#allocation7 + $0x38] sm:$0xff]
        %v628 = vld [vmem:[#allocation7 + $0x40] sm:$0xff]
        %v629 = vld [vmem:[#allocation7 + $0x48] sm:$0xff]
        %v630 = vld [vmem:[#allocation7 + $0x50] sm:$0xff]
        %v631 = vld [vmem:[#allocation7 + $0x58] sm:$0xff]
        %v632 = vld [vmem:[#allocation7 + $0x60] sm:$0xff]
        %v633 = vld [vmem:[#allocation7 + $0x68] sm:$0xff]
        %v634 = vld [vmem:[#allocation7 + $0x70] sm:$0xff]
        %v635 = vld [vmem:[#allocation7 + $0x78] sm:$0xff]
        %v636 = vld [vmem:[%s4] sm:$0x1]
        %v638 = vlaneseq
        %v639 = vshrl.u32 %v638, 7
        %v640 = vsub.s32 0, %v639
        %v641 = vrot.slane %v636, %v640
        %643 = vmatprep.subr.mxu0 0.0
        %644 = vmatpush1.msra.mxu0 %v620
        %645 = vmatprep.subr.mxu0 0.0
        %646 = vmatpush1.msra.mxu0 %v621
        %647 = vmatprep.subr.mxu0 0.0
        %648 = vmatpush1.msra.mxu0 %v622
        %649 = vmatprep.subr.mxu0 0.0
        %650 = vmatpush1.msra.mxu0 %v623
        %651 = vmatprep.subr.mxu0 0.0
        %652 = vmatpush1.msra.mxu0 %v624
        %653 = vmatprep.subr.mxu0 0.0
        %654 = vmatpush1.msra.mxu0 %v625
        %655 = vmatprep.subr.mxu0 0.0
        %656 = vmatpush1.msra.mxu0 %v626
        %657 = vmatprep.subr.mxu0 0.0
        %658 = vmatpush1.msra.mxu0 %v627
        %659 = vmatprep.subr.mxu0 0.0
        %660 = vmatpush1.msra.mxu0 %v628
        %661 = vmatprep.subr.mxu0 0.0
        %662 = vmatpush1.msra.mxu0 %v629
        %663 = vmatprep.subr.mxu0 0.0
        %664 = vmatpush1.msra.mxu0 %v630
        %665 = vmatprep.subr.mxu0 0.0
        %666 = vmatpush1.msra.mxu0 %v631
        %667 = vmatprep.subr.mxu0 0.0
        %668 = vmatpush1.msra.mxu0 %v632
        %669 = vmatprep.subr.mxu0 0.0
        %670 = vmatpush1.msra.mxu0 %v633
        %671 = vmatprep.subr.mxu0 0.0
        %672 = vmatpush1.msra.mxu0 %v634
        %673 = vmatprep.subr.mxu0 0.0
        %674 = vmatpush1.msra.mxu0 %v635
        %675 = vmatprep.subr.mxu0 0.0
        %676 = vmatpush1.msra.mxu0 0.0
        %677 = vmatprep.subr.mxu0 0.0
        %678 = vmatpush1.msra.mxu0 0.0
        %679 = vmatprep.subr.mxu0 0.0
        %680 = vmatpush1.msra.mxu0 0.0
        %681 = vmatprep.subr.mxu0 0.0
        %682 = vmatpush1.msra.mxu0 0.0
        %683 = vmatprep.subr.mxu0 0.0
        %684 = vmatpush1.msra.mxu0 0.0
        %685 = vmatprep.subr.mxu0 0.0
        %686 = vmatpush1.msra.mxu0 0.0
        %687 = vmatprep.subr.mxu0 0.0
        %688 = vmatpush1.msra.mxu0 0.0
        %689 = vmatprep.subr.mxu0 0.0
        %690 = vmatpush1.msra.mxu0 0.0
        %691 = vmatprep.subr.mxu0 0.0
        %692 = vmatpush1.msra.mxu0 0.0
        %693 = vmatprep.subr.mxu0 0.0
        %694 = vmatpush1.msra.mxu0 0.0
        %695 = vmatprep.subr.mxu0 0.0
        %696 = vmatpush1.msra.mxu0 0.0
        %697 = vmatprep.subr.mxu0 0.0
        %698 = vmatpush1.msra.mxu0 0.0
        %699 = vmatprep.subr.mxu0 0.0
        %700 = vmatpush1.msra.mxu0 0.0
        %701 = vmatprep.subr.mxu0 0.0
        %702 = vmatpush1.msra.mxu0 0.0
        %703 = vmatprep.subr.mxu0 0.0
        %704 = vmatpush1.msra.mxu0 0.0
        %705 = vmatprep.subr.mxu0 0.0
        %706 = vmatpush1.msra.mxu0 0.0
        %707 = vmatprep.mubr.f32.mxu0 0.0
        %708 = vmatmul.mubr.f32.gmra.mrb[0].mxu0 %v436
        %v709 = vpop.f32.mrb[0].mxu0
        %v710 = vadd.f32 %v641, %v709
        %v711 = vpop.f32.mrb[0].mxu0
        %712 = vmatprep.mubr.f32.mxu0 0.0
        %713 = vmatmul.mubr.f32.gmra.mrb[0].mxu0 %v437
        %v714 = vpop.f32.mrb[0].mxu0
        %v715 = vadd.f32 %v641, %v714
        %v716 = vpop.f32.mrb[0].mxu0
        %717 = vmatprep.mubr.f32.mxu0 0.0
        %718 = vmatmul.mubr.f32.gmra.mrb[0].mxu0 %v438
        %v719 = vpop.f32.mrb[0].mxu0
        %v720 = vadd.f32 %v641, %v719
        %v721 = vpop.f32.mrb[0].mxu0
        %722 = vmatprep.mubr.f32.mxu0 0.0
        %723 = vmatmul.mubr.f32.gmra.mrb[0].mxu0 %v439
        %v724 = vpop.f32.mrb[0].mxu0
        %v725 = vadd.f32 %v641, %v724
        %v726 = vpop.f32.mrb[0].mxu0
        %727 = vmatprep.mubr.f32.mxu0 0.0
        %728 = vmatmul.mubr.f32.gmra.mrb[0].mxu0 %v440
        %v729 = vpop.f32.mrb[0].mxu0
        %v730 = vadd.f32 %v641, %v729
        %v731 = vpop.f32.mrb[0].mxu0
        %732 = vmatprep.mubr.f32.mxu0 0.0
        %733 = vmatmul.mubr.f32.gmra.mrb[0].mxu0 %v441
        %v734 = vpop.f32.mrb[0].mxu0
        %v735 = vadd.f32 %v641, %v734
        %v736 = vpop.f32.mrb[0].mxu0
        %737 = vmatprep.mubr.f32.mxu0 0.0
        %738 = vmatmul.mubr.f32.gmra.mrb[0].mxu0 %v442
        %v739 = vpop.f32.mrb[0].mxu0
        %v740 = vadd.f32 %v641, %v739
        %v741 = vpop.f32.mrb[0].mxu0
        %742 = vmatprep.mubr.f32.mxu0 0.0
        %743 = vmatmul.mubr.f32.gmra.mrb[0].mxu0 %v443
        %v744 = vpop.f32.mrb[0].mxu0
        %v745 = vadd.f32 %v641, %v744
        %v746 = vpop.f32.mrb[0].mxu0
        %747 = vmatprep.mubr.f32.mxu0 0.0
        %748 = vmatmul.mubr.f32.gmra.mrb[0].mxu0 %v444
        %v749 = vpop.f32.mrb[0].mxu0
        %v750 = vadd.f32 %v641, %v749
        %v751 = vpop.f32.mrb[0].mxu0
        %752 = vmatprep.mubr.f32.mxu0 0.0
        %753 = vmatmul.mubr.f32.gmra.mrb[0].mxu0 %v445
        %v754 = vpop.f32.mrb[0].mxu0
        %v755 = vadd.f32 %v641, %v754
        %v756 = vpop.f32.mrb[0].mxu0
        %757 = vmatprep.mubr.f32.mxu0 0.0
        %758 = vmatmul.mubr.f32.gmra.mrb[0].mxu0 %v446
        %v759 = vpop.f32.mrb[0].mxu0
        %v760 = vadd.f32 %v641, %v759
        %v761 = vpop.f32.mrb[0].mxu0
        %762 = vmatprep.mubr.f32.mxu0 0.0
        %763 = vmatmul.mubr.f32.gmra.mrb[0].mxu0 %v447
        %v764 = vpop.f32.mrb[0].mxu0
        %v765 = vadd.f32 %v641, %v764
        %v766 = vpop.f32.mrb[0].mxu0
        %767 = vmatprep.mubr.f32.mxu0 0.0
        %768 = vmatmul.mubr.f32.gmra.mrb[0].mxu0 %v448
        %v769 = vpop.f32.mrb[0].mxu0
        %v770 = vadd.f32 %v641, %v769
        %v771 = vpop.f32.mrb[0].mxu0
        %772 = vmatprep.mubr.f32.mxu0 0.0
        %773 = vmatmul.mubr.f32.gmra.mrb[0].mxu0 %v449
        %v774 = vpop.f32.mrb[0].mxu0
        %v775 = vadd.f32 %v641, %v774
        %v776 = vpop.f32.mrb[0].mxu0
        %777 = vmatprep.mubr.f32.mxu0 0.0
        %778 = vmatmul.mubr.f32.gmra.mrb[0].mxu0 %v450
        %v779 = vpop.f32.mrb[0].mxu0
        %v780 = vadd.f32 %v641, %v779
        %v781 = vpop.f32.mrb[0].mxu0
        %782 = vmatprep.mubr.f32.mxu0 0.0
        %783 = vmatmul.mubr.f32.gmra.mrb[0].mxu0 %v451
        %v784 = vpop.f32.mrb[0].mxu0
        %v785 = vadd.f32 %v641, %v784
        %v786 = vpop.f32.mrb[0].mxu0
        %787 = vdwg.mxu0
        %vm788 = vcmp.gt.f32.partialorder %v542, 0.0
        %vm789 = vcmp.gt.f32.partialorder %v547, 0.0
        %vm790 = vcmp.gt.f32.partialorder %v552, 0.0
        %vm791 = vcmp.gt.f32.partialorder %v557, 0.0
        %vm792 = vcmp.gt.f32.partialorder %v562, 0.0
        %vm793 = vcmp.gt.f32.partialorder %v567, 0.0
        %vm794 = vcmp.gt.f32.partialorder %v572, 0.0
        %vm795 = vcmp.gt.f32.partialorder %v577, 0.0
        %vm796 = vcmp.gt.f32.partialorder %v582, 0.0
        %vm797 = vcmp.gt.f32.partialorder %v587, 0.0
        %vm798 = vcmp.gt.f32.partialorder %v592, 0.0
        %vm799 = vcmp.gt.f32.partialorder %v597, 0.0
        %vm800 = vcmp.gt.f32.partialorder %v602, 0.0
        %vm801 = vcmp.gt.f32.partialorder %v607, 0.0
        %vm802 = vcmp.gt.f32.partialorder %v612, 0.0
        %vm803 = vcmp.gt.f32.partialorder %v617, 0.0
        %v804 = vmul.f32 %v542, 0.01
        %v805 = vmul.f32 %v547, 0.01
        %v806 = vmul.f32 %v552, 0.01
        %v807 = vmul.f32 %v557, 0.01
        %v808 = vmul.f32 %v562, 0.01
        %v809 = vmul.f32 %v567, 0.01
        %v810 = vmul.f32 %v572, 0.01
        %v811 = vmul.f32 %v577, 0.01
        %v812 = vmul.f32 %v582, 0.01
        %v813 = vmul.f32 %v587, 0.01
        %v814 = vmul.f32 %v592, 0.01
        %v815 = vmul.f32 %v597, 0.01
        %v816 = vmul.f32 %v602, 0.01
        %v817 = vmul.f32 %v607, 0.01
        %v818 = vmul.f32 %v612, 0.01
        %v819 = vmul.f32 %v617, 0.01
        %v820 = vsel %vm788, %v542, %v804
        %v821 = vsel %vm789, %v547, %v805
        %v822 = vsel %vm790, %v552, %v806
        %v823 = vsel %vm791, %v557, %v807
        %v824 = vsel %vm792, %v562, %v808
        %v825 = vsel %vm793, %v567, %v809
        %v826 = vsel %vm794, %v572, %v810
        %v827 = vsel %vm795, %v577, %v811
        %v828 = vsel %vm796, %v582, %v812
        %v829 = vsel %vm797, %v587, %v813
        %v830 = vsel %vm798, %v592, %v814
        %v831 = vsel %vm799, %v597, %v815
        %v832 = vsel %vm800, %v602, %v816
        %v833 = vsel %vm801, %v607, %v817
        %v834 = vsel %vm802, %v612, %v818
        %v835 = vsel %vm803, %v617, %v819
        %v836 = vld [vmem:[%s5] sm:$0x1]
        %v838 = vlaneseq
        %v839 = vshrl.u32 %v838, 7
        %v840 = vsub.s32 0, %v839
        %v841 = vrot.slane %v836, %v840
        %v843 = vmul.f32 %v820, %v841
        %v844 = vmul.f32 %v821, %v841
        %v845 = vmul.f32 %v822, %v841
        %v846 = vmul.f32 %v823, %v841
        %v847 = vmul.f32 %v824, %v841
        %v848 = vmul.f32 %v825, %v841
        %v849 = vmul.f32 %v826, %v841
        %v850 = vmul.f32 %v827, %v841
        %v851 = vmul.f32 %v828, %v841
        %v852 = vmul.f32 %v829, %v841
        %v853 = vmul.f32 %v830, %v841
        %v854 = vmul.f32 %v831, %v841
        %v855 = vmul.f32 %v832, %v841
        %v856 = vmul.f32 %v833, %v841
        %v857 = vmul.f32 %v834, %v841
        %v858 = vmul.f32 %v835, %v841
        %v859 = vld [vmem:[%s7] sm:$0x1]
        %v861 = vlaneseq
        %v862 = vshrl.u32 %v861, 7
        %v863 = vsub.s32 0, %v862
        %v864 = vrot.slane %v859, %v863
        %v866 = vadd.f32 %v843, %v864
        %v867 = vadd.f32 %v844, %v864
        %v868 = vadd.f32 %v845, %v864
        %v869 = vadd.f32 %v846, %v864
        %v870 = vadd.f32 %v847, %v864
        %v871 = vadd.f32 %v848, %v864
        %v872 = vadd.f32 %v849, %v864
        %v873 = vadd.f32 %v850, %v864
        %v874 = vadd.f32 %v851, %v864
        %v875 = vadd.f32 %v852, %v864
        %v876 = vadd.f32 %v853, %v864
        %v877 = vadd.f32 %v854, %v864
        %v878 = vadd.f32 %v855, %v864
        %v879 = vadd.f32 %v856, %v864
        %v880 = vadd.f32 %v857, %v864
        %v881 = vadd.f32 %v858, %v864
        %vm882 = vcmp.gt.f32.partialorder %v710, 0.0
        %vm883 = vcmp.gt.f32.partialorder %v715, 0.0
        %vm884 = vcmp.gt.f32.partialorder %v720, 0.0
        %vm885 = vcmp.gt.f32.partialorder %v725, 0.0
        %vm886 = vcmp.gt.f32.partialorder %v730, 0.0
        %vm887 = vcmp.gt.f32.partialorder %v735, 0.0
        %vm888 = vcmp.gt.f32.partialorder %v740, 0.0
        %vm889 = vcmp.gt.f32.partialorder %v745, 0.0
        %vm890 = vcmp.gt.f32.partialorder %v750, 0.0
        %vm891 = vcmp.gt.f32.partialorder %v755, 0.0
        %vm892 = vcmp.gt.f32.partialorder %v760, 0.0
        %vm893 = vcmp.gt.f32.partialorder %v765, 0.0
        %vm894 = vcmp.gt.f32.partialorder %v770, 0.0
        %vm895 = vcmp.gt.f32.partialorder %v775, 0.0
        %vm896 = vcmp.gt.f32.partialorder %v780, 0.0
        %vm897 = vcmp.gt.f32.partialorder %v785, 0.0
        %v898 = vmul.f32 %v710, 0.01
        %v899 = vmul.f32 %v715, 0.01
        %v900 = vmul.f32 %v720, 0.01
        %v901 = vmul.f32 %v725, 0.01
        %v902 = vmul.f32 %v730, 0.01
        %v903 = vmul.f32 %v735, 0.01
        %v904 = vmul.f32 %v740, 0.01
        %v905 = vmul.f32 %v745, 0.01
        %v906 = vmul.f32 %v750, 0.01
        %v907 = vmul.f32 %v755, 0.01
        %v908 = vmul.f32 %v760, 0.01
        %v909 = vmul.f32 %v765, 0.01
        %v910 = vmul.f32 %v770, 0.01
        %v911 = vmul.f32 %v775, 0.01
        %v912 = vmul.f32 %v780, 0.01
        %v913 = vmul.f32 %v785, 0.01
        %v914 = vsel %vm882, %v710, %v898
        %v915 = vsel %vm883, %v715, %v899
        %v916 = vsel %vm884, %v720, %v900
        %v917 = vsel %vm885, %v725, %v901
        %v918 = vsel %vm886, %v730, %v902
        %v919 = vsel %vm887, %v735, %v903
        %v920 = vsel %vm888, %v740, %v904
        %v921 = vsel %vm889, %v745, %v905
        %v922 = vsel %vm890, %v750, %v906
        %v923 = vsel %vm891, %v755, %v907
        %v924 = vsel %vm892, %v760, %v908
        %v925 = vsel %vm893, %v765, %v909
        %v926 = vsel %vm894, %v770, %v910
        %v927 = vsel %vm895, %v775, %v911
        %v928 = vsel %vm896, %v780, %v912
        %v929 = vsel %vm897, %v785, %v913
        %v930 = vld [vmem:[%s6] sm:$0x1]
        %v932 = vlaneseq
        %v933 = vshrl.u32 %v932, 7
        %v934 = vsub.s32 0, %v933
        %v935 = vrot.slane %v930, %v934
        %v937 = vmul.f32 %v914, %v935
        %v938 = vmul.f32 %v915, %v935
        %v939 = vmul.f32 %v916, %v935
        %v940 = vmul.f32 %v917, %v935
        %v941 = vmul.f32 %v918, %v935
        %v942 = vmul.f32 %v919, %v935
        %v943 = vmul.f32 %v920, %v935
        %v944 = vmul.f32 %v921, %v935
        %v945 = vmul.f32 %v922, %v935
        %v946 = vmul.f32 %v923, %v935
        %v947 = vmul.f32 %v924, %v935
        %v948 = vmul.f32 %v925, %v935
        %v949 = vmul.f32 %v926, %v935
        %v950 = vmul.f32 %v927, %v935
        %v951 = vmul.f32 %v928, %v935
        %v952 = vmul.f32 %v929, %v935
        %v953 = vld [vmem:[%s8] sm:$0x1]
        %v955 = vlaneseq
        %v956 = vshrl.u32 %v955, 7
        %v957 = vsub.s32 0, %v956
        %v958 = vrot.slane %v953, %v957
        %v960 = vadd.f32 %v937, %v958
        %v961 = vadd.f32 %v938, %v958
        %v962 = vadd.f32 %v939, %v958
        %v963 = vadd.f32 %v940, %v958
        %v964 = vadd.f32 %v941, %v958
        %v965 = vadd.f32 %v942, %v958
        %v966 = vadd.f32 %v943, %v958
        %v967 = vadd.f32 %v944, %v958
        %v968 = vadd.f32 %v945, %v958
        %v969 = vadd.f32 %v946, %v958
        %v970 = vadd.f32 %v947, %v958
        %v971 = vadd.f32 %v948, %v958
        %v972 = vadd.f32 %v949, %v958
        %v973 = vadd.f32 %v950, %v958
        %v974 = vadd.f32 %v951, %v958
        %v975 = vadd.f32 %v952, %v958
        %v976 = vxor.u32 %v960, 2147483648
        %v977 = vxor.u32 %v961, 2147483648
        %v978 = vxor.u32 %v962, 2147483648
        %v979 = vxor.u32 %v963, 2147483648
        %v980 = vxor.u32 %v964, 2147483648
        %v981 = vxor.u32 %v965, 2147483648
        %v982 = vxor.u32 %v966, 2147483648
        %v983 = vxor.u32 %v967, 2147483648
        %v984 = vxor.u32 %v968, 2147483648
        %v985 = vxor.u32 %v969, 2147483648
        %v986 = vxor.u32 %v970, 2147483648
        %v987 = vxor.u32 %v971, 2147483648
        %v988 = vxor.u32 %v972, 2147483648
        %v989 = vxor.u32 %v973, 2147483648
        %v990 = vxor.u32 %v974, 2147483648
        %v991 = vxor.u32 %v975, 2147483648
        %v992 = vmul.f32 %v976, 1.442695
        %v993 = vpow.pop %v992
        %v994 = vmul.f32 %v977, 1.442695
        %v995 = vpow.pop %v994
        %v996 = vmul.f32 %v978, 1.442695
        %v997 = vpow.pop %v996
        %v998 = vmul.f32 %v979, 1.442695
        %v999 = vpow.pop %v998
        %v1000 = vmul.f32 %v980, 1.442695
        %v1001 = vpow.pop %v1000
        %v1002 = vmul.f32 %v981, 1.442695
        %v1003 = vpow.pop %v1002
        %v1004 = vmul.f32 %v982, 1.442695
        %v1005 = vpow.pop %v1004
        %v1006 = vmul.f32 %v983, 1.442695
        %v1007 = vpow.pop %v1006
        %v1008 = vmul.f32 %v984, 1.442695
        %v1009 = vpow.pop %v1008
        %v1010 = vmul.f32 %v985, 1.442695
        %v1011 = vpow.pop %v1010
        %v1012 = vmul.f32 %v986, 1.442695
        %v1013 = vpow.pop %v1012
        %v1014 = vmul.f32 %v987, 1.442695
        %v1015 = vpow.pop %v1014
        %v1016 = vmul.f32 %v988, 1.442695
        %v1017 = vpow.pop %v1016
        %v1018 = vmul.f32 %v989, 1.442695
        %v1019 = vpow.pop %v1018
        %v1020 = vmul.f32 %v990, 1.442695
        %v1021 = vpow.pop %v1020
        %v1022 = vmul.f32 %v991, 1.442695
        %v1023 = vpow.pop %v1022
        %v1024 = vadd.f32 %v993, 1.0
        %v1025 = vadd.f32 %v995, 1.0
        %v1026 = vadd.f32 %v997, 1.0
        %v1027 = vadd.f32 %v999, 1.0
        %v1028 = vadd.f32 %v1001, 1.0
        %v1029 = vadd.f32 %v1003, 1.0
        %v1030 = vadd.f32 %v1005, 1.0
        %v1031 = vadd.f32 %v1007, 1.0
        %v1032 = vadd.f32 %v1009, 1.0
        %v1033 = vadd.f32 %v1011, 1.0
        %v1034 = vadd.f32 %v1013, 1.0
        %v1035 = vadd.f32 %v1015, 1.0
        %v1036 = vadd.f32 %v1017, 1.0
        %v1037 = vadd.f32 %v1019, 1.0
        %v1038 = vadd.f32 %v1021, 1.0
        %v1039 = vadd.f32 %v1023, 1.0
        %v1040 = vrcp.pop %v1024
        %v1041 = vmul.f32 1.0, %v1040
        %v1042 = vrcp.pop %v1025
        %v1043 = vmul.f32 1.0, %v1042
        %v1044 = vrcp.pop %v1026
        %v1045 = vmul.f32 1.0, %v1044
        %v1046 = vrcp.pop %v1027
        %v1047 = vmul.f32 1.0, %v1046
        %v1048 = vrcp.pop %v1028
        %v1049 = vmul.f32 1.0, %v1048
        %v1050 = vrcp.pop %v1029
        %v1051 = vmul.f32 1.0, %v1050
        %v1052 = vrcp.pop %v1030
        %v1053 = vmul.f32 1.0, %v1052
        %v1054 = vrcp.pop %v1031
        %v1055 = vmul.f32 1.0, %v1054
        %v1056 = vrcp.pop %v1032
        %v1057 = vmul.f32 1.0, %v1056
        %v1058 = vrcp.pop %v1033
        %v1059 = vmul.f32 1.0, %v1058
        %v1060 = vrcp.pop %v1034
        %v1061 = vmul.f32 1.0, %v1060
        %v1062 = vrcp.pop %v1035
        %v1063 = vmul.f32 1.0, %v1062
        %v1064 = vrcp.pop %v1036
        %v1065 = vmul.f32 1.0, %v1064
        %v1066 = vrcp.pop %v1037
        %v1067 = vmul.f32 1.0, %v1066
        %v1068 = vrcp.pop %v1038
        %v1069 = vmul.f32 1.0, %v1068
        %v1070 = vrcp.pop %v1039
        %v1071 = vmul.f32 1.0, %v1070
        %v1072 = vmul.f32 %v866, %v1041
        %v1073 = vmul.f32 %v867, %v1043
        %v1074 = vmul.f32 %v868, %v1045
        %v1075 = vmul.f32 %v869, %v1047
        %v1076 = vmul.f32 %v870, %v1049
        %v1077 = vmul.f32 %v871, %v1051
        %v1078 = vmul.f32 %v872, %v1053
        %v1079 = vmul.f32 %v873, %v1055
        %v1080 = vmul.f32 %v874, %v1057
        %v1081 = vmul.f32 %v875, %v1059
        %v1082 = vmul.f32 %v876, %v1061
        %v1083 = vmul.f32 %v877, %v1063
        %v1084 = vmul.f32 %v878, %v1065
        %v1085 = vmul.f32 %v879, %v1067
        %v1086 = vmul.f32 %v880, %v1069
        %v1087 = vmul.f32 %v881, %v1071
        %vm1088 = vcmp.gt.f32.partialorder %v1072, 0.0
        %vm1089 = vcmp.gt.f32.partialorder %v1073, 0.0
        %vm1090 = vcmp.gt.f32.partialorder %v1074, 0.0
        %vm1091 = vcmp.gt.f32.partialorder %v1075, 0.0
        %vm1092 = vcmp.gt.f32.partialorder %v1076, 0.0
        %vm1093 = vcmp.gt.f32.partialorder %v1077, 0.0
        %vm1094 = vcmp.gt.f32.partialorder %v1078, 0.0
        %vm1095 = vcmp.gt.f32.partialorder %v1079, 0.0
        %vm1096 = vcmp.gt.f32.partialorder %v1080, 0.0
        %vm1097 = vcmp.gt.f32.partialorder %v1081, 0.0
        %vm1098 = vcmp.gt.f32.partialorder %v1082, 0.0
        %vm1099 = vcmp.gt.f32.partialorder %v1083, 0.0
        %vm1100 = vcmp.gt.f32.partialorder %v1084, 0.0
        %vm1101 = vcmp.gt.f32.partialorder %v1085, 0.0
        %vm1102 = vcmp.gt.f32.partialorder %v1086, 0.0
        %vm1103 = vcmp.gt.f32.partialorder %v1087, 0.0
        %v1104 = vmul.f32 %v1072, 0.01
        %v1105 = vmul.f32 %v1073, 0.01
        %v1106 = vmul.f32 %v1074, 0.01
        %v1107 = vmul.f32 %v1075, 0.01
        %v1108 = vmul.f32 %v1076, 0.01
        %v1109 = vmul.f32 %v1077, 0.01
        %v1110 = vmul.f32 %v1078, 0.01
        %v1111 = vmul.f32 %v1079, 0.01
        %v1112 = vmul.f32 %v1080, 0.01
        %v1113 = vmul.f32 %v1081, 0.01
        %v1114 = vmul.f32 %v1082, 0.01
        %v1115 = vmul.f32 %v1083, 0.01
        %v1116 = vmul.f32 %v1084, 0.01
        %v1117 = vmul.f32 %v1085, 0.01
        %v1118 = vmul.f32 %v1086, 0.01
        %v1119 = vmul.f32 %v1087, 0.01
        %v1120 = vsel %vm1088, %v1072, %v1104
        %v1121 = vsel %vm1089, %v1073, %v1105
        %v1122 = vsel %vm1090, %v1074, %v1106
        %v1123 = vsel %vm1091, %v1075, %v1107
        %v1124 = vsel %vm1092, %v1076, %v1108
        %v1125 = vsel %vm1093, %v1077, %v1109
        %v1126 = vsel %vm1094, %v1078, %v1110
        %v1127 = vsel %vm1095, %v1079, %v1111
        %v1128 = vsel %vm1096, %v1080, %v1112
        %v1129 = vsel %vm1097, %v1081, %v1113
        %v1130 = vsel %vm1098, %v1082, %v1114
        %v1131 = vsel %vm1099, %v1083, %v1115
        %v1132 = vsel %vm1100, %v1084, %v1116
        %v1133 = vsel %vm1101, %v1085, %v1117
        %v1134 = vsel %vm1102, %v1086, %v1118
        %v1135 = vsel %vm1103, %v1087, %v1119
        %v1136 = vld [vmem:[%s9] sm:$0x1]
        %v1138 = vlaneseq
        %v1139 = vshrl.u32 %v1138, 7
        %v1140 = vsub.s32 0, %v1139
        %v1141 = vrot.slane %v1136, %v1140
        %v1143 = vmul.f32 %v1120, %v1141
        %v1144 = vmul.f32 %v1121, %v1141
        %v1145 = vmul.f32 %v1122, %v1141
        %v1146 = vmul.f32 %v1123, %v1141
        %v1147 = vmul.f32 %v1124, %v1141
        %v1148 = vmul.f32 %v1125, %v1141
        %v1149 = vmul.f32 %v1126, %v1141
        %v1150 = vmul.f32 %v1127, %v1141
        %v1151 = vmul.f32 %v1128, %v1141
        %v1152 = vmul.f32 %v1129, %v1141
        %v1153 = vmul.f32 %v1130, %v1141
        %v1154 = vmul.f32 %v1131, %v1141
        %v1155 = vmul.f32 %v1132, %v1141
        %v1156 = vmul.f32 %v1133, %v1141
        %v1157 = vmul.f32 %v1134, %v1141
        %v1158 = vmul.f32 %v1135, %v1141
        %v1159 = vld [vmem:[%s10] sm:$0x1]
        %v1161 = vlaneseq
        %v1162 = vshrl.u32 %v1161, 7
        %v1163 = vsub.s32 0, %v1162
        %v1164 = vrot.slane %v1159, %v1163
        %v1166 = vadd.f32 %v1143, %v1164
        %v1167 = vadd.f32 %v1144, %v1164
        %v1168 = vadd.f32 %v1145, %v1164
        %v1169 = vadd.f32 %v1146, %v1164
        %v1170 = vadd.f32 %v1147, %v1164
        %v1171 = vadd.f32 %v1148, %v1164
        %v1172 = vadd.f32 %v1149, %v1164
        %v1173 = vadd.f32 %v1150, %v1164
        %v1174 = vadd.f32 %v1151, %v1164
        %v1175 = vadd.f32 %v1152, %v1164
        %v1176 = vadd.f32 %v1153, %v1164
        %v1177 = vadd.f32 %v1154, %v1164
        %v1178 = vadd.f32 %v1155, %v1164
        %v1179 = vadd.f32 %v1156, %v1164
        %v1180 = vadd.f32 %v1157, %v1164
        %v1181 = vadd.f32 %v1158, %v1164
        %s1182 = scalar_lea.vmem [#allocation5], 128
        %v1183 = vld [vmem:[%s1182] sm:$0xff]
        %v1184 = vld [vmem:[%s1182 + $0x8] sm:$0xff]
        %v1185 = vld [vmem:[%s1182 + $0x10] sm:$0xff]
        %v1186 = vld [vmem:[%s1182 + $0x18] sm:$0xff]
        %v1187 = vld [vmem:[%s1182 + $0x20] sm:$0xff]
        %v1188 = vld [vmem:[%s1182 + $0x28] sm:$0xff]
        %v1189 = vld [vmem:[%s1182 + $0x30] sm:$0xff]
        %v1190 = vld [vmem:[%s1182 + $0x38] sm:$0xff]
        %v1191 = vld [vmem:[%s1182 + $0x40] sm:$0xff]
        %v1192 = vld [vmem:[%s1182 + $0x48] sm:$0xff]
        %v1193 = vld [vmem:[%s1182 + $0x50] sm:$0xff]
        %v1194 = vld [vmem:[%s1182 + $0x58] sm:$0xff]
        %v1195 = vld [vmem:[%s1182 + $0x60] sm:$0xff]
        %v1196 = vld [vmem:[%s1182 + $0x68] sm:$0xff]
        %v1197 = vld [vmem:[%s1182 + $0x70] sm:$0xff]
        %v1198 = vld [vmem:[%s1182 + $0x78] sm:$0xff]
        %s1199 = scalar_lea.vmem %s3, 1
        %v1200 = vld [vmem:[%s1199] sm:$0x1]
        %v1202 = vlaneseq
        %v1203 = vshrl.u32 %v1202, 7
        %v1204 = vsub.s32 0, %v1203
        %v1205 = vrot.slane %v1200, %v1204
        %1207 = vmatprep.subr.mxu0 0.0
        %1208 = vmatpush1.msra.mxu0 %v1183
        %1209 = vmatprep.subr.mxu0 0.0
        %1210 = vmatpush1.msra.mxu0 %v1184
        %1211 = vmatprep.subr.mxu0 0.0
        %1212 = vmatpush1.msra.mxu0 %v1185
        %1213 = vmatprep.subr.mxu0 0.0
        %1214 = vmatpush1.msra.mxu0 %v1186
        %1215 = vmatprep.subr.mxu0 0.0
        %1216 = vmatpush1.msra.mxu0 %v1187
        %1217 = vmatprep.subr.mxu0 0.0
        %1218 = vmatpush1.msra.mxu0 %v1188
        %1219 = vmatprep.subr.mxu0 0.0
        %1220 = vmatpush1.msra.mxu0 %v1189
        %1221 = vmatprep.subr.mxu0 0.0
        %1222 = vmatpush1.msra.mxu0 %v1190
        %1223 = vmatprep.subr.mxu0 0.0
        %1224 = vmatpush1.msra.mxu0 %v1191
        %1225 = vmatprep.subr.mxu0 0.0
        %1226 = vmatpush1.msra.mxu0 %v1192
        %1227 = vmatprep.subr.mxu0 0.0
        %1228 = vmatpush1.msra.mxu0 %v1193
        %1229 = vmatprep.subr.mxu0 0.0
        %1230 = vmatpush1.msra.mxu0 %v1194
        %1231 = vmatprep.subr.mxu0 0.0
        %1232 = vmatpush1.msra.mxu0 %v1195
        %1233 = vmatprep.subr.mxu0 0.0
        %1234 = vmatpush1.msra.mxu0 %v1196
        %1235 = vmatprep.subr.mxu0 0.0
        %1236 = vmatpush1.msra.mxu0 %v1197
        %1237 = vmatprep.subr.mxu0 0.0
        %1238 = vmatpush1.msra.mxu0 %v1198
        %1239 = vmatprep.subr.mxu0 0.0
        %1240 = vmatpush1.msra.mxu0 0.0
        %1241 = vmatprep.subr.mxu0 0.0
        %1242 = vmatpush1.msra.mxu0 0.0
        %1243 = vmatprep.subr.mxu0 0.0
        %1244 = vmatpush1.msra.mxu0 0.0
        %1245 = vmatprep.subr.mxu0 0.0
        %1246 = vmatpush1.msra.mxu0 0.0
        %1247 = vmatprep.subr.mxu0 0.0
        %1248 = vmatpush1.msra.mxu0 0.0
        %1249 = vmatprep.subr.mxu0 0.0
        %1250 = vmatpush1.msra.mxu0 0.0
        %1251 = vmatprep.subr.mxu0 0.0
        %1252 = vmatpush1.msra.mxu0 0.0
        %1253 = vmatprep.subr.mxu0 0.0
        %1254 = vmatpush1.msra.mxu0 0.0
        %1255 = vmatprep.subr.mxu0 0.0
        %1256 = vmatpush1.msra.mxu0 0.0
        %1257 = vmatprep.subr.mxu0 0.0
        %1258 = vmatpush1.msra.mxu0 0.0
        %1259 = vmatprep.subr.mxu0 0.0
        %1260 = vmatpush1.msra.mxu0 0.0
        %1261 = vmatprep.subr.mxu0 0.0
        %1262 = vmatpush1.msra.mxu0 0.0
        %1263 = vmatprep.subr.mxu0 0.0
        %1264 = vmatpush1.msra.mxu0 0.0
        %1265 = vmatprep.subr.mxu0 0.0
        %1266 = vmatpush1.msra.mxu0 0.0
        %1267 = vmatprep.subr.mxu0 0.0
        %1268 = vmatpush1.msra.mxu0 0.0
        %1269 = vmatprep.subr.mxu0 0.0
        %1270 = vmatpush1.msra.mxu0 0.0
        %1271 = vmatprep.mubr.f32.mxu0 0.0
        %1272 = vmatmul.mubr.f32.gmra.mrb[0].mxu0 %v1166
        %v1273 = vpop.f32.mrb[0].mxu0
        %v1274 = vadd.f32 %v1205, %v1273
        %v1275 = vpop.f32.mrb[0].mxu0
        %1276 = vmatprep.mubr.f32.mxu0 0.0
        %1277 = vmatmul.mubr.f32.gmra.mrb[0].mxu0 %v1167
        %v1278 = vpop.f32.mrb[0].mxu0
        %v1279 = vadd.f32 %v1205, %v1278
        %v1280 = vpop.f32.mrb[0].mxu0
        %1281 = vmatprep.mubr.f32.mxu0 0.0
        %1282 = vmatmul.mubr.f32.gmra.mrb[0].mxu0 %v1168
        %v1283 = vpop.f32.mrb[0].mxu0
        %v1284 = vadd.f32 %v1205, %v1283
        %v1285 = vpop.f32.mrb[0].mxu0
        %1286 = vmatprep.mubr.f32.mxu0 0.0
        %1287 = vmatmul.mubr.f32.gmra.mrb[0].mxu0 %v1169
        %v1288 = vpop.f32.mrb[0].mxu0
        %v1289 = vadd.f32 %v1205, %v1288
        %v1290 = vpop.f32.mrb[0].mxu0
        %1291 = vmatprep.mubr.f32.mxu0 0.0
        %1292 = vmatmul.mubr.f32.gmra.mrb[0].mxu0 %v1170
        %v1293 = vpop.f32.mrb[0].mxu0
        %v1294 = vadd.f32 %v1205, %v1293
        %v1295 = vpop.f32.mrb[0].mxu0
        %1296 = vmatprep.mubr.f32.mxu0 0.0
        %1297 = vmatmul.mubr.f32.gmra.mrb[0].mxu0 %v1171
        %v1298 = vpop.f32.mrb[0].mxu0
        %v1299 = vadd.f32 %v1205, %v1298
        %v1300 = vpop.f32.mrb[0].mxu0
        %1301 = vmatprep.mubr.f32.mxu0 0.0
        %1302 = vmatmul.mubr.f32.gmra.mrb[0].mxu0 %v1172
        %v1303 = vpop.f32.mrb[0].mxu0
        %v1304 = vadd.f32 %v1205, %v1303
        %v1305 = vpop.f32.mrb[0].mxu0
        %1306 = vmatprep.mubr.f32.mxu0 0.0
        %1307 = vmatmul.mubr.f32.gmra.mrb[0].mxu0 %v1173
        %v1308 = vpop.f32.mrb[0].mxu0
        %v1309 = vadd.f32 %v1205, %v1308
        %v1310 = vpop.f32.mrb[0].mxu0
        %1311 = vmatprep.mubr.f32.mxu0 0.0
        %1312 = vmatmul.mubr.f32.gmra.mrb[0].mxu0 %v1174
        %v1313 = vpop.f32.mrb[0].mxu0
        %v1314 = vadd.f32 %v1205, %v1313
        %v1315 = vpop.f32.mrb[0].mxu0
        %1316 = vmatprep.mubr.f32.mxu0 0.0
        %1317 = vmatmul.mubr.f32.gmra.mrb[0].mxu0 %v1175
        %v1318 = vpop.f32.mrb[0].mxu0
        %v1319 = vadd.f32 %v1205, %v1318
        %v1320 = vpop.f32.mrb[0].mxu0
        %1321 = vmatprep.mubr.f32.mxu0 0.0
        %1322 = vmatmul.mubr.f32.gmra.mrb[0].mxu0 %v1176
        %v1323 = vpop.f32.mrb[0].mxu0
        %v1324 = vadd.f32 %v1205, %v1323
        %v1325 = vpop.f32.mrb[0].mxu0
        %1326 = vmatprep.mubr.f32.mxu0 0.0
        %1327 = vmatmul.mubr.f32.gmra.mrb[0].mxu0 %v1177
        %v1328 = vpop.f32.mrb[0].mxu0
        %v1329 = vadd.f32 %v1205, %v1328
        %v1330 = vpop.f32.mrb[0].mxu0
        %1331 = vmatprep.mubr.f32.mxu0 0.0
        %1332 = vmatmul.mubr.f32.gmra.mrb[0].mxu0 %v1178
        %v1333 = vpop.f32.mrb[0].mxu0
        %v1334 = vadd.f32 %v1205, %v1333
        %v1335 = vpop.f32.mrb[0].mxu0
        %1336 = vmatprep.mubr.f32.mxu0 0.0
        %1337 = vmatmul.mubr.f32.gmra.mrb[0].mxu0 %v1179
        %v1338 = vpop.f32.mrb[0].mxu0
        %v1339 = vadd.f32 %v1205, %v1338
        %v1340 = vpop.f32.mrb[0].mxu0
        %1341 = vmatprep.mubr.f32.mxu0 0.0
        %1342 = vmatmul.mubr.f32.gmra.mrb[0].mxu0 %v1180
        %v1343 = vpop.f32.mrb[0].mxu0
        %v1344 = vadd.f32 %v1205, %v1343
        %v1345 = vpop.f32.mrb[0].mxu0
        %1346 = vmatprep.mubr.f32.mxu0 0.0
        %1347 = vmatmul.mubr.f32.gmra.mrb[0].mxu0 %v1181
        %v1348 = vpop.f32.mrb[0].mxu0
        %v1349 = vadd.f32 %v1205, %v1348
        %v1350 = vpop.f32.mrb[0].mxu0
        %1351 = vdwg.mxu0
        %s1352 = scalar_lea.vmem [#allocation7], 128
        %v1353 = vld [vmem:[%s1352] sm:$0xff]
        %v1354 = vld [vmem:[%s1352 + $0x8] sm:$0xff]
        %v1355 = vld [vmem:[%s1352 + $0x10] sm:$0xff]
        %v1356 = vld [vmem:[%s1352 + $0x18] sm:$0xff]
        %v1357 = vld [vmem:[%s1352 + $0x20] sm:$0xff]
        %v1358 = vld [vmem:[%s1352 + $0x28] sm:$0xff]
        %v1359 = vld [vmem:[%s1352 + $0x30] sm:$0xff]
        %v1360 = vld [vmem:[%s1352 + $0x38] sm:$0xff]
        %v1361 = vld [vmem:[%s1352 + $0x40] sm:$0xff]
        %v1362 = vld [vmem:[%s1352 + $0x48] sm:$0xff]
        %v1363 = vld [vmem:[%s1352 + $0x50] sm:$0xff]
        %v1364 = vld [vmem:[%s1352 + $0x58] sm:$0xff]
        %v1365 = vld [vmem:[%s1352 + $0x60] sm:$0xff]
        %v1366 = vld [vmem:[%s1352 + $0x68] sm:$0xff]
        %v1367 = vld [vmem:[%s1352 + $0x70] sm:$0xff]
        %v1368 = vld [vmem:[%s1352 + $0x78] sm:$0xff]
        %s1369 = scalar_lea.vmem %s4, 1
        %v1370 = vld [vmem:[%s1369] sm:$0x1]
        %v1372 = vlaneseq
        %v1373 = vshrl.u32 %v1372, 7
        %v1374 = vsub.s32 0, %v1373
        %v1375 = vrot.slane %v1370, %v1374
        %1377 = vmatprep.subr.mxu0 0.0
        %1378 = vmatpush1.msra.mxu0 %v1353
        %1379 = vmatprep.subr.mxu0 0.0
        %1380 = vmatpush1.msra.mxu0 %v1354
        %1381 = vmatprep.subr.mxu0 0.0
        %1382 = vmatpush1.msra.mxu0 %v1355
        %1383 = vmatprep.subr.mxu0 0.0
        %1384 = vmatpush1.msra.mxu0 %v1356
        %1385 = vmatprep.subr.mxu0 0.0
        %1386 = vmatpush1.msra.mxu0 %v1357
        %1387 = vmatprep.subr.mxu0 0.0
        %1388 = vmatpush1.msra.mxu0 %v1358
        %1389 = vmatprep.subr.mxu0 0.0
        %1390 = vmatpush1.msra.mxu0 %v1359
        %1391 = vmatprep.subr.mxu0 0.0
        %1392 = vmatpush1.msra.mxu0 %v1360
        %1393 = vmatprep.subr.mxu0 0.0
        %1394 = vmatpush1.msra.mxu0 %v1361
        %1395 = vmatprep.subr.mxu0 0.0
        %1396 = vmatpush1.msra.mxu0 %v1362
        %1397 = vmatprep.subr.mxu0 0.0
        %1398 = vmatpush1.msra.mxu0 %v1363
        %1399 = vmatprep.subr.mxu0 0.0
        %1400 = vmatpush1.msra.mxu0 %v1364
        %1401 = vmatprep.subr.mxu0 0.0
        %1402 = vmatpush1.msra.mxu0 %v1365
        %1403 = vmatprep.subr.mxu0 0.0
        %1404 = vmatpush1.msra.mxu0 %v1366
        %1405 = vmatprep.subr.mxu0 0.0
        %1406 = vmatpush1.msra.mxu0 %v1367
        %1407 = vmatprep.subr.mxu0 0.0
        %1408 = vmatpush1.msra.mxu0 %v1368
        %1409 = vmatprep.subr.mxu0 0.0
        %1410 = vmatpush1.msra.mxu0 0.0
        %1411 = vmatprep.subr.mxu0 0.0
        %1412 = vmatpush1.msra.mxu0 0.0
        %1413 = vmatprep.subr.mxu0 0.0
        %1414 = vmatpush1.msra.mxu0 0.0
        %1415 = vmatprep.subr.mxu0 0.0
        %1416 = vmatpush1.msra.mxu0 0.0
        %1417 = vmatprep.subr.mxu0 0.0
        %1418 = vmatpush1.msra.mxu0 0.0
        %1419 = vmatprep.subr.mxu0 0.0
        %1420 = vmatpush1.msra.mxu0 0.0
        %1421 = vmatprep.subr.mxu0 0.0
        %1422 = vmatpush1.msra.mxu0 0.0
        %1423 = vmatprep.subr.mxu0 0.0
        %1424 = vmatpush1.msra.mxu0 0.0
        %1425 = vmatprep.subr.mxu0 0.0
        %1426 = vmatpush1.msra.mxu0 0.0
        %1427 = vmatprep.subr.mxu0 0.0
        %1428 = vmatpush1.msra.mxu0 0.0
        %1429 = vmatprep.subr.mxu0 0.0
        %1430 = vmatpush1.msra.mxu0 0.0
        %1431 = vmatprep.subr.mxu0 0.0
        %1432 = vmatpush1.msra.mxu0 0.0
        %1433 = vmatprep.subr.mxu0 0.0
        %1434 = vmatpush1.msra.mxu0 0.0
        %1435 = vmatprep.subr.mxu0 0.0
        %1436 = vmatpush1.msra.mxu0 0.0
        %1437 = vmatprep.subr.mxu0 0.0
        %1438 = vmatpush1.msra.mxu0 0.0
        %1439 = vmatprep.subr.mxu0 0.0
        %1440 = vmatpush1.msra.mxu0 0.0
        %1441 = vmatprep.mubr.f32.mxu0 0.0
        %1442 = vmatmul.mubr.f32.gmra.mrb[0].mxu0 %v1166
        %v1443 = vpop.f32.mrb[0].mxu0
        %v1444 = vadd.f32 %v1375, %v1443
        %v1445 = vpop.f32.mrb[0].mxu0
        %1446 = vmatprep.mubr.f32.mxu0 0.0
        %1447 = vmatmul.mubr.f32.gmra.mrb[0].mxu0 %v1167
        %v1448 = vpop.f32.mrb[0].mxu0
        %v1449 = vadd.f32 %v1375, %v1448
        %v1450 = vpop.f32.mrb[0].mxu0
        %1451 = vmatprep.mubr.f32.mxu0 0.0
        %1452 = vmatmul.mubr.f32.gmra.mrb[0].mxu0 %v1168
        %v1453 = vpop.f32.mrb[0].mxu0
        %v1454 = vadd.f32 %v1375, %v1453
        %v1455 = vpop.f32.mrb[0].mxu0
        %1456 = vmatprep.mubr.f32.mxu0 0.0
        %1457 = vmatmul.mubr.f32.gmra.mrb[0].mxu0 %v1169
        %v1458 = vpop.f32.mrb[0].mxu0
        %v1459 = vadd.f32 %v1375, %v1458
        %v1460 = vpop.f32.mrb[0].mxu0
        %1461 = vmatprep.mubr.f32.mxu0 0.0
        %1462 = vmatmul.mubr.f32.gmra.mrb[0].mxu0 %v1170
        %v1463 = vpop.f32.mrb[0].mxu0
        %v1464 = vadd.f32 %v1375, %v1463
        %v1465 = vpop.f32.mrb[0].mxu0
        %1466 = vmatprep.mubr.f32.mxu0 0.0
        %1467 = vmatmul.mubr.f32.gmra.mrb[0].mxu0 %v1171
        %v1468 = vpop.f32.mrb[0].mxu0
        %v1469 = vadd.f32 %v1375, %v1468
        %v1470 = vpop.f32.mrb[0].mxu0
        %1471 = vmatprep.mubr.f32.mxu0 0.0
        %1472 = vmatmul.mubr.f32.gmra.mrb[0].mxu0 %v1172
        %v1473 = vpop.f32.mrb[0].mxu0
        %v1474 = vadd.f32 %v1375, %v1473
        %v1475 = vpop.f32.mrb[0].mxu0
        %1476 = vmatprep.mubr.f32.mxu0 0.0
        %1477 = vmatmul.mubr.f32.gmra.mrb[0].mxu0 %v1173
        %v1478 = vpop.f32.mrb[0].mxu0
        %v1479 = vadd.f32 %v1375, %v1478
        %v1480 = vpop.f32.mrb[0].mxu0
        %1481 = vmatprep.mubr.f32.mxu0 0.0
        %1482 = vmatmul.mubr.f32.gmra.mrb[0].mxu0 %v1174
        %v1483 = vpop.f32.mrb[0].mxu0
        %v1484 = vadd.f32 %v1375, %v1483
        %v1485 = vpop.f32.mrb[0].mxu0
        %1486 = vmatprep.mubr.f32.mxu0 0.0
        %1487 = vmatmul.mubr.f32.gmra.mrb[0].mxu0 %v1175
        %v1488 = vpop.f32.mrb[0].mxu0
        %v1489 = vadd.f32 %v1375, %v1488
        %v1490 = vpop.f32.mrb[0].mxu0
        %1491 = vmatprep.mubr.f32.mxu0 0.0
        %1492 = vmatmul.mubr.f32.gmra.mrb[0].mxu0 %v1176
        %v1493 = vpop.f32.mrb[0].mxu0
        %v1494 = vadd.f32 %v1375, %v1493
        %v1495 = vpop.f32.mrb[0].mxu0
        %1496 = vmatprep.mubr.f32.mxu0 0.0
        %1497 = vmatmul.mubr.f32.gmra.mrb[0].mxu0 %v1177
        %v1498 = vpop.f32.mrb[0].mxu0
        %v1499 = vadd.f32 %v1375, %v1498
        %v1500 = vpop.f32.mrb[0].mxu0
        %1501 = vmatprep.mubr.f32.mxu0 0.0
        %1502 = vmatmul.mubr.f32.gmra.mrb[0].mxu0 %v1178
        %v1503 = vpop.f32.mrb[0].mxu0
        %v1504 = vadd.f32 %v1375, %v1503
        %v1505 = vpop.f32.mrb[0].mxu0
        %1506 = vmatprep.mubr.f32.mxu0 0.0
        %1507 = vmatmul.mubr.f32.gmra.mrb[0].mxu0 %v1179
        %v1508 = vpop.f32.mrb[0].mxu0
        %v1509 = vadd.f32 %v1375, %v1508
        %v1510 = vpop.f32.mrb[0].mxu0
        %1511 = vmatprep.mubr.f32.mxu0 0.0
        %1512 = vmatmul.mubr.f32.gmra.mrb[0].mxu0 %v1180
        %v1513 = vpop.f32.mrb[0].mxu0
        %v1514 = vadd.f32 %v1375, %v1513
        %v1515 = vpop.f32.mrb[0].mxu0
        %1516 = vmatprep.mubr.f32.mxu0 0.0
        %1517 = vmatmul.mubr.f32.gmra.mrb[0].mxu0 %v1181
        %v1518 = vpop.f32.mrb[0].mxu0
        %v1519 = vadd.f32 %v1375, %v1518
        %v1520 = vpop.f32.mrb[0].mxu0
        %1521 = vdwg.mxu0
        %vm1522 = vcmp.gt.f32.partialorder %v1274, 0.0
        %vm1523 = vcmp.gt.f32.partialorder %v1279, 0.0
        %vm1524 = vcmp.gt.f32.partialorder %v1284, 0.0
        %vm1525 = vcmp.gt.f32.partialorder %v1289, 0.0
        %vm1526 = vcmp.gt.f32.partialorder %v1294, 0.0
        %vm1527 = vcmp.gt.f32.partialorder %v1299, 0.0
        %vm1528 = vcmp.gt.f32.partialorder %v1304, 0.0
        %vm1529 = vcmp.gt.f32.partialorder %v1309, 0.0
        %vm1530 = vcmp.gt.f32.partialorder %v1314, 0.0
        %vm1531 = vcmp.gt.f32.partialorder %v1319, 0.0
        %vm1532 = vcmp.gt.f32.partialorder %v1324, 0.0
        %vm1533 = vcmp.gt.f32.partialorder %v1329, 0.0
        %vm1534 = vcmp.gt.f32.partialorder %v1334, 0.0
        %vm1535 = vcmp.gt.f32.partialorder %v1339, 0.0
        %vm1536 = vcmp.gt.f32.partialorder %v1344, 0.0
        %vm1537 = vcmp.gt.f32.partialorder %v1349, 0.0
        %v1538 = vmul.f32 %v1274, 0.01
        %v1539 = vmul.f32 %v1279, 0.01
        %v1540 = vmul.f32 %v1284, 0.01
        %v1541 = vmul.f32 %v1289, 0.01
        %v1542 = vmul.f32 %v1294, 0.01
        %v1543 = vmul.f32 %v1299, 0.01
        %v1544 = vmul.f32 %v1304, 0.01
        %v1545 = vmul.f32 %v1309, 0.01
        %v1546 = vmul.f32 %v1314, 0.01
        %v1547 = vmul.f32 %v1319, 0.01
        %v1548 = vmul.f32 %v1324, 0.01
        %v1549 = vmul.f32 %v1329, 0.01
        %v1550 = vmul.f32 %v1334, 0.01
        %v1551 = vmul.f32 %v1339, 0.01
        %v1552 = vmul.f32 %v1344, 0.01
        %v1553 = vmul.f32 %v1349, 0.01
        %v1554 = vsel %vm1522, %v1274, %v1538
        %v1555 = vsel %vm1523, %v1279, %v1539
        %v1556 = vsel %vm1524, %v1284, %v1540
        %v1557 = vsel %vm1525, %v1289, %v1541
        %v1558 = vsel %vm1526, %v1294, %v1542
        %v1559 = vsel %vm1527, %v1299, %v1543
        %v1560 = vsel %vm1528, %v1304, %v1544
        %v1561 = vsel %vm1529, %v1309, %v1545
        %v1562 = vsel %vm1530, %v1314, %v1546
        %v1563 = vsel %vm1531, %v1319, %v1547
        %v1564 = vsel %vm1532, %v1324, %v1548
        %v1565 = vsel %vm1533, %v1329, %v1549
        %v1566 = vsel %vm1534, %v1334, %v1550
        %v1567 = vsel %vm1535, %v1339, %v1551
        %v1568 = vsel %vm1536, %v1344, %v1552
        %v1569 = vsel %vm1537, %v1349, %v1553
        %s1570 = scalar_lea.vmem %s5, 1
        %v1571 = vld [vmem:[%s1570] sm:$0x1]
        %v1573 = vlaneseq
        %v1574 = vshrl.u32 %v1573, 7
        %v1575 = vsub.s32 0, %v1574
        %v1576 = vrot.slane %v1571, %v1575
        %v1578 = vmul.f32 %v1554, %v1576
        %v1579 = vmul.f32 %v1555, %v1576
        %v1580 = vmul.f32 %v1556, %v1576
        %v1581 = vmul.f32 %v1557, %v1576
        %v1582 = vmul.f32 %v1558, %v1576
        %v1583 = vmul.f32 %v1559, %v1576
        %v1584 = vmul.f32 %v1560, %v1576
        %v1585 = vmul.f32 %v1561, %v1576
        %v1586 = vmul.f32 %v1562, %v1576
        %v1587 = vmul.f32 %v1563, %v1576
        %v1588 = vmul.f32 %v1564, %v1576
        %v1589 = vmul.f32 %v1565, %v1576
        %v1590 = vmul.f32 %v1566, %v1576
        %v1591 = vmul.f32 %v1567, %v1576
        %v1592 = vmul.f32 %v1568, %v1576
        %v1593 = vmul.f32 %v1569, %v1576
        %s1594 = scalar_lea.vmem %s7, 1
        %v1595 = vld [vmem:[%s1594] sm:$0x1]
        %v1597 = vlaneseq
        %v1598 = vshrl.u32 %v1597, 7
        %v1599 = vsub.s32 0, %v1598
        %v1600 = vrot.slane %v1595, %v1599
        %v1602 = vadd.f32 %v1578, %v1600
        %v1603 = vadd.f32 %v1579, %v1600
        %v1604 = vadd.f32 %v1580, %v1600
        %v1605 = vadd.f32 %v1581, %v1600
        %v1606 = vadd.f32 %v1582, %v1600
        %v1607 = vadd.f32 %v1583, %v1600
        %v1608 = vadd.f32 %v1584, %v1600
        %v1609 = vadd.f32 %v1585, %v1600
        %v1610 = vadd.f32 %v1586, %v1600
        %v1611 = vadd.f32 %v1587, %v1600
        %v1612 = vadd.f32 %v1588, %v1600
        %v1613 = vadd.f32 %v1589, %v1600
        %v1614 = vadd.f32 %v1590, %v1600
        %v1615 = vadd.f32 %v1591, %v1600
        %v1616 = vadd.f32 %v1592, %v1600
        %v1617 = vadd.f32 %v1593, %v1600
        %vm1618 = vcmp.gt.f32.partialorder %v1444, 0.0
        %vm1619 = vcmp.gt.f32.partialorder %v1449, 0.0
        %vm1620 = vcmp.gt.f32.partialorder %v1454, 0.0
        %vm1621 = vcmp.gt.f32.partialorder %v1459, 0.0
        %vm1622 = vcmp.gt.f32.partialorder %v1464, 0.0
        %vm1623 = vcmp.gt.f32.partialorder %v1469, 0.0
        %vm1624 = vcmp.gt.f32.partialorder %v1474, 0.0
        %vm1625 = vcmp.gt.f32.partialorder %v1479, 0.0
        %vm1626 = vcmp.gt.f32.partialorder %v1484, 0.0
        %vm1627 = vcmp.gt.f32.partialorder %v1489, 0.0
        %vm1628 = vcmp.gt.f32.partialorder %v1494, 0.0
        %vm1629 = vcmp.gt.f32.partialorder %v1499, 0.0
        %vm1630 = vcmp.gt.f32.partialorder %v1504, 0.0
        %vm1631 = vcmp.gt.f32.partialorder %v1509, 0.0
        %vm1632 = vcmp.gt.f32.partialorder %v1514, 0.0
        %vm1633 = vcmp.gt.f32.partialorder %v1519, 0.0
        %v1634 = vmul.f32 %v1444, 0.01
        %v1635 = vmul.f32 %v1449, 0.01
        %v1636 = vmul.f32 %v1454, 0.01
        %v1637 = vmul.f32 %v1459, 0.01
        %v1638 = vmul.f32 %v1464, 0.01
        %v1639 = vmul.f32 %v1469, 0.01
        %v1640 = vmul.f32 %v1474, 0.01
        %v1641 = vmul.f32 %v1479, 0.01
        %v1642 = vmul.f32 %v1484, 0.01
        %v1643 = vmul.f32 %v1489, 0.01
        %v1644 = vmul.f32 %v1494, 0.01
        %v1645 = vmul.f32 %v1499, 0.01
        %v1646 = vmul.f32 %v1504, 0.01
        %v1647 = vmul.f32 %v1509, 0.01
        %v1648 = vmul.f32 %v1514, 0.01
        %v1649 = vmul.f32 %v1519, 0.01
        %v1650 = vsel %vm1618, %v1444, %v1634
        %v1651 = vsel %vm1619, %v1449, %v1635
        %v1652 = vsel %vm1620, %v1454, %v1636
        %v1653 = vsel %vm1621, %v1459, %v1637
        %v1654 = vsel %vm1622, %v1464, %v1638
        %v1655 = vsel %vm1623, %v1469, %v1639
        %v1656 = vsel %vm1624, %v1474, %v1640
        %v1657 = vsel %vm1625, %v1479, %v1641
        %v1658 = vsel %vm1626, %v1484, %v1642
        %v1659 = vsel %vm1627, %v1489, %v1643
        %v1660 = vsel %vm1628, %v1494, %v1644
        %v1661 = vsel %vm1629, %v1499, %v1645
        %v1662 = vsel %vm1630, %v1504, %v1646
        %v1663 = vsel %vm1631, %v1509, %v1647
        %v1664 = vsel %vm1632, %v1514, %v1648
        %v1665 = vsel %vm1633, %v1519, %v1649
        %s1666 = scalar_lea.vmem %s6, 1
        %v1667 = vld [vmem:[%s1666] sm:$0x1]
        %v1669 = vlaneseq
        %v1670 = vshrl.u32 %v1669, 7
        %v1671 = vsub.s32 0, %v1670
        %v1672 = vrot.slane %v1667, %v1671
        %v1674 = vmul.f32 %v1650, %v1672
        %v1675 = vmul.f32 %v1651, %v1672
        %v1676 = vmul.f32 %v1652, %v1672
        %v1677 = vmul.f32 %v1653, %v1672
        %v1678 = vmul.f32 %v1654, %v1672
        %v1679 = vmul.f32 %v1655, %v1672
        %v1680 = vmul.f32 %v1656, %v1672
        %v1681 = vmul.f32 %v1657, %v1672
        %v1682 = vmul.f32 %v1658, %v1672
        %v1683 = vmul.f32 %v1659, %v1672
        %v1684 = vmul.f32 %v1660, %v1672
        %v1685 = vmul.f32 %v1661, %v1672
        %v1686 = vmul.f32 %v1662, %v1672
        %v1687 = vmul.f32 %v1663, %v1672
        %v1688 = vmul.f32 %v1664, %v1672
        %v1689 = vmul.f32 %v1665, %v1672
        %s1690 = scalar_lea.vmem %s8, 1
        %v1691 = vld [vmem:[%s1690] sm:$0x1]
        %v1693 = vlaneseq
        %v1694 = vshrl.u32 %v1693, 7
        %v1695 = vsub.s32 0, %v1694
        %v1696 = vrot.slane %v1691, %v1695
        %v1698 = vadd.f32 %v1674, %v1696
        %v1699 = vadd.f32 %v1675, %v1696
        %v1700 = vadd.f32 %v1676, %v1696
        %v1701 = vadd.f32 %v1677, %v1696
        %v1702 = vadd.f32 %v1678, %v1696
        %v1703 = vadd.f32 %v1679, %v1696
        %v1704 = vadd.f32 %v1680, %v1696
        %v1705 = vadd.f32 %v1681, %v1696
        %v1706 = vadd.f32 %v1682, %v1696
        %v1707 = vadd.f32 %v1683, %v1696
        %v1708 = vadd.f32 %v1684, %v1696
        %v1709 = vadd.f32 %v1685, %v1696
        %v1710 = vadd.f32 %v1686, %v1696
        %v1711 = vadd.f32 %v1687, %v1696
        %v1712 = vadd.f32 %v1688, %v1696
        %v1713 = vadd.f32 %v1689, %v1696
        %v1714 = vxor.u32 %v1698, 2147483648
        %v1715 = vxor.u32 %v1699, 2147483648
        %v1716 = vxor.u32 %v1700, 2147483648
        %v1717 = vxor.u32 %v1701, 2147483648
        %v1718 = vxor.u32 %v1702, 2147483648
        %v1719 = vxor.u32 %v1703, 2147483648
        %v1720 = vxor.u32 %v1704, 2147483648
        %v1721 = vxor.u32 %v1705, 2147483648
        %v1722 = vxor.u32 %v1706, 2147483648
        %v1723 = vxor.u32 %v1707, 2147483648
        %v1724 = vxor.u32 %v1708, 2147483648
        %v1725 = vxor.u32 %v1709, 2147483648
        %v1726 = vxor.u32 %v1710, 2147483648
        %v1727 = vxor.u32 %v1711, 2147483648
        %v1728 = vxor.u32 %v1712, 2147483648
        %v1729 = vxor.u32 %v1713, 2147483648
        %v1730 = vmul.f32 %v1714, 1.442695
        %v1731 = vpow.pop %v1730
        %v1732 = vmul.f32 %v1715, 1.442695
        %v1733 = vpow.pop %v1732
        %v1734 = vmul.f32 %v1716, 1.442695
        %v1735 = vpow.pop %v1734
        %v1736 = vmul.f32 %v1717, 1.442695
        %v1737 = vpow.pop %v1736
        %v1738 = vmul.f32 %v1718, 1.442695
        %v1739 = vpow.pop %v1738
        %v1740 = vmul.f32 %v1719, 1.442695
        %v1741 = vpow.pop %v1740
        %v1742 = vmul.f32 %v1720, 1.442695
        %v1743 = vpow.pop %v1742
        %v1744 = vmul.f32 %v1721, 1.442695
        %v1745 = vpow.pop %v1744
        %v1746 = vmul.f32 %v1722, 1.442695
        %v1747 = vpow.pop %v1746
        %v1748 = vmul.f32 %v1723, 1.442695
        %v1749 = vpow.pop %v1748
        %v1750 = vmul.f32 %v1724, 1.442695
        %v1751 = vpow.pop %v1750
        %v1752 = vmul.f32 %v1725, 1.442695
        %v1753 = vpow.pop %v1752
        %v1754 = vmul.f32 %v1726, 1.442695
        %v1755 = vpow.pop %v1754
        %v1756 = vmul.f32 %v1727, 1.442695
        %v1757 = vpow.pop %v1756
        %v1758 = vmul.f32 %v1728, 1.442695
        %v1759 = vpow.pop %v1758
        %v1760 = vmul.f32 %v1729, 1.442695
        %v1761 = vpow.pop %v1760
        %v1762 = vadd.f32 %v1731, 1.0
        %v1763 = vadd.f32 %v1733, 1.0
        %v1764 = vadd.f32 %v1735, 1.0
        %v1765 = vadd.f32 %v1737, 1.0
        %v1766 = vadd.f32 %v1739, 1.0
        %v1767 = vadd.f32 %v1741, 1.0
        %v1768 = vadd.f32 %v1743, 1.0
        %v1769 = vadd.f32 %v1745, 1.0
        %v1770 = vadd.f32 %v1747, 1.0
        %v1771 = vadd.f32 %v1749, 1.0
        %v1772 = vadd.f32 %v1751, 1.0
        %v1773 = vadd.f32 %v1753, 1.0
        %v1774 = vadd.f32 %v1755, 1.0
        %v1775 = vadd.f32 %v1757, 1.0
        %v1776 = vadd.f32 %v1759, 1.0
        %v1777 = vadd.f32 %v1761, 1.0
        %v1778 = vrcp.pop %v1762
        %v1779 = vmul.f32 1.0, %v1778
        %v1780 = vrcp.pop %v1763
        %v1781 = vmul.f32 1.0, %v1780
        %v1782 = vrcp.pop %v1764
        %v1783 = vmul.f32 1.0, %v1782
        %v1784 = vrcp.pop %v1765
        %v1785 = vmul.f32 1.0, %v1784
        %v1786 = vrcp.pop %v1766
        %v1787 = vmul.f32 1.0, %v1786
        %v1788 = vrcp.pop %v1767
        %v1789 = vmul.f32 1.0, %v1788
        %v1790 = vrcp.pop %v1768
        %v1791 = vmul.f32 1.0, %v1790
        %v1792 = vrcp.pop %v1769
        %v1793 = vmul.f32 1.0, %v1792
        %v1794 = vrcp.pop %v1770
        %v1795 = vmul.f32 1.0, %v1794
        %v1796 = vrcp.pop %v1771
        %v1797 = vmul.f32 1.0, %v1796
        %v1798 = vrcp.pop %v1772
        %v1799 = vmul.f32 1.0, %v1798
        %v1800 = vrcp.pop %v1773
        %v1801 = vmul.f32 1.0, %v1800
        %v1802 = vrcp.pop %v1774
        %v1803 = vmul.f32 1.0, %v1802
        %v1804 = vrcp.pop %v1775
        %v1805 = vmul.f32 1.0, %v1804
        %v1806 = vrcp.pop %v1776
        %v1807 = vmul.f32 1.0, %v1806
        %v1808 = vrcp.pop %v1777
        %v1809 = vmul.f32 1.0, %v1808
        %v1810 = vmul.f32 %v1602, %v1779
        %v1811 = vmul.f32 %v1603, %v1781
        %v1812 = vmul.f32 %v1604, %v1783
        %v1813 = vmul.f32 %v1605, %v1785
        %v1814 = vmul.f32 %v1606, %v1787
        %v1815 = vmul.f32 %v1607, %v1789
        %v1816 = vmul.f32 %v1608, %v1791
        %v1817 = vmul.f32 %v1609, %v1793
        %v1818 = vmul.f32 %v1610, %v1795
        %v1819 = vmul.f32 %v1611, %v1797
        %v1820 = vmul.f32 %v1612, %v1799
        %v1821 = vmul.f32 %v1613, %v1801
        %v1822 = vmul.f32 %v1614, %v1803
        %v1823 = vmul.f32 %v1615, %v1805
        %v1824 = vmul.f32 %v1616, %v1807
        %v1825 = vmul.f32 %v1617, %v1809
        %v1826 = vadd.f32 %v1166, %v1810
        %v1827 = vadd.f32 %v1167, %v1811
        %v1828 = vadd.f32 %v1168, %v1812
        %v1829 = vadd.f32 %v1169, %v1813
        %v1830 = vadd.f32 %v1170, %v1814
        %v1831 = vadd.f32 %v1171, %v1815
        %v1832 = vadd.f32 %v1172, %v1816
        %v1833 = vadd.f32 %v1173, %v1817
        %v1834 = vadd.f32 %v1174, %v1818
        %v1835 = vadd.f32 %v1175, %v1819
        %v1836 = vadd.f32 %v1176, %v1820
        %v1837 = vadd.f32 %v1177, %v1821
        %v1838 = vadd.f32 %v1178, %v1822
        %v1839 = vadd.f32 %v1179, %v1823
        %v1840 = vadd.f32 %v1180, %v1824
        %v1841 = vadd.f32 %v1181, %v1825
        %v1842 = vmul.f32 %v1826, 0.70710677
        %v1843 = vmul.f32 %v1827, 0.70710677
        %v1844 = vmul.f32 %v1828, 0.70710677
        %v1845 = vmul.f32 %v1829, 0.70710677
        %v1846 = vmul.f32 %v1830, 0.70710677
        %v1847 = vmul.f32 %v1831, 0.70710677
        %v1848 = vmul.f32 %v1832, 0.70710677
        %v1849 = vmul.f32 %v1833, 0.70710677
        %v1850 = vmul.f32 %v1834, 0.70710677
        %v1851 = vmul.f32 %v1835, 0.70710677
        %v1852 = vmul.f32 %v1836, 0.70710677
        %v1853 = vmul.f32 %v1837, 0.70710677
        %v1854 = vmul.f32 %v1838, 0.70710677
        %v1855 = vmul.f32 %v1839, 0.70710677
        %v1856 = vmul.f32 %v1840, 0.70710677
        %v1857 = vmul.f32 %v1841, 0.70710677
        %s1858 = scalar_lea.vmem [#allocation5], 256
        %v1859 = vld [vmem:[%s1858] sm:$0xff]
        %v1860 = vld [vmem:[%s1858 + $0x8] sm:$0xff]
        %v1861 = vld [vmem:[%s1858 + $0x10] sm:$0xff]
        %v1862 = vld [vmem:[%s1858 + $0x18] sm:$0xff]
        %v1863 = vld [vmem:[%s1858 + $0x20] sm:$0xff]
        %v1864 = vld [vmem:[%s1858 + $0x28] sm:$0xff]
        %v1865 = vld [vmem:[%s1858 + $0x30] sm:$0xff]
        %v1866 = vld [vmem:[%s1858 + $0x38] sm:$0xff]
        %v1867 = vld [vmem:[%s1858 + $0x40] sm:$0xff]
        %v1868 = vld [vmem:[%s1858 + $0x48] sm:$0xff]
        %v1869 = vld [vmem:[%s1858 + $0x50] sm:$0xff]
        %v1870 = vld [vmem:[%s1858 + $0x58] sm:$0xff]
        %v1871 = vld [vmem:[%s1858 + $0x60] sm:$0xff]
        %v1872 = vld [vmem:[%s1858 + $0x68] sm:$0xff]
        %v1873 = vld [vmem:[%s1858 + $0x70] sm:$0xff]
        %v1874 = vld [vmem:[%s1858 + $0x78] sm:$0xff]
        %s1875 = scalar_lea.vmem %s3, 2
        %v1876 = vld [vmem:[%s1875] sm:$0x1]
        %v1878 = vlaneseq
        %v1879 = vshrl.u32 %v1878, 7
        %v1880 = vsub.s32 0, %v1879
        %v1881 = vrot.slane %v1876, %v1880
        %1883 = vmatprep.subr.mxu0 0.0
        %1884 = vmatpush1.msra.mxu0 %v1859
        %1885 = vmatprep.subr.mxu0 0.0
        %1886 = vmatpush1.msra.mxu0 %v1860
        %1887 = vmatprep.subr.mxu0 0.0
        %1888 = vmatpush1.msra.mxu0 %v1861
        %1889 = vmatprep.subr.mxu0 0.0
        %1890 = vmatpush1.msra.mxu0 %v1862
        %1891 = vmatprep.subr.mxu0 0.0
        %1892 = vmatpush1.msra.mxu0 %v1863
        %1893 = vmatprep.subr.mxu0 0.0
        %1894 = vmatpush1.msra.mxu0 %v1864
        %1895 = vmatprep.subr.mxu0 0.0
        %1896 = vmatpush1.msra.mxu0 %v1865
        %1897 = vmatprep.subr.mxu0 0.0
        %1898 = vmatpush1.msra.mxu0 %v1866
        %1899 = vmatprep.subr.mxu0 0.0
        %1900 = vmatpush1.msra.mxu0 %v1867
        %1901 = vmatprep.subr.mxu0 0.0
        %1902 = vmatpush1.msra.mxu0 %v1868
        %1903 = vmatprep.subr.mxu0 0.0
        %1904 = vmatpush1.msra.mxu0 %v1869
        %1905 = vmatprep.subr.mxu0 0.0
        %1906 = vmatpush1.msra.mxu0 %v1870
        %1907 = vmatprep.subr.mxu0 0.0
        %1908 = vmatpush1.msra.mxu0 %v1871
        %1909 = vmatprep.subr.mxu0 0.0
        %1910 = vmatpush1.msra.mxu0 %v1872
        %1911 = vmatprep.subr.mxu0 0.0
        %1912 = vmatpush1.msra.mxu0 %v1873
        %1913 = vmatprep.subr.mxu0 0.0
        %1914 = vmatpush1.msra.mxu0 %v1874
        %1915 = vmatprep.subr.mxu0 0.0
        %1916 = vmatpush1.msra.mxu0 0.0
        %1917 = vmatprep.subr.mxu0 0.0
        %1918 = vmatpush1.msra.mxu0 0.0
        %1919 = vmatprep.subr.mxu0 0.0
        %1920 = vmatpush1.msra.mxu0 0.0
        %1921 = vmatprep.subr.mxu0 0.0
        %1922 = vmatpush1.msra.mxu0 0.0
        %1923 = vmatprep.subr.mxu0 0.0
        %1924 = vmatpush1.msra.mxu0 0.0
        %1925 = vmatprep.subr.mxu0 0.0
        %1926 = vmatpush1.msra.mxu0 0.0
        %1927 = vmatprep.subr.mxu0 0.0
        %1928 = vmatpush1.msra.mxu0 0.0
        %1929 = vmatprep.subr.mxu0 0.0
        %1930 = vmatpush1.msra.mxu0 0.0
        %1931 = vmatprep.subr.mxu0 0.0
        %1932 = vmatpush1.msra.mxu0 0.0
        %1933 = vmatprep.subr.mxu0 0.0
        %1934 = vmatpush1.msra.mxu0 0.0
        %1935 = vmatprep.subr.mxu0 0.0
        %1936 = vmatpush1.msra.mxu0 0.0
        %1937 = vmatprep.subr.mxu0 0.0
        %1938 = vmatpush1.msra.mxu0 0.0
        %1939 = vmatprep.subr.mxu0 0.0
        %1940 = vmatpush1.msra.mxu0 0.0
        %1941 = vmatprep.subr.mxu0 0.0
        %1942 = vmatpush1.msra.mxu0 0.0
        %1943 = vmatprep.subr.mxu0 0.0
        %1944 = vmatpush1.msra.mxu0 0.0
        %1945 = vmatprep.subr.mxu0 0.0
        %1946 = vmatpush1.msra.mxu0 0.0
        %1947 = vmatprep.mubr.f32.mxu0 0.0
        %1948 = vmatmul.mubr.f32.gmra.mrb[0].mxu0 %v1842
        %v1949 = vpop.f32.mrb[0].mxu0
        %v1950 = vadd.f32 %v1881, %v1949
        %v1951 = vpop.f32.mrb[0].mxu0
        %1952 = vmatprep.mubr.f32.mxu0 0.0
        %1953 = vmatmul.mubr.f32.gmra.mrb[0].mxu0 %v1843
        %v1954 = vpop.f32.mrb[0].mxu0
        %v1955 = vadd.f32 %v1881, %v1954
        %v1956 = vpop.f32.mrb[0].mxu0
        %1957 = vmatprep.mubr.f32.mxu0 0.0
        %1958 = vmatmul.mubr.f32.gmra.mrb[0].mxu0 %v1844
        %v1959 = vpop.f32.mrb[0].mxu0
        %v1960 = vadd.f32 %v1881, %v1959
        %v1961 = vpop.f32.mrb[0].mxu0
        %1962 = vmatprep.mubr.f32.mxu0 0.0
        %1963 = vmatmul.mubr.f32.gmra.mrb[0].mxu0 %v1845
        %v1964 = vpop.f32.mrb[0].mxu0
        %v1965 = vadd.f32 %v1881, %v1964
        %v1966 = vpop.f32.mrb[0].mxu0
        %1967 = vmatprep.mubr.f32.mxu0 0.0
        %1968 = vmatmul.mubr.f32.gmra.mrb[0].mxu0 %v1846
        %v1969 = vpop.f32.mrb[0].mxu0
        %v1970 = vadd.f32 %v1881, %v1969
        %v1971 = vpop.f32.mrb[0].mxu0
        %1972 = vmatprep.mubr.f32.mxu0 0.0
        %1973 = vmatmul.mubr.f32.gmra.mrb[0].mxu0 %v1847
        %v1974 = vpop.f32.mrb[0].mxu0
        %v1975 = vadd.f32 %v1881, %v1974
        %v1976 = vpop.f32.mrb[0].mxu0
        %1977 = vmatprep.mubr.f32.mxu0 0.0
        %1978 = vmatmul.mubr.f32.gmra.mrb[0].mxu0 %v1848
        %v1979 = vpop.f32.mrb[0].mxu0
        %v1980 = vadd.f32 %v1881, %v1979
        %v1981 = vpop.f32.mrb[0].mxu0
        %1982 = vmatprep.mubr.f32.mxu0 0.0
        %1983 = vmatmul.mubr.f32.gmra.mrb[0].mxu0 %v1849
        %v1984 = vpop.f32.mrb[0].mxu0
        %v1985 = vadd.f32 %v1881, %v1984
        %v1986 = vpop.f32.mrb[0].mxu0
        %1987 = vmatprep.mubr.f32.mxu0 0.0
        %1988 = vmatmul.mubr.f32.gmra.mrb[0].mxu0 %v1850
        %v1989 = vpop.f32.mrb[0].mxu0
        %v1990 = vadd.f32 %v1881, %v1989
        %v1991 = vpop.f32.mrb[0].mxu0
        %1992 = vmatprep.mubr.f32.mxu0 0.0
        %1993 = vmatmul.mubr.f32.gmra.mrb[0].mxu0 %v1851
        %v1994 = vpop.f32.mrb[0].mxu0
        %v1995 = vadd.f32 %v1881, %v1994
        %v1996 = vpop.f32.mrb[0].mxu0
        %1997 = vmatprep.mubr.f32.mxu0 0.0
        %1998 = vmatmul.mubr.f32.gmra.mrb[0].mxu0 %v1852
        %v1999 = vpop.f32.mrb[0].mxu0
        %v2000 = vadd.f32 %v1881, %v1999
        %v2001 = vpop.f32.mrb[0].mxu0
        %2002 = vmatprep.mubr.f32.mxu0 0.0
        %2003 = vmatmul.mubr.f32.gmra.mrb[0].mxu0 %v1853
        %v2004 = vpop.f32.mrb[0].mxu0
        %v2005 = vadd.f32 %v1881, %v2004
        %v2006 = vpop.f32.mrb[0].mxu0
        %2007 = vmatprep.mubr.f32.mxu0 0.0
        %2008 = vmatmul.mubr.f32.gmra.mrb[0].mxu0 %v1854
        %v2009 = vpop.f32.mrb[0].mxu0
        %v2010 = vadd.f32 %v1881, %v2009
        %v2011 = vpop.f32.mrb[0].mxu0
        %2012 = vmatprep.mubr.f32.mxu0 0.0
        %2013 = vmatmul.mubr.f32.gmra.mrb[0].mxu0 %v1855
        %v2014 = vpop.f32.mrb[0].mxu0
        %v2015 = vadd.f32 %v1881, %v2014
        %v2016 = vpop.f32.mrb[0].mxu0
        %2017 = vmatprep.mubr.f32.mxu0 0.0
        %2018 = vmatmul.mubr.f32.gmra.mrb[0].mxu0 %v1856
        %v2019 = vpop.f32.mrb[0].mxu0
        %v2020 = vadd.f32 %v1881, %v2019
        %v2021 = vpop.f32.mrb[0].mxu0
        %2022 = vmatprep.mubr.f32.mxu0 0.0
        %2023 = vmatmul.mubr.f32.gmra.mrb[0].mxu0 %v1857
        %v2024 = vpop.f32.mrb[0].mxu0
        %v2025 = vadd.f32 %v1881, %v2024
        %v2026 = vpop.f32.mrb[0].mxu0
        %2027 = vdwg.mxu0
        %s2028 = scalar_lea.vmem [#allocation7], 256
        %v2029 = vld [vmem:[%s2028] sm:$0xff]
        %v2030 = vld [vmem:[%s2028 + $0x8] sm:$0xff]
        %v2031 = vld [vmem:[%s2028 + $0x10] sm:$0xff]
        %v2032 = vld [vmem:[%s2028 + $0x18] sm:$0xff]
        %v2033 = vld [vmem:[%s2028 + $0x20] sm:$0xff]
        %v2034 = vld [vmem:[%s2028 + $0x28] sm:$0xff]
        %v2035 = vld [vmem:[%s2028 + $0x30] sm:$0xff]
        %v2036 = vld [vmem:[%s2028 + $0x38] sm:$0xff]
        %v2037 = vld [vmem:[%s2028 + $0x40] sm:$0xff]
        %v2038 = vld [vmem:[%s2028 + $0x48] sm:$0xff]
        %v2039 = vld [vmem:[%s2028 + $0x50] sm:$0xff]
        %v2040 = vld [vmem:[%s2028 + $0x58] sm:$0xff]
        %v2041 = vld [vmem:[%s2028 + $0x60] sm:$0xff]
        %v2042 = vld [vmem:[%s2028 + $0x68] sm:$0xff]
        %v2043 = vld [vmem:[%s2028 + $0x70] sm:$0xff]
        %v2044 = vld [vmem:[%s2028 + $0x78] sm:$0xff]
        %s2045 = scalar_lea.vmem %s4, 2
        %v2046 = vld [vmem:[%s2045] sm:$0x1]
        %v2048 = vlaneseq
        %v2049 = vshrl.u32 %v2048, 7
        %v2050 = vsub.s32 0, %v2049
        %v2051 = vrot.slane %v2046, %v2050
        %2053 = vmatprep.subr.mxu0 0.0
        %2054 = vmatpush1.msra.mxu0 %v2029
        %2055 = vmatprep.subr.mxu0 0.0
        %2056 = vmatpush1.msra.mxu0 %v2030
        %2057 = vmatprep.subr.mxu0 0.0
        %2058 = vmatpush1.msra.mxu0 %v2031
        %2059 = vmatprep.subr.mxu0 0.0
        %2060 = vmatpush1.msra.mxu0 %v2032
        %2061 = vmatprep.subr.mxu0 0.0
        %2062 = vmatpush1.msra.mxu0 %v2033
        %2063 = vmatprep.subr.mxu0 0.0
        %2064 = vmatpush1.msra.mxu0 %v2034
        %2065 = vmatprep.subr.mxu0 0.0
        %2066 = vmatpush1.msra.mxu0 %v2035
        %2067 = vmatprep.subr.mxu0 0.0
        %2068 = vmatpush1.msra.mxu0 %v2036
        %2069 = vmatprep.subr.mxu0 0.0
        %2070 = vmatpush1.msra.mxu0 %v2037
        %2071 = vmatprep.subr.mxu0 0.0
        %2072 = vmatpush1.msra.mxu0 %v2038
        %2073 = vmatprep.subr.mxu0 0.0
        %2074 = vmatpush1.msra.mxu0 %v2039
        %2075 = vmatprep.subr.mxu0 0.0
        %2076 = vmatpush1.msra.mxu0 %v2040
        %2077 = vmatprep.subr.mxu0 0.0
        %2078 = vmatpush1.msra.mxu0 %v2041
        %2079 = vmatprep.subr.mxu0 0.0
        %2080 = vmatpush1.msra.mxu0 %v2042
        %2081 = vmatprep.subr.mxu0 0.0
        %2082 = vmatpush1.msra.mxu0 %v2043
        %2083 = vmatprep.subr.mxu0 0.0
        %2084 = vmatpush1.msra.mxu0 %v2044
        %2085 = vmatprep.subr.mxu0 0.0
        %2086 = vmatpush1.msra.mxu0 0.0
        %2087 = vmatprep.subr.mxu0 0.0
        %2088 = vmatpush1.msra.mxu0 0.0
        %2089 = vmatprep.subr.mxu0 0.0
        %2090 = vmatpush1.msra.mxu0 0.0
        %2091 = vmatprep.subr.mxu0 0.0
        %2092 = vmatpush1.msra.mxu0 0.0
        %2093 = vmatprep.subr.mxu0 0.0
        %2094 = vmatpush1.msra.mxu0 0.0
        %2095 = vmatprep.subr.mxu0 0.0
        %2096 = vmatpush1.msra.mxu0 0.0
        %2097 = vmatprep.subr.mxu0 0.0
        %2098 = vmatpush1.msra.mxu0 0.0
        %2099 = vmatprep.subr.mxu0 0.0
        %2100 = vmatpush1.msra.mxu0 0.0
        %2101 = vmatprep.subr.mxu0 0.0
        %2102 = vmatpush1.msra.mxu0 0.0
        %2103 = vmatprep.subr.mxu0 0.0
        %2104 = vmatpush1.msra.mxu0 0.0
        %2105 = vmatprep.subr.mxu0 0.0
        %2106 = vmatpush1.msra.mxu0 0.0
        %2107 = vmatprep.subr.mxu0 0.0
        %2108 = vmatpush1.msra.mxu0 0.0
        %2109 = vmatprep.subr.mxu0 0.0
        %2110 = vmatpush1.msra.mxu0 0.0
        %2111 = vmatprep.subr.mxu0 0.0
        %2112 = vmatpush1.msra.mxu0 0.0
        %2113 = vmatprep.subr.mxu0 0.0
        %2114 = vmatpush1.msra.mxu0 0.0
        %2115 = vmatprep.subr.mxu0 0.0
        %2116 = vmatpush1.msra.mxu0 0.0
        %2117 = vmatprep.mubr.f32.mxu0 0.0
        %2118 = vmatmul.mubr.f32.gmra.mrb[0].mxu0 %v1842
        %v2119 = vpop.f32.mrb[0].mxu0
        %v2120 = vadd.f32 %v2051, %v2119
        %v2121 = vpop.f32.mrb[0].mxu0
        %2122 = vmatprep.mubr.f32.mxu0 0.0
        %2123 = vmatmul.mubr.f32.gmra.mrb[0].mxu0 %v1843
        %v2124 = vpop.f32.mrb[0].mxu0
        %v2125 = vadd.f32 %v2051, %v2124
        %v2126 = vpop.f32.mrb[0].mxu0
        %2127 = vmatprep.mubr.f32.mxu0 0.0
        %2128 = vmatmul.mubr.f32.gmra.mrb[0].mxu0 %v1844
        %v2129 = vpop.f32.mrb[0].mxu0
        %v2130 = vadd.f32 %v2051, %v2129
        %v2131 = vpop.f32.mrb[0].mxu0
        %2132 = vmatprep.mubr.f32.mxu0 0.0
        %2133 = vmatmul.mubr.f32.gmra.mrb[0].mxu0 %v1845
        %v2134 = vpop.f32.mrb[0].mxu0
        %v2135 = vadd.f32 %v2051, %v2134
        %v2136 = vpop.f32.mrb[0].mxu0
        %2137 = vmatprep.mubr.f32.mxu0 0.0
        %2138 = vmatmul.mubr.f32.gmra.mrb[0].mxu0 %v1846
        %v2139 = vpop.f32.mrb[0].mxu0
        %v2140 = vadd.f32 %v2051, %v2139
        %v2141 = vpop.f32.mrb[0].mxu0
        %2142 = vmatprep.mubr.f32.mxu0 0.0
        %2143 = vmatmul.mubr.f32.gmra.mrb[0].mxu0 %v1847
        %v2144 = vpop.f32.mrb[0].mxu0
        %v2145 = vadd.f32 %v2051, %v2144
        %v2146 = vpop.f32.mrb[0].mxu0
        %2147 = vmatprep.mubr.f32.mxu0 0.0
        %2148 = vmatmul.mubr.f32.gmra.mrb[0].mxu0 %v1848
        %v2149 = vpop.f32.mrb[0].mxu0
        %v2150 = vadd.f32 %v2051, %v2149
        %v2151 = vpop.f32.mrb[0].mxu0
        %2152 = vmatprep.mubr.f32.mxu0 0.0
        %2153 = vmatmul.mubr.f32.gmra.mrb[0].mxu0 %v1849
        %v2154 = vpop.f32.mrb[0].mxu0
        %v2155 = vadd.f32 %v2051, %v2154
        %v2156 = vpop.f32.mrb[0].mxu0
        %2157 = vmatprep.mubr.f32.mxu0 0.0
        %2158 = vmatmul.mubr.f32.gmra.mrb[0].mxu0 %v1850
        %v2159 = vpop.f32.mrb[0].mxu0
        %v2160 = vadd.f32 %v2051, %v2159
        %v2161 = vpop.f32.mrb[0].mxu0
        %2162 = vmatprep.mubr.f32.mxu0 0.0
        %2163 = vmatmul.mubr.f32.gmra.mrb[0].mxu0 %v1851
        %v2164 = vpop.f32.mrb[0].mxu0
        %v2165 = vadd.f32 %v2051, %v2164
        %v2166 = vpop.f32.mrb[0].mxu0
        %2167 = vmatprep.mubr.f32.mxu0 0.0
        %2168 = vmatmul.mubr.f32.gmra.mrb[0].mxu0 %v1852
        %v2169 = vpop.f32.mrb[0].mxu0
        %v2170 = vadd.f32 %v2051, %v2169
        %v2171 = vpop.f32.mrb[0].mxu0
        %2172 = vmatprep.mubr.f32.mxu0 0.0
        %2173 = vmatmul.mubr.f32.gmra.mrb[0].mxu0 %v1853
        %v2174 = vpop.f32.mrb[0].mxu0
        %v2175 = vadd.f32 %v2051, %v2174
        %v2176 = vpop.f32.mrb[0].mxu0
        %2177 = vmatprep.mubr.f32.mxu0 0.0
        %2178 = vmatmul.mubr.f32.gmra.mrb[0].mxu0 %v1854
        %v2179 = vpop.f32.mrb[0].mxu0
        %v2180 = vadd.f32 %v2051, %v2179
        %v2181 = vpop.f32.mrb[0].mxu0
        %2182 = vmatprep.mubr.f32.mxu0 0.0
        %2183 = vmatmul.mubr.f32.gmra.mrb[0].mxu0 %v1855
        %v2184 = vpop.f32.mrb[0].mxu0
        %v2185 = vadd.f32 %v2051, %v2184
        %v2186 = vpop.f32.mrb[0].mxu0
        %2187 = vmatprep.mubr.f32.mxu0 0.0
        %2188 = vmatmul.mubr.f32.gmra.mrb[0].mxu0 %v1856
        %v2189 = vpop.f32.mrb[0].mxu0
        %v2190 = vadd.f32 %v2051, %v2189
        %v2191 = vpop.f32.mrb[0].mxu0
        %2192 = vmatprep.mubr.f32.mxu0 0.0
        %2193 = vmatmul.mubr.f32.gmra.mrb[0].mxu0 %v1857
        %v2194 = vpop.f32.mrb[0].mxu0
        %v2195 = vadd.f32 %v2051, %v2194
        %v2196 = vpop.f32.mrb[0].mxu0
        %2197 = vdwg.mxu0
        %vm2198 = vcmp.gt.f32.partialorder %v1950, 0.0
        %vm2199 = vcmp.gt.f32.partialorder %v1955, 0.0
        %vm2200 = vcmp.gt.f32.partialorder %v1960, 0.0
        %vm2201 = vcmp.gt.f32.partialorder %v1965, 0.0
        %vm2202 = vcmp.gt.f32.partialorder %v1970, 0.0
        %vm2203 = vcmp.gt.f32.partialorder %v1975, 0.0
        %vm2204 = vcmp.gt.f32.partialorder %v1980, 0.0
        %vm2205 = vcmp.gt.f32.partialorder %v1985, 0.0
        %vm2206 = vcmp.gt.f32.partialorder %v1990, 0.0
        %vm2207 = vcmp.gt.f32.partialorder %v1995, 0.0
        %vm2208 = vcmp.gt.f32.partialorder %v2000, 0.0
        %vm2209 = vcmp.gt.f32.partialorder %v2005, 0.0
        %vm2210 = vcmp.gt.f32.partialorder %v2010, 0.0
        %vm2211 = vcmp.gt.f32.partialorder %v2015, 0.0
        %vm2212 = vcmp.gt.f32.partialorder %v2020, 0.0
        %vm2213 = vcmp.gt.f32.partialorder %v2025, 0.0
        %v2214 = vmul.f32 %v1950, 0.01
        %v2215 = vmul.f32 %v1955, 0.01
        %v2216 = vmul.f32 %v1960, 0.01
        %v2217 = vmul.f32 %v1965, 0.01
        %v2218 = vmul.f32 %v1970, 0.01
        %v2219 = vmul.f32 %v1975, 0.01
        %v2220 = vmul.f32 %v1980, 0.01
        %v2221 = vmul.f32 %v1985, 0.01
        %v2222 = vmul.f32 %v1990, 0.01
        %v2223 = vmul.f32 %v1995, 0.01
        %v2224 = vmul.f32 %v2000, 0.01
        %v2225 = vmul.f32 %v2005, 0.01
        %v2226 = vmul.f32 %v2010, 0.01
        %v2227 = vmul.f32 %v2015, 0.01
        %v2228 = vmul.f32 %v2020, 0.01
        %v2229 = vmul.f32 %v2025, 0.01
        %v2230 = vsel %vm2198, %v1950, %v2214
        %v2231 = vsel %vm2199, %v1955, %v2215
        %v2232 = vsel %vm2200, %v1960, %v2216
        %v2233 = vsel %vm2201, %v1965, %v2217
        %v2234 = vsel %vm2202, %v1970, %v2218
        %v2235 = vsel %vm2203, %v1975, %v2219
        %v2236 = vsel %vm2204, %v1980, %v2220
        %v2237 = vsel %vm2205, %v1985, %v2221
        %v2238 = vsel %vm2206, %v1990, %v2222
        %v2239 = vsel %vm2207, %v1995, %v2223
        %v2240 = vsel %vm2208, %v2000, %v2224
        %v2241 = vsel %vm2209, %v2005, %v2225
        %v2242 = vsel %vm2210, %v2010, %v2226
        %v2243 = vsel %vm2211, %v2015, %v2227
        %v2244 = vsel %vm2212, %v2020, %v2228
        %v2245 = vsel %vm2213, %v2025, %v2229
        %s2246 = scalar_lea.vmem %s5, 2
        %v2247 = vld [vmem:[%s2246] sm:$0x1]
        %v2249 = vlaneseq
        %v2250 = vshrl.u32 %v2249, 7
        %v2251 = vsub.s32 0, %v2250
        %v2252 = vrot.slane %v2247, %v2251
        %v2254 = vmul.f32 %v2230, %v2252
        %v2255 = vmul.f32 %v2231, %v2252
        %v2256 = vmul.f32 %v2232, %v2252
        %v2257 = vmul.f32 %v2233, %v2252
        %v2258 = vmul.f32 %v2234, %v2252
        %v2259 = vmul.f32 %v2235, %v2252
        %v2260 = vmul.f32 %v2236, %v2252
        %v2261 = vmul.f32 %v2237, %v2252
        %v2262 = vmul.f32 %v2238, %v2252
        %v2263 = vmul.f32 %v2239, %v2252
        %v2264 = vmul.f32 %v2240, %v2252
        %v2265 = vmul.f32 %v2241, %v2252
        %v2266 = vmul.f32 %v2242, %v2252
        %v2267 = vmul.f32 %v2243, %v2252
        %v2268 = vmul.f32 %v2244, %v2252
        %v2269 = vmul.f32 %v2245, %v2252
        %s2270 = scalar_lea.vmem %s7, 2
        %v2271 = vld [vmem:[%s2270] sm:$0x1]
        %v2273 = vlaneseq
        %v2274 = vshrl.u32 %v2273, 7
        %v2275 = vsub.s32 0, %v2274
        %v2276 = vrot.slane %v2271, %v2275
        %v2278 = vadd.f32 %v2254, %v2276
        %v2279 = vadd.f32 %v2255, %v2276
        %v2280 = vadd.f32 %v2256, %v2276
        %v2281 = vadd.f32 %v2257, %v2276
        %v2282 = vadd.f32 %v2258, %v2276
        %v2283 = vadd.f32 %v2259, %v2276
        %v2284 = vadd.f32 %v2260, %v2276
        %v2285 = vadd.f32 %v2261, %v2276
        %v2286 = vadd.f32 %v2262, %v2276
        %v2287 = vadd.f32 %v2263, %v2276
        %v2288 = vadd.f32 %v2264, %v2276
        %v2289 = vadd.f32 %v2265, %v2276
        %v2290 = vadd.f32 %v2266, %v2276
        %v2291 = vadd.f32 %v2267, %v2276
        %v2292 = vadd.f32 %v2268, %v2276
        %v2293 = vadd.f32 %v2269, %v2276
        %vm2294 = vcmp.gt.f32.partialorder %v2120, 0.0
        %vm2295 = vcmp.gt.f32.partialorder %v2125, 0.0
        %vm2296 = vcmp.gt.f32.partialorder %v2130, 0.0
        %vm2297 = vcmp.gt.f32.partialorder %v2135, 0.0
        %vm2298 = vcmp.gt.f32.partialorder %v2140, 0.0
        %vm2299 = vcmp.gt.f32.partialorder %v2145, 0.0
        %vm2300 = vcmp.gt.f32.partialorder %v2150, 0.0
        %vm2301 = vcmp.gt.f32.partialorder %v2155, 0.0
        %vm2302 = vcmp.gt.f32.partialorder %v2160, 0.0
        %vm2303 = vcmp.gt.f32.partialorder %v2165, 0.0
        %vm2304 = vcmp.gt.f32.partialorder %v2170, 0.0
        %vm2305 = vcmp.gt.f32.partialorder %v2175, 0.0
        %vm2306 = vcmp.gt.f32.partialorder %v2180, 0.0
        %vm2307 = vcmp.gt.f32.partialorder %v2185, 0.0
        %vm2308 = vcmp.gt.f32.partialorder %v2190, 0.0
        %vm2309 = vcmp.gt.f32.partialorder %v2195, 0.0
        %v2310 = vmul.f32 %v2120, 0.01
        %v2311 = vmul.f32 %v2125, 0.01
        %v2312 = vmul.f32 %v2130, 0.01
        %v2313 = vmul.f32 %v2135, 0.01
        %v2314 = vmul.f32 %v2140, 0.01
        %v2315 = vmul.f32 %v2145, 0.01
        %v2316 = vmul.f32 %v2150, 0.01
        %v2317 = vmul.f32 %v2155, 0.01
        %v2318 = vmul.f32 %v2160, 0.01
        %v2319 = vmul.f32 %v2165, 0.01
        %v2320 = vmul.f32 %v2170, 0.01
        %v2321 = vmul.f32 %v2175, 0.01
        %v2322 = vmul.f32 %v2180, 0.01
        %v2323 = vmul.f32 %v2185, 0.01
        %v2324 = vmul.f32 %v2190, 0.01
        %v2325 = vmul.f32 %v2195, 0.01
        %v2326 = vsel %vm2294, %v2120, %v2310
        %v2327 = vsel %vm2295, %v2125, %v2311
        %v2328 = vsel %vm2296, %v2130, %v2312
        %v2329 = vsel %vm2297, %v2135, %v2313
        %v2330 = vsel %vm2298, %v2140, %v2314
        %v2331 = vsel %vm2299, %v2145, %v2315
        %v2332 = vsel %vm2300, %v2150, %v2316
        %v2333 = vsel %vm2301, %v2155, %v2317
        %v2334 = vsel %vm2302, %v2160, %v2318
        %v2335 = vsel %vm2303, %v2165, %v2319
        %v2336 = vsel %vm2304, %v2170, %v2320
        %v2337 = vsel %vm2305, %v2175, %v2321
        %v2338 = vsel %vm2306, %v2180, %v2322
        %v2339 = vsel %vm2307, %v2185, %v2323
        %v2340 = vsel %vm2308, %v2190, %v2324
        %v2341 = vsel %vm2309, %v2195, %v2325
        %s2342 = scalar_lea.vmem %s6, 2
        %v2343 = vld [vmem:[%s2342] sm:$0x1]
        %v2345 = vlaneseq
        %v2346 = vshrl.u32 %v2345, 7
        %v2347 = vsub.s32 0, %v2346
        %v2348 = vrot.slane %v2343, %v2347
        %v2350 = vmul.f32 %v2326, %v2348
        %v2351 = vmul.f32 %v2327, %v2348
        %v2352 = vmul.f32 %v2328, %v2348
        %v2353 = vmul.f32 %v2329, %v2348
        %v2354 = vmul.f32 %v2330, %v2348
        %v2355 = vmul.f32 %v2331, %v2348
        %v2356 = vmul.f32 %v2332, %v2348
        %v2357 = vmul.f32 %v2333, %v2348
        %v2358 = vmul.f32 %v2334, %v2348
        %v2359 = vmul.f32 %v2335, %v2348
        %v2360 = vmul.f32 %v2336, %v2348
        %v2361 = vmul.f32 %v2337, %v2348
        %v2362 = vmul.f32 %v2338, %v2348
        %v2363 = vmul.f32 %v2339, %v2348
        %v2364 = vmul.f32 %v2340, %v2348
        %v2365 = vmul.f32 %v2341, %v2348
        %s2366 = scalar_lea.vmem %s8, 2
        %v2367 = vld [vmem:[%s2366] sm:$0x1]
        %v2369 = vlaneseq
        %v2370 = vshrl.u32 %v2369, 7
        %v2371 = vsub.s32 0, %v2370
        %v2372 = vrot.slane %v2367, %v2371
        %v2374 = vadd.f32 %v2350, %v2372
        %v2375 = vadd.f32 %v2351, %v2372
        %v2376 = vadd.f32 %v2352, %v2372
        %v2377 = vadd.f32 %v2353, %v2372
        %v2378 = vadd.f32 %v2354, %v2372
        %v2379 = vadd.f32 %v2355, %v2372
        %v2380 = vadd.f32 %v2356, %v2372
        %v2381 = vadd.f32 %v2357, %v2372
        %v2382 = vadd.f32 %v2358, %v2372
        %v2383 = vadd.f32 %v2359, %v2372
        %v2384 = vadd.f32 %v2360, %v2372
        %v2385 = vadd.f32 %v2361, %v2372
        %v2386 = vadd.f32 %v2362, %v2372
        %v2387 = vadd.f32 %v2363, %v2372
        %v2388 = vadd.f32 %v2364, %v2372
        %v2389 = vadd.f32 %v2365, %v2372
        %v2390 = vxor.u32 %v2374, 2147483648
        %v2391 = vxor.u32 %v2375, 2147483648
        %v2392 = vxor.u32 %v2376, 2147483648
        %v2393 = vxor.u32 %v2377, 2147483648
        %v2394 = vxor.u32 %v2378, 2147483648
        %v2395 = vxor.u32 %v2379, 2147483648
        %v2396 = vxor.u32 %v2380, 2147483648
        %v2397 = vxor.u32 %v2381, 2147483648
        %v2398 = vxor.u32 %v2382, 2147483648
        %v2399 = vxor.u32 %v2383, 2147483648
        %v2400 = vxor.u32 %v2384, 2147483648
        %v2401 = vxor.u32 %v2385, 2147483648
        %v2402 = vxor.u32 %v2386, 2147483648
        %v2403 = vxor.u32 %v2387, 2147483648
        %v2404 = vxor.u32 %v2388, 2147483648
        %v2405 = vxor.u32 %v2389, 2147483648
        %v2406 = vmul.f32 %v2390, 1.442695
        %v2407 = vpow.pop %v2406
        %v2408 = vmul.f32 %v2391, 1.442695
        %v2409 = vpow.pop %v2408
        %v2410 = vmul.f32 %v2392, 1.442695
        %v2411 = vpow.pop %v2410
        %v2412 = vmul.f32 %v2393, 1.442695
        %v2413 = vpow.pop %v2412
        %v2414 = vmul.f32 %v2394, 1.442695
        %v2415 = vpow.pop %v2414
        %v2416 = vmul.f32 %v2395, 1.442695
        %v2417 = vpow.pop %v2416
        %v2418 = vmul.f32 %v2396, 1.442695
        %v2419 = vpow.pop %v2418
        %v2420 = vmul.f32 %v2397, 1.442695
        %v2421 = vpow.pop %v2420
        %v2422 = vmul.f32 %v2398, 1.442695
        %v2423 = vpow.pop %v2422
        %v2424 = vmul.f32 %v2399, 1.442695
        %v2425 = vpow.pop %v2424
        %v2426 = vmul.f32 %v2400, 1.442695
        %v2427 = vpow.pop %v2426
        %v2428 = vmul.f32 %v2401, 1.442695
        %v2429 = vpow.pop %v2428
        %v2430 = vmul.f32 %v2402, 1.442695
        %v2431 = vpow.pop %v2430
        %v2432 = vmul.f32 %v2403, 1.442695
        %v2433 = vpow.pop %v2432
        %v2434 = vmul.f32 %v2404, 1.442695
        %v2435 = vpow.pop %v2434
        %v2436 = vmul.f32 %v2405, 1.442695
        %v2437 = vpow.pop %v2436
        %v2438 = vadd.f32 %v2407, 1.0
        %v2439 = vadd.f32 %v2409, 1.0
        %v2440 = vadd.f32 %v2411, 1.0
        %v2441 = vadd.f32 %v2413, 1.0
        %v2442 = vadd.f32 %v2415, 1.0
        %v2443 = vadd.f32 %v2417, 1.0
        %v2444 = vadd.f32 %v2419, 1.0
        %v2445 = vadd.f32 %v2421, 1.0
        %v2446 = vadd.f32 %v2423, 1.0
        %v2447 = vadd.f32 %v2425, 1.0
        %v2448 = vadd.f32 %v2427, 1.0
        %v2449 = vadd.f32 %v2429, 1.0
        %v2450 = vadd.f32 %v2431, 1.0
        %v2451 = vadd.f32 %v2433, 1.0
        %v2452 = vadd.f32 %v2435, 1.0
        %v2453 = vadd.f32 %v2437, 1.0
        %v2454 = vrcp.pop %v2438
        %v2455 = vmul.f32 1.0, %v2454
        %v2456 = vrcp.pop %v2439
        %v2457 = vmul.f32 1.0, %v2456
        %v2458 = vrcp.pop %v2440
        %v2459 = vmul.f32 1.0, %v2458
        %v2460 = vrcp.pop %v2441
        %v2461 = vmul.f32 1.0, %v2460
        %v2462 = vrcp.pop %v2442
        %v2463 = vmul.f32 1.0, %v2462
        %v2464 = vrcp.pop %v2443
        %v2465 = vmul.f32 1.0, %v2464
        %v2466 = vrcp.pop %v2444
        %v2467 = vmul.f32 1.0, %v2466
        %v2468 = vrcp.pop %v2445
        %v2469 = vmul.f32 1.0, %v2468
        %v2470 = vrcp.pop %v2446
        %v2471 = vmul.f32 1.0, %v2470
        %v2472 = vrcp.pop %v2447
        %v2473 = vmul.f32 1.0, %v2472
        %v2474 = vrcp.pop %v2448
        %v2475 = vmul.f32 1.0, %v2474
        %v2476 = vrcp.pop %v2449
        %v2477 = vmul.f32 1.0, %v2476
        %v2478 = vrcp.pop %v2450
        %v2479 = vmul.f32 1.0, %v2478
        %v2480 = vrcp.pop %v2451
        %v2481 = vmul.f32 1.0, %v2480
        %v2482 = vrcp.pop %v2452
        %v2483 = vmul.f32 1.0, %v2482
        %v2484 = vrcp.pop %v2453
        %v2485 = vmul.f32 1.0, %v2484
        %v2486 = vmul.f32 %v2278, %v2455
        %v2487 = vmul.f32 %v2279, %v2457
        %v2488 = vmul.f32 %v2280, %v2459
        %v2489 = vmul.f32 %v2281, %v2461
        %v2490 = vmul.f32 %v2282, %v2463
        %v2491 = vmul.f32 %v2283, %v2465
        %v2492 = vmul.f32 %v2284, %v2467
        %v2493 = vmul.f32 %v2285, %v2469
        %v2494 = vmul.f32 %v2286, %v2471
        %v2495 = vmul.f32 %v2287, %v2473
        %v2496 = vmul.f32 %v2288, %v2475
        %v2497 = vmul.f32 %v2289, %v2477
        %v2498 = vmul.f32 %v2290, %v2479
        %v2499 = vmul.f32 %v2291, %v2481
        %v2500 = vmul.f32 %v2292, %v2483
        %v2501 = vmul.f32 %v2293, %v2485
        %v2502 = vadd.f32 %v1842, %v2486
        %v2503 = vadd.f32 %v1843, %v2487
        %v2504 = vadd.f32 %v1844, %v2488
        %v2505 = vadd.f32 %v1845, %v2489
        %v2506 = vadd.f32 %v1846, %v2490
        %v2507 = vadd.f32 %v1847, %v2491
        %v2508 = vadd.f32 %v1848, %v2492
        %v2509 = vadd.f32 %v1849, %v2493
        %v2510 = vadd.f32 %v1850, %v2494
        %v2511 = vadd.f32 %v1851, %v2495
        %v2512 = vadd.f32 %v1852, %v2496
        %v2513 = vadd.f32 %v1853, %v2497
        %v2514 = vadd.f32 %v1854, %v2498
        %v2515 = vadd.f32 %v1855, %v2499
        %v2516 = vadd.f32 %v1856, %v2500
        %v2517 = vadd.f32 %v1857, %v2501
        %v2518 = vmul.f32 %v2502, 0.70710677
        %v2519 = vmul.f32 %v2503, 0.70710677
        %v2520 = vmul.f32 %v2504, 0.70710677
        %v2521 = vmul.f32 %v2505, 0.70710677
        %v2522 = vmul.f32 %v2506, 0.70710677
        %v2523 = vmul.f32 %v2507, 0.70710677
        %v2524 = vmul.f32 %v2508, 0.70710677
        %v2525 = vmul.f32 %v2509, 0.70710677
        %v2526 = vmul.f32 %v2510, 0.70710677
        %v2527 = vmul.f32 %v2511, 0.70710677
        %v2528 = vmul.f32 %v2512, 0.70710677
        %v2529 = vmul.f32 %v2513, 0.70710677
        %v2530 = vmul.f32 %v2514, 0.70710677
        %v2531 = vmul.f32 %v2515, 0.70710677
        %v2532 = vmul.f32 %v2516, 0.70710677
        %v2533 = vmul.f32 %v2517, 0.70710677
        %s2534 = scalar_lea.vmem [#allocation5], 384
        %v2535 = vld [vmem:[%s2534] sm:$0xff]
        %v2536 = vld [vmem:[%s2534 + $0x8] sm:$0xff]
        %v2537 = vld [vmem:[%s2534 + $0x10] sm:$0xff]
        %v2538 = vld [vmem:[%s2534 + $0x18] sm:$0xff]
        %v2539 = vld [vmem:[%s2534 + $0x20] sm:$0xff]
        %v2540 = vld [vmem:[%s2534 + $0x28] sm:$0xff]
        %v2541 = vld [vmem:[%s2534 + $0x30] sm:$0xff]
        %v2542 = vld [vmem:[%s2534 + $0x38] sm:$0xff]
        %v2543 = vld [vmem:[%s2534 + $0x40] sm:$0xff]
        %v2544 = vld [vmem:[%s2534 + $0x48] sm:$0xff]
        %v2545 = vld [vmem:[%s2534 + $0x50] sm:$0xff]
        %v2546 = vld [vmem:[%s2534 + $0x58] sm:$0xff]
        %v2547 = vld [vmem:[%s2534 + $0x60] sm:$0xff]
        %v2548 = vld [vmem:[%s2534 + $0x68] sm:$0xff]
        %v2549 = vld [vmem:[%s2534 + $0x70] sm:$0xff]
        %v2550 = vld [vmem:[%s2534 + $0x78] sm:$0xff]
        %s2551 = scalar_lea.vmem %s3, 3
        %v2552 = vld [vmem:[%s2551] sm:$0x1]
        %v2554 = vlaneseq
        %v2555 = vshrl.u32 %v2554, 7
        %v2556 = vsub.s32 0, %v2555
        %v2557 = vrot.slane %v2552, %v2556
        %2559 = vmatprep.subr.mxu0 0.0
        %2560 = vmatpush1.msra.mxu0 %v2535
        %2561 = vmatprep.subr.mxu0 0.0
        %2562 = vmatpush1.msra.mxu0 %v2536
        %2563 = vmatprep.subr.mxu0 0.0
        %2564 = vmatpush1.msra.mxu0 %v2537
        %2565 = vmatprep.subr.mxu0 0.0
        %2566 = vmatpush1.msra.mxu0 %v2538
        %2567 = vmatprep.subr.mxu0 0.0
        %2568 = vmatpush1.msra.mxu0 %v2539
        %2569 = vmatprep.subr.mxu0 0.0
        %2570 = vmatpush1.msra.mxu0 %v2540
        %2571 = vmatprep.subr.mxu0 0.0
        %2572 = vmatpush1.msra.mxu0 %v2541
        %2573 = vmatprep.subr.mxu0 0.0
        %2574 = vmatpush1.msra.mxu0 %v2542
        %2575 = vmatprep.subr.mxu0 0.0
        %2576 = vmatpush1.msra.mxu0 %v2543
        %2577 = vmatprep.subr.mxu0 0.0
        %2578 = vmatpush1.msra.mxu0 %v2544
        %2579 = vmatprep.subr.mxu0 0.0
        %2580 = vmatpush1.msra.mxu0 %v2545
        %2581 = vmatprep.subr.mxu0 0.0
        %2582 = vmatpush1.msra.mxu0 %v2546
        %2583 = vmatprep.subr.mxu0 0.0
        %2584 = vmatpush1.msra.mxu0 %v2547
        %2585 = vmatprep.subr.mxu0 0.0
        %2586 = vmatpush1.msra.mxu0 %v2548
        %2587 = vmatprep.subr.mxu0 0.0
        %2588 = vmatpush1.msra.mxu0 %v2549
        %2589 = vmatprep.subr.mxu0 0.0
        %2590 = vmatpush1.msra.mxu0 %v2550
        %2591 = vmatprep.subr.mxu0 0.0
        %2592 = vmatpush1.msra.mxu0 0.0
        %2593 = vmatprep.subr.mxu0 0.0
        %2594 = vmatpush1.msra.mxu0 0.0
        %2595 = vmatprep.subr.mxu0 0.0
        %2596 = vmatpush1.msra.mxu0 0.0
        %2597 = vmatprep.subr.mxu0 0.0
        %2598 = vmatpush1.msra.mxu0 0.0
        %2599 = vmatprep.subr.mxu0 0.0
        %2600 = vmatpush1.msra.mxu0 0.0
        %2601 = vmatprep.subr.mxu0 0.0
        %2602 = vmatpush1.msra.mxu0 0.0
        %2603 = vmatprep.subr.mxu0 0.0
        %2604 = vmatpush1.msra.mxu0 0.0
        %2605 = vmatprep.subr.mxu0 0.0
        %2606 = vmatpush1.msra.mxu0 0.0
        %2607 = vmatprep.subr.mxu0 0.0
        %2608 = vmatpush1.msra.mxu0 0.0
        %2609 = vmatprep.subr.mxu0 0.0
        %2610 = vmatpush1.msra.mxu0 0.0
        %2611 = vmatprep.subr.mxu0 0.0
        %2612 = vmatpush1.msra.mxu0 0.0
        %2613 = vmatprep.subr.mxu0 0.0
        %2614 = vmatpush1.msra.mxu0 0.0
        %2615 = vmatprep.subr.mxu0 0.0
        %2616 = vmatpush1.msra.mxu0 0.0
        %2617 = vmatprep.subr.mxu0 0.0
        %2618 = vmatpush1.msra.mxu0 0.0
        %2619 = vmatprep.subr.mxu0 0.0
        %2620 = vmatpush1.msra.mxu0 0.0
        %2621 = vmatprep.subr.mxu0 0.0
        %2622 = vmatpush1.msra.mxu0 0.0
        %2623 = vmatprep.mubr.f32.mxu0 0.0
        %2624 = vmatmul.mubr.f32.gmra.mrb[0].mxu0 %v2518
        %v2625 = vpop.f32.mrb[0].mxu0
        %v2626 = vadd.f32 %v2557, %v2625
        %v2627 = vpop.f32.mrb[0].mxu0
        %2628 = vmatprep.mubr.f32.mxu0 0.0
        %2629 = vmatmul.mubr.f32.gmra.mrb[0].mxu0 %v2519
        %v2630 = vpop.f32.mrb[0].mxu0
        %v2631 = vadd.f32 %v2557, %v2630
        %v2632 = vpop.f32.mrb[0].mxu0
        %2633 = vmatprep.mubr.f32.mxu0 0.0
        %2634 = vmatmul.mubr.f32.gmra.mrb[0].mxu0 %v2520
        %v2635 = vpop.f32.mrb[0].mxu0
        %v2636 = vadd.f32 %v2557, %v2635
        %v2637 = vpop.f32.mrb[0].mxu0
        %2638 = vmatprep.mubr.f32.mxu0 0.0
        %2639 = vmatmul.mubr.f32.gmra.mrb[0].mxu0 %v2521
        %v2640 = vpop.f32.mrb[0].mxu0
        %v2641 = vadd.f32 %v2557, %v2640
        %v2642 = vpop.f32.mrb[0].mxu0
        %2643 = vmatprep.mubr.f32.mxu0 0.0
        %2644 = vmatmul.mubr.f32.gmra.mrb[0].mxu0 %v2522
        %v2645 = vpop.f32.mrb[0].mxu0
        %v2646 = vadd.f32 %v2557, %v2645
        %v2647 = vpop.f32.mrb[0].mxu0
        %2648 = vmatprep.mubr.f32.mxu0 0.0
        %2649 = vmatmul.mubr.f32.gmra.mrb[0].mxu0 %v2523
        %v2650 = vpop.f32.mrb[0].mxu0
        %v2651 = vadd.f32 %v2557, %v2650
        %v2652 = vpop.f32.mrb[0].mxu0
        %2653 = vmatprep.mubr.f32.mxu0 0.0
        %2654 = vmatmul.mubr.f32.gmra.mrb[0].mxu0 %v2524
        %v2655 = vpop.f32.mrb[0].mxu0
        %v2656 = vadd.f32 %v2557, %v2655
        %v2657 = vpop.f32.mrb[0].mxu0
        %2658 = vmatprep.mubr.f32.mxu0 0.0
        %2659 = vmatmul.mubr.f32.gmra.mrb[0].mxu0 %v2525
        %v2660 = vpop.f32.mrb[0].mxu0
        %v2661 = vadd.f32 %v2557, %v2660
        %v2662 = vpop.f32.mrb[0].mxu0
        %2663 = vmatprep.mubr.f32.mxu0 0.0
        %2664 = vmatmul.mubr.f32.gmra.mrb[0].mxu0 %v2526
        %v2665 = vpop.f32.mrb[0].mxu0
        %v2666 = vadd.f32 %v2557, %v2665
        %v2667 = vpop.f32.mrb[0].mxu0
        %2668 = vmatprep.mubr.f32.mxu0 0.0
        %2669 = vmatmul.mubr.f32.gmra.mrb[0].mxu0 %v2527
        %v2670 = vpop.f32.mrb[0].mxu0
        %v2671 = vadd.f32 %v2557, %v2670
        %v2672 = vpop.f32.mrb[0].mxu0
        %2673 = vmatprep.mubr.f32.mxu0 0.0
        %2674 = vmatmul.mubr.f32.gmra.mrb[0].mxu0 %v2528
        %v2675 = vpop.f32.mrb[0].mxu0
        %v2676 = vadd.f32 %v2557, %v2675
        %v2677 = vpop.f32.mrb[0].mxu0
        %2678 = vmatprep.mubr.f32.mxu0 0.0
        %2679 = vmatmul.mubr.f32.gmra.mrb[0].mxu0 %v2529
        %v2680 = vpop.f32.mrb[0].mxu0
        %v2681 = vadd.f32 %v2557, %v2680
        %v2682 = vpop.f32.mrb[0].mxu0
        %2683 = vmatprep.mubr.f32.mxu0 0.0
        %2684 = vmatmul.mubr.f32.gmra.mrb[0].mxu0 %v2530
        %v2685 = vpop.f32.mrb[0].mxu0
        %v2686 = vadd.f32 %v2557, %v2685
        %v2687 = vpop.f32.mrb[0].mxu0
        %2688 = vmatprep.mubr.f32.mxu0 0.0
        %2689 = vmatmul.mubr.f32.gmra.mrb[0].mxu0 %v2531
        %v2690 = vpop.f32.mrb[0].mxu0
        %v2691 = vadd.f32 %v2557, %v2690
        %v2692 = vpop.f32.mrb[0].mxu0
        %2693 = vmatprep.mubr.f32.mxu0 0.0
        %2694 = vmatmul.mubr.f32.gmra.mrb[0].mxu0 %v2532
        %v2695 = vpop.f32.mrb[0].mxu0
        %v2696 = vadd.f32 %v2557, %v2695
        %v2697 = vpop.f32.mrb[0].mxu0
        %2698 = vmatprep.mubr.f32.mxu0 0.0
        %2699 = vmatmul.mubr.f32.gmra.mrb[0].mxu0 %v2533
        %v2700 = vpop.f32.mrb[0].mxu0
        %v2701 = vadd.f32 %v2557, %v2700
        %v2702 = vpop.f32.mrb[0].mxu0
        %2703 = vdwg.mxu0
        %s2704 = scalar_lea.vmem [#allocation7], 384
        %v2705 = vld [vmem:[%s2704] sm:$0xff]
        %v2706 = vld [vmem:[%s2704 + $0x8] sm:$0xff]
        %v2707 = vld [vmem:[%s2704 + $0x10] sm:$0xff]
        %v2708 = vld [vmem:[%s2704 + $0x18] sm:$0xff]
        %v2709 = vld [vmem:[%s2704 + $0x20] sm:$0xff]
        %v2710 = vld [vmem:[%s2704 + $0x28] sm:$0xff]
        %v2711 = vld [vmem:[%s2704 + $0x30] sm:$0xff]
        %v2712 = vld [vmem:[%s2704 + $0x38] sm:$0xff]
        %v2713 = vld [vmem:[%s2704 + $0x40] sm:$0xff]
        %v2714 = vld [vmem:[%s2704 + $0x48] sm:$0xff]
        %v2715 = vld [vmem:[%s2704 + $0x50] sm:$0xff]
        %v2716 = vld [vmem:[%s2704 + $0x58] sm:$0xff]
        %v2717 = vld [vmem:[%s2704 + $0x60] sm:$0xff]
        %v2718 = vld [vmem:[%s2704 + $0x68] sm:$0xff]
        %v2719 = vld [vmem:[%s2704 + $0x70] sm:$0xff]
        %v2720 = vld [vmem:[%s2704 + $0x78] sm:$0xff]
        %s2721 = scalar_lea.vmem %s4, 3
        %v2722 = vld [vmem:[%s2721] sm:$0x1]
        %v2724 = vlaneseq
        %v2725 = vshrl.u32 %v2724, 7
        %v2726 = vsub.s32 0, %v2725
        %v2727 = vrot.slane %v2722, %v2726
        %2729 = vmatprep.subr.mxu0 0.0
        %2730 = vmatpush1.msra.mxu0 %v2705
        %2731 = vmatprep.subr.mxu0 0.0
        %2732 = vmatpush1.msra.mxu0 %v2706
        %2733 = vmatprep.subr.mxu0 0.0
        %2734 = vmatpush1.msra.mxu0 %v2707
        %2735 = vmatprep.subr.mxu0 0.0
        %2736 = vmatpush1.msra.mxu0 %v2708
        %2737 = vmatprep.subr.mxu0 0.0
        %2738 = vmatpush1.msra.mxu0 %v2709
        %2739 = vmatprep.subr.mxu0 0.0
        %2740 = vmatpush1.msra.mxu0 %v2710
        %2741 = vmatprep.subr.mxu0 0.0
        %2742 = vmatpush1.msra.mxu0 %v2711
        %2743 = vmatprep.subr.mxu0 0.0
        %2744 = vmatpush1.msra.mxu0 %v2712
        %2745 = vmatprep.subr.mxu0 0.0
        %2746 = vmatpush1.msra.mxu0 %v2713
        %2747 = vmatprep.subr.mxu0 0.0
        %2748 = vmatpush1.msra.mxu0 %v2714
        %2749 = vmatprep.subr.mxu0 0.0
        %2750 = vmatpush1.msra.mxu0 %v2715
        %2751 = vmatprep.subr.mxu0 0.0
        %2752 = vmatpush1.msra.mxu0 %v2716
        %2753 = vmatprep.subr.mxu0 0.0
        %2754 = vmatpush1.msra.mxu0 %v2717
        %2755 = vmatprep.subr.mxu0 0.0
        %2756 = vmatpush1.msra.mxu0 %v2718
        %2757 = vmatprep.subr.mxu0 0.0
        %2758 = vmatpush1.msra.mxu0 %v2719
        %2759 = vmatprep.subr.mxu0 0.0
        %2760 = vmatpush1.msra.mxu0 %v2720
        %2761 = vmatprep.subr.mxu0 0.0
        %2762 = vmatpush1.msra.mxu0 0.0
        %2763 = vmatprep.subr.mxu0 0.0
        %2764 = vmatpush1.msra.mxu0 0.0
        %2765 = vmatprep.subr.mxu0 0.0
        %2766 = vmatpush1.msra.mxu0 0.0
        %2767 = vmatprep.subr.mxu0 0.0
        %2768 = vmatpush1.msra.mxu0 0.0
        %2769 = vmatprep.subr.mxu0 0.0
        %2770 = vmatpush1.msra.mxu0 0.0
        %2771 = vmatprep.subr.mxu0 0.0
        %2772 = vmatpush1.msra.mxu0 0.0
        %2773 = vmatprep.subr.mxu0 0.0
        %2774 = vmatpush1.msra.mxu0 0.0
        %2775 = vmatprep.subr.mxu0 0.0
        %2776 = vmatpush1.msra.mxu0 0.0
        %2777 = vmatprep.subr.mxu0 0.0
        %2778 = vmatpush1.msra.mxu0 0.0
        %2779 = vmatprep.subr.mxu0 0.0
        %2780 = vmatpush1.msra.mxu0 0.0
        %2781 = vmatprep.subr.mxu0 0.0
        %2782 = vmatpush1.msra.mxu0 0.0
        %2783 = vmatprep.subr.mxu0 0.0
        %2784 = vmatpush1.msra.mxu0 0.0
        %2785 = vmatprep.subr.mxu0 0.0
        %2786 = vmatpush1.msra.mxu0 0.0
        %2787 = vmatprep.subr.mxu0 0.0
        %2788 = vmatpush1.msra.mxu0 0.0
        %2789 = vmatprep.subr.mxu0 0.0
        %2790 = vmatpush1.msra.mxu0 0.0
        %2791 = vmatprep.subr.mxu0 0.0
        %2792 = vmatpush1.msra.mxu0 0.0
        %2793 = vmatprep.mubr.f32.mxu0 0.0
        %2794 = vmatmul.mubr.f32.gmra.mrb[0].mxu0 %v2518
        %v2795 = vpop.f32.mrb[0].mxu0
        %v2796 = vadd.f32 %v2727, %v2795
        %v2797 = vpop.f32.mrb[0].mxu0
        %2798 = vmatprep.mubr.f32.mxu0 0.0
        %2799 = vmatmul.mubr.f32.gmra.mrb[0].mxu0 %v2519
        %v2800 = vpop.f32.mrb[0].mxu0
        %v2801 = vadd.f32 %v2727, %v2800
        %v2802 = vpop.f32.mrb[0].mxu0
        %2803 = vmatprep.mubr.f32.mxu0 0.0
        %2804 = vmatmul.mubr.f32.gmra.mrb[0].mxu0 %v2520
        %v2805 = vpop.f32.mrb[0].mxu0
        %v2806 = vadd.f32 %v2727, %v2805
        %v2807 = vpop.f32.mrb[0].mxu0
        %2808 = vmatprep.mubr.f32.mxu0 0.0
        %2809 = vmatmul.mubr.f32.gmra.mrb[0].mxu0 %v2521
        %v2810 = vpop.f32.mrb[0].mxu0
        %v2811 = vadd.f32 %v2727, %v2810
        %v2812 = vpop.f32.mrb[0].mxu0
        %2813 = vmatprep.mubr.f32.mxu0 0.0
        %2814 = vmatmul.mubr.f32.gmra.mrb[0].mxu0 %v2522
        %v2815 = vpop.f32.mrb[0].mxu0
        %v2816 = vadd.f32 %v2727, %v2815
        %v2817 = vpop.f32.mrb[0].mxu0
        %2818 = vmatprep.mubr.f32.mxu0 0.0
        %2819 = vmatmul.mubr.f32.gmra.mrb[0].mxu0 %v2523
        %v2820 = vpop.f32.mrb[0].mxu0
        %v2821 = vadd.f32 %v2727, %v2820
        %v2822 = vpop.f32.mrb[0].mxu0
        %2823 = vmatprep.mubr.f32.mxu0 0.0
        %2824 = vmatmul.mubr.f32.gmra.mrb[0].mxu0 %v2524
        %v2825 = vpop.f32.mrb[0].mxu0
        %v2826 = vadd.f32 %v2727, %v2825
        %v2827 = vpop.f32.mrb[0].mxu0
        %2828 = vmatprep.mubr.f32.mxu0 0.0
        %2829 = vmatmul.mubr.f32.gmra.mrb[0].mxu0 %v2525
        %v2830 = vpop.f32.mrb[0].mxu0
        %v2831 = vadd.f32 %v2727, %v2830
        %v2832 = vpop.f32.mrb[0].mxu0
        %2833 = vmatprep.mubr.f32.mxu0 0.0
        %2834 = vmatmul.mubr.f32.gmra.mrb[0].mxu0 %v2526
        %v2835 = vpop.f32.mrb[0].mxu0
        %v2836 = vadd.f32 %v2727, %v2835
        %v2837 = vpop.f32.mrb[0].mxu0
        %2838 = vmatprep.mubr.f32.mxu0 0.0
        %2839 = vmatmul.mubr.f32.gmra.mrb[0].mxu0 %v2527
        %v2840 = vpop.f32.mrb[0].mxu0
        %v2841 = vadd.f32 %v2727, %v2840
        %v2842 = vpop.f32.mrb[0].mxu0
        %2843 = vmatprep.mubr.f32.mxu0 0.0
        %2844 = vmatmul.mubr.f32.gmra.mrb[0].mxu0 %v2528
        %v2845 = vpop.f32.mrb[0].mxu0
        %v2846 = vadd.f32 %v2727, %v2845
        %v2847 = vpop.f32.mrb[0].mxu0
        %2848 = vmatprep.mubr.f32.mxu0 0.0
        %2849 = vmatmul.mubr.f32.gmra.mrb[0].mxu0 %v2529
        %v2850 = vpop.f32.mrb[0].mxu0
        %v2851 = vadd.f32 %v2727, %v2850
        %v2852 = vpop.f32.mrb[0].mxu0
        %2853 = vmatprep.mubr.f32.mxu0 0.0
        %2854 = vmatmul.mubr.f32.gmra.mrb[0].mxu0 %v2530
        %v2855 = vpop.f32.mrb[0].mxu0
        %v2856 = vadd.f32 %v2727, %v2855
        %v2857 = vpop.f32.mrb[0].mxu0
        %2858 = vmatprep.mubr.f32.mxu0 0.0
        %2859 = vmatmul.mubr.f32.gmra.mrb[0].mxu0 %v2531
        %v2860 = vpop.f32.mrb[0].mxu0
        %v2861 = vadd.f32 %v2727, %v2860
        %v2862 = vpop.f32.mrb[0].mxu0
        %2863 = vmatprep.mubr.f32.mxu0 0.0
        %2864 = vmatmul.mubr.f32.gmra.mrb[0].mxu0 %v2532
        %v2865 = vpop.f32.mrb[0].mxu0
        %v2866 = vadd.f32 %v2727, %v2865
        %v2867 = vpop.f32.mrb[0].mxu0
        %2868 = vmatprep.mubr.f32.mxu0 0.0
        %2869 = vmatmul.mubr.f32.gmra.mrb[0].mxu0 %v2533
        %v2870 = vpop.f32.mrb[0].mxu0
        %v2871 = vadd.f32 %v2727, %v2870
        %v2872 = vpop.f32.mrb[0].mxu0
        %2873 = vdwg.mxu0
        %vm2874 = vcmp.gt.f32.partialorder %v2626, 0.0
        %vm2875 = vcmp.gt.f32.partialorder %v2631, 0.0
        %vm2876 = vcmp.gt.f32.partialorder %v2636, 0.0
        %vm2877 = vcmp.gt.f32.partialorder %v2641, 0.0
        %vm2878 = vcmp.gt.f32.partialorder %v2646, 0.0
        %vm2879 = vcmp.gt.f32.partialorder %v2651, 0.0
        %vm2880 = vcmp.gt.f32.partialorder %v2656, 0.0
        %vm2881 = vcmp.gt.f32.partialorder %v2661, 0.0
        %vm2882 = vcmp.gt.f32.partialorder %v2666, 0.0
        %vm2883 = vcmp.gt.f32.partialorder %v2671, 0.0
        %vm2884 = vcmp.gt.f32.partialorder %v2676, 0.0
        %vm2885 = vcmp.gt.f32.partialorder %v2681, 0.0
        %vm2886 = vcmp.gt.f32.partialorder %v2686, 0.0
        %vm2887 = vcmp.gt.f32.partialorder %v2691, 0.0
        %vm2888 = vcmp.gt.f32.partialorder %v2696, 0.0
        %vm2889 = vcmp.gt.f32.partialorder %v2701, 0.0
        %v2890 = vmul.f32 %v2626, 0.01
        %v2891 = vmul.f32 %v2631, 0.01
        %v2892 = vmul.f32 %v2636, 0.01
        %v2893 = vmul.f32 %v2641, 0.01
        %v2894 = vmul.f32 %v2646, 0.01
        %v2895 = vmul.f32 %v2651, 0.01
        %v2896 = vmul.f32 %v2656, 0.01
        %v2897 = vmul.f32 %v2661, 0.01
        %v2898 = vmul.f32 %v2666, 0.01
        %v2899 = vmul.f32 %v2671, 0.01
        %v2900 = vmul.f32 %v2676, 0.01
        %v2901 = vmul.f32 %v2681, 0.01
        %v2902 = vmul.f32 %v2686, 0.01
        %v2903 = vmul.f32 %v2691, 0.01
        %v2904 = vmul.f32 %v2696, 0.01
        %v2905 = vmul.f32 %v2701, 0.01
        %v2906 = vsel %vm2874, %v2626, %v2890
        %v2907 = vsel %vm2875, %v2631, %v2891
        %v2908 = vsel %vm2876, %v2636, %v2892
        %v2909 = vsel %vm2877, %v2641, %v2893
        %v2910 = vsel %vm2878, %v2646, %v2894
        %v2911 = vsel %vm2879, %v2651, %v2895
        %v2912 = vsel %vm2880, %v2656, %v2896
        %v2913 = vsel %vm2881, %v2661, %v2897
        %v2914 = vsel %vm2882, %v2666, %v2898
        %v2915 = vsel %vm2883, %v2671, %v2899
        %v2916 = vsel %vm2884, %v2676, %v2900
        %v2917 = vsel %vm2885, %v2681, %v2901
        %v2918 = vsel %vm2886, %v2686, %v2902
        %v2919 = vsel %vm2887, %v2691, %v2903
        %v2920 = vsel %vm2888, %v2696, %v2904
        %v2921 = vsel %vm2889, %v2701, %v2905
        %s2922 = scalar_lea.vmem %s5, 3
        %v2923 = vld [vmem:[%s2922] sm:$0x1]
        %v2925 = vlaneseq
        %v2926 = vshrl.u32 %v2925, 7
        %v2927 = vsub.s32 0, %v2926
        %v2928 = vrot.slane %v2923, %v2927
        %v2930 = vmul.f32 %v2906, %v2928
        %v2931 = vmul.f32 %v2907, %v2928
        %v2932 = vmul.f32 %v2908, %v2928
        %v2933 = vmul.f32 %v2909, %v2928
        %v2934 = vmul.f32 %v2910, %v2928
        %v2935 = vmul.f32 %v2911, %v2928
        %v2936 = vmul.f32 %v2912, %v2928
        %v2937 = vmul.f32 %v2913, %v2928
        %v2938 = vmul.f32 %v2914, %v2928
        %v2939 = vmul.f32 %v2915, %v2928
        %v2940 = vmul.f32 %v2916, %v2928
        %v2941 = vmul.f32 %v2917, %v2928
        %v2942 = vmul.f32 %v2918, %v2928
        %v2943 = vmul.f32 %v2919, %v2928
        %v2944 = vmul.f32 %v2920, %v2928
        %v2945 = vmul.f32 %v2921, %v2928
        %s2946 = scalar_lea.vmem %s7, 3
        %v2947 = vld [vmem:[%s2946] sm:$0x1]
        %v2949 = vlaneseq
        %v2950 = vshrl.u32 %v2949, 7
        %v2951 = vsub.s32 0, %v2950
        %v2952 = vrot.slane %v2947, %v2951
        %v2954 = vadd.f32 %v2930, %v2952
        %v2955 = vadd.f32 %v2931, %v2952
        %v2956 = vadd.f32 %v2932, %v2952
        %v2957 = vadd.f32 %v2933, %v2952
        %v2958 = vadd.f32 %v2934, %v2952
        %v2959 = vadd.f32 %v2935, %v2952
        %v2960 = vadd.f32 %v2936, %v2952
        %v2961 = vadd.f32 %v2937, %v2952
        %v2962 = vadd.f32 %v2938, %v2952
        %v2963 = vadd.f32 %v2939, %v2952
        %v2964 = vadd.f32 %v2940, %v2952
        %v2965 = vadd.f32 %v2941, %v2952
        %v2966 = vadd.f32 %v2942, %v2952
        %v2967 = vadd.f32 %v2943, %v2952
        %v2968 = vadd.f32 %v2944, %v2952
        %v2969 = vadd.f32 %v2945, %v2952
        %vm2970 = vcmp.gt.f32.partialorder %v2796, 0.0
        %vm2971 = vcmp.gt.f32.partialorder %v2801, 0.0
        %vm2972 = vcmp.gt.f32.partialorder %v2806, 0.0
        %vm2973 = vcmp.gt.f32.partialorder %v2811, 0.0
        %vm2974 = vcmp.gt.f32.partialorder %v2816, 0.0
        %vm2975 = vcmp.gt.f32.partialorder %v2821, 0.0
        %vm2976 = vcmp.gt.f32.partialorder %v2826, 0.0
        %vm2977 = vcmp.gt.f32.partialorder %v2831, 0.0
        %vm2978 = vcmp.gt.f32.partialorder %v2836, 0.0
        %vm2979 = vcmp.gt.f32.partialorder %v2841, 0.0
        %vm2980 = vcmp.gt.f32.partialorder %v2846, 0.0
        %vm2981 = vcmp.gt.f32.partialorder %v2851, 0.0
        %vm2982 = vcmp.gt.f32.partialorder %v2856, 0.0
        %vm2983 = vcmp.gt.f32.partialorder %v2861, 0.0
        %vm2984 = vcmp.gt.f32.partialorder %v2866, 0.0
        %vm2985 = vcmp.gt.f32.partialorder %v2871, 0.0
        %v2986 = vmul.f32 %v2796, 0.01
        %v2987 = vmul.f32 %v2801, 0.01
        %v2988 = vmul.f32 %v2806, 0.01
        %v2989 = vmul.f32 %v2811, 0.01
        %v2990 = vmul.f32 %v2816, 0.01
        %v2991 = vmul.f32 %v2821, 0.01
        %v2992 = vmul.f32 %v2826, 0.01
        %v2993 = vmul.f32 %v2831, 0.01
        %v2994 = vmul.f32 %v2836, 0.01
        %v2995 = vmul.f32 %v2841, 0.01
        %v2996 = vmul.f32 %v2846, 0.01
        %v2997 = vmul.f32 %v2851, 0.01
        %v2998 = vmul.f32 %v2856, 0.01
        %v2999 = vmul.f32 %v2861, 0.01
        %v3000 = vmul.f32 %v2866, 0.01
        %v3001 = vmul.f32 %v2871, 0.01
        %v3002 = vsel %vm2970, %v2796, %v2986
        %v3003 = vsel %vm2971, %v2801, %v2987
        %v3004 = vsel %vm2972, %v2806, %v2988
        %v3005 = vsel %vm2973, %v2811, %v2989
        %v3006 = vsel %vm2974, %v2816, %v2990
        %v3007 = vsel %vm2975, %v2821, %v2991
        %v3008 = vsel %vm2976, %v2826, %v2992
        %v3009 = vsel %vm2977, %v2831, %v2993
        %v3010 = vsel %vm2978, %v2836, %v2994
        %v3011 = vsel %vm2979, %v2841, %v2995
        %v3012 = vsel %vm2980, %v2846, %v2996
        %v3013 = vsel %vm2981, %v2851, %v2997
        %v3014 = vsel %vm2982, %v2856, %v2998
        %v3015 = vsel %vm2983, %v2861, %v2999
        %v3016 = vsel %vm2984, %v2866, %v3000
        %v3017 = vsel %vm2985, %v2871, %v3001
        %s3018 = scalar_lea.vmem %s6, 3
        %v3019 = vld [vmem:[%s3018] sm:$0x1]
        %v3021 = vlaneseq
        %v3022 = vshrl.u32 %v3021, 7
        %v3023 = vsub.s32 0, %v3022
        %v3024 = vrot.slane %v3019, %v3023
        %v3026 = vmul.f32 %v3002, %v3024
        %v3027 = vmul.f32 %v3003, %v3024
        %v3028 = vmul.f32 %v3004, %v3024
        %v3029 = vmul.f32 %v3005, %v3024
        %v3030 = vmul.f32 %v3006, %v3024
        %v3031 = vmul.f32 %v3007, %v3024
        %v3032 = vmul.f32 %v3008, %v3024
        %v3033 = vmul.f32 %v3009, %v3024
        %v3034 = vmul.f32 %v3010, %v3024
        %v3035 = vmul.f32 %v3011, %v3024
        %v3036 = vmul.f32 %v3012, %v3024
        %v3037 = vmul.f32 %v3013, %v3024
        %v3038 = vmul.f32 %v3014, %v3024
        %v3039 = vmul.f32 %v3015, %v3024
        %v3040 = vmul.f32 %v3016, %v3024
        %v3041 = vmul.f32 %v3017, %v3024
        %s3042 = scalar_lea.vmem %s8, 3
        %v3043 = vld [vmem:[%s3042] sm:$0x1]
        %v3045 = vlaneseq
        %v3046 = vshrl.u32 %v3045, 7
        %v3047 = vsub.s32 0, %v3046
        %v3048 = vrot.slane %v3043, %v3047
        %v3050 = vadd.f32 %v3026, %v3048
        %v3051 = vadd.f32 %v3027, %v3048
        %v3052 = vadd.f32 %v3028, %v3048
        %v3053 = vadd.f32 %v3029, %v3048
        %v3054 = vadd.f32 %v3030, %v3048
        %v3055 = vadd.f32 %v3031, %v3048
        %v3056 = vadd.f32 %v3032, %v3048
        %v3057 = vadd.f32 %v3033, %v3048
        %v3058 = vadd.f32 %v3034, %v3048
        %v3059 = vadd.f32 %v3035, %v3048
        %v3060 = vadd.f32 %v3036, %v3048
        %v3061 = vadd.f32 %v3037, %v3048
        %v3062 = vadd.f32 %v3038, %v3048
        %v3063 = vadd.f32 %v3039, %v3048
        %v3064 = vadd.f32 %v3040, %v3048
        %v3065 = vadd.f32 %v3041, %v3048
        %v3066 = vxor.u32 %v3050, 2147483648
        %v3067 = vxor.u32 %v3051, 2147483648
        %v3068 = vxor.u32 %v3052, 2147483648
        %v3069 = vxor.u32 %v3053, 2147483648
        %v3070 = vxor.u32 %v3054, 2147483648
        %v3071 = vxor.u32 %v3055, 2147483648
        %v3072 = vxor.u32 %v3056, 2147483648
        %v3073 = vxor.u32 %v3057, 2147483648
        %v3074 = vxor.u32 %v3058, 2147483648
        %v3075 = vxor.u32 %v3059, 2147483648
        %v3076 = vxor.u32 %v3060, 2147483648
        %v3077 = vxor.u32 %v3061, 2147483648
        %v3078 = vxor.u32 %v3062, 2147483648
        %v3079 = vxor.u32 %v3063, 2147483648
        %v3080 = vxor.u32 %v3064, 2147483648
        %v3081 = vxor.u32 %v3065, 2147483648
        %v3082 = vmul.f32 %v3066, 1.442695
        %v3083 = vpow.pop %v3082
        %v3084 = vmul.f32 %v3067, 1.442695
        %v3085 = vpow.pop %v3084
        %v3086 = vmul.f32 %v3068, 1.442695
        %v3087 = vpow.pop %v3086
        %v3088 = vmul.f32 %v3069, 1.442695
        %v3089 = vpow.pop %v3088
        %v3090 = vmul.f32 %v3070, 1.442695
        %v3091 = vpow.pop %v3090
        %v3092 = vmul.f32 %v3071, 1.442695
        %v3093 = vpow.pop %v3092
        %v3094 = vmul.f32 %v3072, 1.442695
        %v3095 = vpow.pop %v3094
        %v3096 = vmul.f32 %v3073, 1.442695
        %v3097 = vpow.pop %v3096
        %v3098 = vmul.f32 %v3074, 1.442695
        %v3099 = vpow.pop %v3098
        %v3100 = vmul.f32 %v3075, 1.442695
        %v3101 = vpow.pop %v3100
        %v3102 = vmul.f32 %v3076, 1.442695
        %v3103 = vpow.pop %v3102
        %v3104 = vmul.f32 %v3077, 1.442695
        %v3105 = vpow.pop %v3104
        %v3106 = vmul.f32 %v3078, 1.442695
        %v3107 = vpow.pop %v3106
        %v3108 = vmul.f32 %v3079, 1.442695
        %v3109 = vpow.pop %v3108
        %v3110 = vmul.f32 %v3080, 1.442695
        %v3111 = vpow.pop %v3110
        %v3112 = vmul.f32 %v3081, 1.442695
        %v3113 = vpow.pop %v3112
        %v3114 = vadd.f32 %v3083, 1.0
        %v3115 = vadd.f32 %v3085, 1.0
        %v3116 = vadd.f32 %v3087, 1.0
        %v3117 = vadd.f32 %v3089, 1.0
        %v3118 = vadd.f32 %v3091, 1.0
        %v3119 = vadd.f32 %v3093, 1.0
        %v3120 = vadd.f32 %v3095, 1.0
        %v3121 = vadd.f32 %v3097, 1.0
        %v3122 = vadd.f32 %v3099, 1.0
        %v3123 = vadd.f32 %v3101, 1.0
        %v3124 = vadd.f32 %v3103, 1.0
        %v3125 = vadd.f32 %v3105, 1.0
        %v3126 = vadd.f32 %v3107, 1.0
        %v3127 = vadd.f32 %v3109, 1.0
        %v3128 = vadd.f32 %v3111, 1.0
        %v3129 = vadd.f32 %v3113, 1.0
        %v3130 = vrcp.pop %v3114
        %v3131 = vmul.f32 1.0, %v3130
        %v3132 = vrcp.pop %v3115
        %v3133 = vmul.f32 1.0, %v3132
        %v3134 = vrcp.pop %v3116
        %v3135 = vmul.f32 1.0, %v3134
        %v3136 = vrcp.pop %v3117
        %v3137 = vmul.f32 1.0, %v3136
        %v3138 = vrcp.pop %v3118
        %v3139 = vmul.f32 1.0, %v3138
        %v3140 = vrcp.pop %v3119
        %v3141 = vmul.f32 1.0, %v3140
        %v3142 = vrcp.pop %v3120
        %v3143 = vmul.f32 1.0, %v3142
        %v3144 = vrcp.pop %v3121
        %v3145 = vmul.f32 1.0, %v3144
        %v3146 = vrcp.pop %v3122
        %v3147 = vmul.f32 1.0, %v3146
        %v3148 = vrcp.pop %v3123
        %v3149 = vmul.f32 1.0, %v3148
        %v3150 = vrcp.pop %v3124
        %v3151 = vmul.f32 1.0, %v3150
        %v3152 = vrcp.pop %v3125
        %v3153 = vmul.f32 1.0, %v3152
        %v3154 = vrcp.pop %v3126
        %v3155 = vmul.f32 1.0, %v3154
        %v3156 = vrcp.pop %v3127
        %v3157 = vmul.f32 1.0, %v3156
        %v3158 = vrcp.pop %v3128
        %v3159 = vmul.f32 1.0, %v3158
        %v3160 = vrcp.pop %v3129
        %v3161 = vmul.f32 1.0, %v3160
        %v3162 = vmul.f32 %v2954, %v3131
        %v3163 = vmul.f32 %v2955, %v3133
        %v3164 = vmul.f32 %v2956, %v3135
        %v3165 = vmul.f32 %v2957, %v3137
        %v3166 = vmul.f32 %v2958, %v3139
        %v3167 = vmul.f32 %v2959, %v3141
        %v3168 = vmul.f32 %v2960, %v3143
        %v3169 = vmul.f32 %v2961, %v3145
        %v3170 = vmul.f32 %v2962, %v3147
        %v3171 = vmul.f32 %v2963, %v3149
        %v3172 = vmul.f32 %v2964, %v3151
        %v3173 = vmul.f32 %v2965, %v3153
        %v3174 = vmul.f32 %v2966, %v3155
        %v3175 = vmul.f32 %v2967, %v3157
        %v3176 = vmul.f32 %v2968, %v3159
        %v3177 = vmul.f32 %v2969, %v3161
        %v3178 = vadd.f32 %v2518, %v3162
        %v3179 = vadd.f32 %v2519, %v3163
        %v3180 = vadd.f32 %v2520, %v3164
        %v3181 = vadd.f32 %v2521, %v3165
        %v3182 = vadd.f32 %v2522, %v3166
        %v3183 = vadd.f32 %v2523, %v3167
        %v3184 = vadd.f32 %v2524, %v3168
        %v3185 = vadd.f32 %v2525, %v3169
        %v3186 = vadd.f32 %v2526, %v3170
        %v3187 = vadd.f32 %v2527, %v3171
        %v3188 = vadd.f32 %v2528, %v3172
        %v3189 = vadd.f32 %v2529, %v3173
        %v3190 = vadd.f32 %v2530, %v3174
        %v3191 = vadd.f32 %v2531, %v3175
        %v3192 = vadd.f32 %v2532, %v3176
        %v3193 = vadd.f32 %v2533, %v3177
        %v3194 = vmul.f32 %v3178, 0.70710677
        %v3195 = vmul.f32 %v3179, 0.70710677
        %v3196 = vmul.f32 %v3180, 0.70710677
        %v3197 = vmul.f32 %v3181, 0.70710677
        %v3198 = vmul.f32 %v3182, 0.70710677
        %v3199 = vmul.f32 %v3183, 0.70710677
        %v3200 = vmul.f32 %v3184, 0.70710677
        %v3201 = vmul.f32 %v3185, 0.70710677
        %v3202 = vmul.f32 %v3186, 0.70710677
        %v3203 = vmul.f32 %v3187, 0.70710677
        %v3204 = vmul.f32 %v3188, 0.70710677
        %v3205 = vmul.f32 %v3189, 0.70710677
        %v3206 = vmul.f32 %v3190, 0.70710677
        %v3207 = vmul.f32 %v3191, 0.70710677
        %v3208 = vmul.f32 %v3192, 0.70710677
        %v3209 = vmul.f32 %v3193, 0.70710677
        %3210 = vst [vmem:[%s433] sm:$0xff] %v3194
        %3211 = vst [vmem:[%s433 + $0x8] sm:$0xff] %v3195
        %3212 = vst [vmem:[%s433 + $0x10] sm:$0xff] %v3196
        %3213 = vst [vmem:[%s433 + $0x18] sm:$0xff] %v3197
        %3214 = vst [vmem:[%s433 + $0x20] sm:$0xff] %v3198
        %3215 = vst [vmem:[%s433 + $0x28] sm:$0xff] %v3199
        %3216 = vst [vmem:[%s433 + $0x30] sm:$0xff] %v3200
        %3217 = vst [vmem:[%s433 + $0x38] sm:$0xff] %v3201
        %3218 = vst [vmem:[%s433 + $0x40] sm:$0xff] %v3202
        %3219 = vst [vmem:[%s433 + $0x48] sm:$0xff] %v3203
        %3220 = vst [vmem:[%s433 + $0x50] sm:$0xff] %v3204
        %3221 = vst [vmem:[%s433 + $0x58] sm:$0xff] %v3205
        %3222 = vst [vmem:[%s433 + $0x60] sm:$0xff] %v3206
        %3223 = vst [vmem:[%s433 + $0x68] sm:$0xff] %v3207
        %3224 = vst [vmem:[%s433 + $0x70] sm:$0xff] %v3208
        %3225 = vst [vmem:[%s433 + $0x78] sm:$0xff] %v3209
        %s3226 = sand.u32 %s273, 1
        %s3227 = scalar_lea.sflag [#allocation4], %s3226
        %s3228 = sand.u32 %s273, 1
        %s3229 = smul.addr %s3228, 128
        %s3230 = scalar_lea.vmem [#allocation8], %s3229
        // Predicated region
        $region77: #{tpu_custom_call.1} parent=63 // pred_check
          %p3231 = pneg %p283
        $region78: #{tpu_custom_call.1} parent=63 // pred_check_branch
          %3233 = sbr.rel (%p3231) target = $region80
        $region79: #{tpu_custom_call.1} parent=63 // pred_region
          %s3234 = smul.u32 16, %s29
          %s3236 = ssub.s32 2048, 2048
          %3237 = vsyncadd %s3227, %s3236
          %s3238 = smul.addr %s3234, 128
          %s3239 = scalar_lea.hbm %s11, %s3238
          %s3240 = sshll.u32 %s3230, 4
          %s3241 = int_to_ptr.vmem [resolvable:$true] %s3240
          %3246 = dma.vmem_to_hbm [thread:$0]  %s3241, 2048, %s3239, %s3227, 128, 128, 8
        $region80: #{tpu_custom_call.1} parent=63 // pred_fallthru
          _
      $region64: #{tpu_custom_call.1} parent=5 // pred_fallthru
        _
      %p3247 = scmp.le.s32.totalorder 2, %s24
      // Predicated region
      $region81: #{tpu_custom_call.1} parent=5 // pred_check
        %p3248 = pneg %p3247
      $region82: #{tpu_custom_call.1} parent=5 // pred_check_branch
        %3250 = sbr.rel (%p3248) target = $region84
      $region83: #{tpu_custom_call.1} parent=5 // pred_region
        %s3251 = ssub.s32 %s24, 2
        // Predicated region
        $region85: #{tpu_custom_call.1} parent=83 // pred_check
          %p3252 = pneg %p289
        $region86: #{tpu_custom_call.1} parent=83 // pred_check_branch
          %3254 = sbr.rel (%p3252) target = $region88
        $region87: #{tpu_custom_call.1} parent=83 // pred_region
          %s3255 = sand.u32 %s274, 1
          %s3256 = scalar_lea.sflag [#allocation4], %s3255
          %s3257 = sand.u32 %s274, 1
          %s3258 = smul.addr %s3257, 128
          %s3259 = scalar_lea.vmem [#allocation8], %s3258
          %3260 = dma.done %s3256, 2048
        $region88: #{tpu_custom_call.1} parent=83 // pred_fallthru
          _
      $region84: #{tpu_custom_call.1} parent=5 // pred_fallthru
        _
    $region6: #{tpu_custom_call.1} parent=1 // loop_footer
      %s28 = sadd.s32 1, %s24
    $region7: #{tpu_custom_call.1} parent=1 // loop_footer_branch
      %23 = sbr.rel target = $region3
    $region8: #{tpu_custom_call.1} parent=1 // loop_exit
      _
    %3261 = vsyncpa [#allocation3], 1
    %s3262 = scalar_lea.sflag [#allocation3], 1
    %3263 = vsyncpa %s3262, 1
    %3264 = vsyncpa [#allocation6], 1
    %3265 = vsyncpa [#allocation4], 1
    %s3266 = scalar_lea.sflag [#allocation4], 1
    %3267 = vsyncpa %s3266, 1

</llo_original>
